<compile_context>
chip_gen: v7x
topology: tpu7x:2x2x1
jax: 0.10.0
libtpu: 0.0.40
codegen_flags: <defaults>
</compile_context>

<pallas_src>
import math
import numpy as np
import jax
import jax.numpy as jnp
from jax.experimental import pallas as pl
from jax.experimental.pallas import tpu as pltpu  # noqa: F401  (kept for memory-space tweaks)

# ----------------- small, __init__-consistent hyper-parameters -----------------
N_LAYER = 2
N_HEAD = 2
D_MODEL = 32
D_HEAD = 16
D_INNER = 64
KERNEL_SIZE = 3
N_EMBED = 40
PADDING_IDX = 0
B = 2
T = 16
BT = B * T
PAD = KERNEL_SIZE // 2
LN_EPS = 1e-5            # torch.nn.LayerNorm default
NEG_INF = -1e30          # finite "masked" value (robust: no 0/0 NaN for all-masked rows)
D_QKV = 3 * N_HEAD * D_HEAD


# ----------- compile-time constants (numpy -> embedded as jit constants) -----------
def _pos_table():
    # standard FastPitch PositionalEmbedding (sin | cos), tiled over batch
    pos = np.arange(T, dtype=np.float32)
    inv_freq = 1.0 / (10000.0 ** (np.arange(0, D_MODEL, 2, dtype=np.float32) / D_MODEL))
    sinusoid = pos[:, None] * inv_freq[None, :]
    tab = np.concatenate([np.sin(sinusoid), np.cos(sinusoid)], axis=1)       # (T, D_MODEL)
    return np.tile(tab, (B, 1)).astype(np.float32)                           # (B*T, D_MODEL)


def _shift_matrices():
    # S_prev @ x == x shifted down one time step (zero row at every sequence start)
    # S_next @ x == x shifted up   one time step (zero row at every sequence end)
    idx = np.arange(BT)
    s_prev = np.zeros((BT, BT), np.float32)
    keep = (idx % T) != 0
    s_prev[idx[keep], idx[keep] - 1] = 1.0
    s_next = np.zeros((BT, BT), np.float32)
    keep = (idx % T) != (T - 1)
    s_next[idx[keep], idx[keep] + 1] = 1.0
    return s_prev, s_next


_POS_FULL = _pos_table()
_S_PREV, _S_NEXT = _shift_matrices()
_SAME_BATCH = np.kron(np.eye(B, dtype=bool), np.ones((T, T), dtype=bool))     # (BT, BT)


def _layernorm(y, gamma, beta):
    mu = jnp.mean(y, axis=-1, keepdims=True)
    var = jnp.mean((y - mu) ** 2, axis=-1, keepdims=True)
    return (y - mu) * jax.lax.rsqrt(var + LN_EPS) * gamma + beta


# ------------------------------- fused Pallas kernel -------------------------------
def fft_fused_kernel(inp_ref, pos_ref, mask_ref, bias_ref, sprev_ref, snext_ref,
                     qkv_w_ref, qkv_b_ref, o_w_ref, attn_g_ref, attn_b_ref,
                     w1_ref, b1_ref, w2_ref, b2_ref, ff_g_ref, ff_b_ref,
                     out_ref):
    m = mask_ref[...]                     # (BT, 1)  1.0 = valid token
    bias = bias_ref[...]                  # (BT, BT) 0 / -1e30 (padded-key + cross-batch mask)
    s_prev = sprev_ref[...]               # (BT, BT) batch-aware time-shift matrices
    s_next = snext_ref[...]
    scale = 1.0 / math.sqrt(D_HEAD)

    # word_emb + pos_emb * mask (+ conditioning == 0); dropout(dropemb) = identity
    x = inp_ref[...] + pos_ref[...] * m

    # TODO(synk): on v6e/v7x the dot operands could be cast to bf16 (f32 accumulation)
    # for a small extra win; kept f32 so the single code path is also v5e-friendly.
    for l in range(N_LAYER):              # static unroll over the 2 layers
        # -------------- MultiHeadAttn (post-lnorm) + residual, then *mask --------------
        qkv = jnp.dot(x, qkv_w_ref[l], preferred_element_type=jnp.float32) + qkv_b_ref[l]
        heads = []
        for h in range(N_HEAD):           # only the (BT,BT) score / softmax is per-head
            q = qkv[:, h * D_HEAD:(h + 1) * D_HEAD]
            k = qkv[:, (N_HEAD + h) * D_HEAD:(N_HEAD + h + 1) * D_HEAD]
            v = qkv[:, (2 * N_HEAD + h) * D_HEAD:(2 * N_HEAD + h + 1) * D_HEAD]
            # q @ k^T via dot_general (no materialized transpose)
            s = jax.lax.dot_general(q, k, (((1,), (1,)), ((), ())),
                                    preferred_element_type=jnp.float32) * scale + bias
            s_max = jnp.max(s, axis=-1, keepdims=True)
            p = jnp.exp(s - s_max)
            p = p * pl.reciprocal(jnp.sum(p, axis=-1, keepdims=True), approx=True)
            heads.append(jnp.dot(p, v, preferred_element_type=jnp.float32))
        attn_vec = jnp.concatenate(heads, axis=-1)                   # (BT, N_HEAD*D_HEAD)
        attn_out = jnp.dot(attn_vec, o_w_ref[l], preferred_element_type=jnp.float32)
        x = _layernorm(x + attn_out, attn_g_ref[l], attn_b_ref[l]) * m

        # ------------ PositionwiseConvFF (post-lnorm) + residual, then *mask ------------
        # Conv1d(d_model -> d_inner, 'same') as 3 shifted-tap matmuls; the shifts never
        # cross a batch boundary thanks to the constant shift matrices.
        x_prev = jnp.dot(s_prev, x, preferred_element_type=jnp.float32)
        x_next = jnp.dot(s_next, x, preferred_element_type=jnp.float32)
        h1 = (jnp.dot(x_prev, w1_ref[l, 0], preferred_element_type=jnp.float32)
              + jnp.dot(x, w1_ref[l, 1], preferred_element_type=jnp.float32)
              + jnp.dot(x_next, w1_ref[l, 2], preferred_element_type=jnp.float32)
              + b1_ref[l])
        h1 = jnp.maximum(h1, 0.0)                                    # ReLU
        # Conv1d(d_inner -> d_model, 'same')
        h_prev = jnp.dot(s_prev, h1, preferred_element_type=jnp.float32)
        h_next = jnp.dot(s_next, h1, preferred_element_type=jnp.float32)
        y = (jnp.dot(h_prev, w2_ref[l, 0], preferred_element_type=jnp.float32)
             + jnp.dot(h1, w2_ref[l, 1], preferred_element_type=jnp.float32)
             + jnp.dot(h_next, w2_ref[l, 2], preferred_element_type=jnp.float32)
             + b2_ref[l])
        x = _layernorm(x + y, ff_g_ref[l], ff_b_ref[l]) * m

    out_ref[...] = x


def fft_fused(inp_flat, mask_col, attn_bias, p):
    # Single grid step; every operand (~160 KB total) lives as a whole-array VMEM block.
    return pl.pallas_call(
        fft_fused_kernel,
        out_shape=jax.ShapeDtypeStruct((BT, D_MODEL), jnp.float32),
    )(inp_flat, jnp.asarray(_POS_FULL), mask_col, attn_bias,
      jnp.asarray(_S_PREV), jnp.asarray(_S_NEXT),
      p["qkv_w"], p["qkv_b"], p["o_w"], p["attn_ln_g"], p["attn_ln_b"],
      p["w1"], p["b1"], p["w2"], p["b2"], p["ff_ln_g"], p["ff_ln_b"])


# ------------------------------ parameters & forward --------------------------------
def init_params(key):
    keys = jax.random.split(key, 1 + N_LAYER)
    emb = 0.1 * jax.random.normal(keys[0], (N_EMBED, D_MODEL), jnp.float32)
    emb = emb.at[PADDING_IDX].set(0.0)                   # nn.Embedding(padding_idx=0)

    qkv_w, qkv_b, o_w, w1, b1, w2 = [], [], [], [], [], []
    for l in range(N_LAYER):
        kk = jax.random.split(keys[1 + l], 6)
        # qkv_net weight stored pre-transposed (D_MODEL, 3*H*D_HEAD), torch chunk order q|k|v
        qkv_w.append(0.05 * jax.random.normal(kk[0], (D_MODEL, D_QKV), jnp.float32))
        qkv_b.append(0.01 * jax.random.normal(kk[1], (1, D_QKV), jnp.float32))
        # o_net weight (no bias), stored pre-transposed (H*D_HEAD, D_MODEL)
        o_w.append(0.05 * jax.random.normal(kk[2], (N_HEAD * D_HEAD, D_MODEL), jnp.float32))
        # Conv1d weights as (K, C_in, C_out) == torch (C_out, C_in, K) transposed
        w1.append(0.05 * jax.random.normal(kk[3], (KERNEL_SIZE, D_MODEL, D_INNER), jnp.float32))
        b1.append(0.01 * jax.random.normal(kk[4], (1, D_INNER), jnp.float32))
        w2.append(0.05 * jax.random.normal(kk[5], (KERNEL_SIZE, D_INNER, D_MODEL), jnp.float32))

    return {
        "word_emb": emb,
        "qkv_w": jnp.stack(qkv_w), "qkv_b": jnp.stack(qkv_b), "o_w": jnp.stack(o_w),
        "attn_ln_g": jnp.ones((N_LAYER, 1, D_MODEL), jnp.float32),
        "attn_ln_b": jnp.zeros((N_LAYER, 1, D_MODEL), jnp.float32),
        "w1": jnp.stack(w1), "b1": jnp.stack(b1),
        "w2": jnp.stack(w2), "b2": jnp.zeros((N_LAYER, 1, D_MODEL), jnp.float32),
        "ff_ln_g": jnp.ones((N_LAYER, 1, D_MODEL), jnp.float32),
        "ff_ln_b": jnp.zeros((N_LAYER, 1, D_MODEL), jnp.float32),
    }


def fft_forward(dec_inp, params):
    # TODO(synk): the embedding gather stays in plain JAX glue (data-dependent gather,
    # tiny, not the kernel hot path).
    inp = params["word_emb"][dec_inp].reshape(BT, D_MODEL)             # (B*T, D_MODEL)
    mask_bt = (dec_inp != PADDING_IDX).astype(jnp.float32)             # (B, T)
    mask_col = mask_bt.reshape(BT, 1)

    # additive attention bias: 0 where (same batch AND key is a valid token), else -1e30
    key_valid = mask_bt.reshape(1, BT) > 0.5
    attn_bias = jnp.where(jnp.logical_and(jnp.asarray(_SAME_BATCH), key_valid),
                          0.0, NEG_INF).astype(jnp.float32)            # (BT, BT)

    out_flat = fft_fused(inp, mask_col, attn_bias, params)
    return out_flat.reshape(B, T, D_MODEL), mask_bt[:, :, None]


if __name__ == "__main__":
    key = jax.random.PRNGKey(0)
    k_tok, k_param = jax.random.split(key)

    tokens = jax.random.randint(k_tok, (B, T), 1, N_EMBED)
    lens = jnp.array([T, 11])                                  # second sequence is padded
    dec_inp = jnp.where(jnp.arange(T)[None, :] < lens[:, None], tokens, PADDING_IDX)
    dec_inp = dec_inp.astype(jnp.int32)

    params = init_params(k_param)

    out, mask = jax.jit(fft_forward)(dec_inp, params)
    out = jax.block_until_ready(out)
    mask = jax.block_until_ready(mask)

    assert out.shape == (B, T, D_MODEL) and mask.shape == (B, T, 1)
    assert bool(jnp.all(jnp.isfinite(out)))
    # padded positions must be zeroed by the final `output *= mask`
    assert float(jnp.max(jnp.abs(out * (1.0 - mask)))) == 0.0
    print("KERNEL_OK")
</pallas_src>

<mosaic_0001>
module attributes {stable_mosaic.version = 11 : i64} {
  func.func @fft_fused_kernel(%arg0: memref<32x32xf32, #tpu.memory_space<vmem>>, %arg1: memref<32x32xf32, #tpu.memory_space<vmem>>, %arg2: memref<32x1xf32, #tpu.memory_space<vmem>>, %arg3: memref<32x32xf32, #tpu.memory_space<vmem>>, %arg4: memref<32x32xf32, #tpu.memory_space<vmem>>, %arg5: memref<32x32xf32, #tpu.memory_space<vmem>>, %arg6: memref<2x32x96xf32, #tpu.memory_space<vmem>>, %arg7: memref<2x1x96xf32, #tpu.memory_space<vmem>>, %arg8: memref<2x32x32xf32, #tpu.memory_space<vmem>>, %arg9: memref<2x1x32xf32, #tpu.memory_space<vmem>>, %arg10: memref<2x1x32xf32, #tpu.memory_space<vmem>>, %arg11: memref<2x3x32x64xf32, #tpu.memory_space<vmem>>, %arg12: memref<2x1x64xf32, #tpu.memory_space<vmem>>, %arg13: memref<2x3x64x32xf32, #tpu.memory_space<vmem>>, %arg14: memref<2x1x32xf32, #tpu.memory_space<vmem>>, %arg15: memref<2x1x32xf32, #tpu.memory_space<vmem>>, %arg16: memref<2x1x32xf32, #tpu.memory_space<vmem>>, %arg17: memref<32x32xf32, #tpu.memory_space<vmem>>) attributes {dimension_semantics = [], scalar_prefetch = 0 : i64, scratch_operands = 0 : i64, tpu.core_type = #tpu.core_type<tc>} {
    %c0 = arith.constant 0 : index
    %c0_0 = arith.constant 0 : index
    %0 = vector.load %arg2[%c0, %c0_0] : memref<32x1xf32, #tpu.memory_space<vmem>>, vector<32x1xf32>
    %c0_1 = arith.constant 0 : index
    %c0_2 = arith.constant 0 : index
    %1 = vector.load %arg3[%c0_1, %c0_2] : memref<32x32xf32, #tpu.memory_space<vmem>>, vector<32x32xf32>
    %c0_3 = arith.constant 0 : index
    %c0_4 = arith.constant 0 : index
    %2 = vector.load %arg4[%c0_3, %c0_4] : memref<32x32xf32, #tpu.memory_space<vmem>>, vector<32x32xf32>
    %c0_5 = arith.constant 0 : index
    %c0_6 = arith.constant 0 : index
    %3 = vector.load %arg5[%c0_5, %c0_6] : memref<32x32xf32, #tpu.memory_space<vmem>>, vector<32x32xf32>
    %c0_7 = arith.constant 0 : index
    %c0_8 = arith.constant 0 : index
    %4 = vector.load %arg0[%c0_7, %c0_8] : memref<32x32xf32, #tpu.memory_space<vmem>>, vector<32x32xf32>
    %c0_9 = arith.constant 0 : index
    %c0_10 = arith.constant 0 : index
    %5 = vector.load %arg1[%c0_9, %c0_10] : memref<32x32xf32, #tpu.memory_space<vmem>>, vector<32x32xf32>
    %6 = vector.broadcast %0 : vector<32x1xf32> to vector<32x32xf32>
    %7 = arith.mulf %5, %6 : vector<32x32xf32>
    %8 = arith.addf %4, %7 : vector<32x32xf32>
    %c0_11 = arith.constant 0 : index
    %c0_12 = arith.constant 0 : index
    %c0_13 = arith.constant 0 : index
    %9 = vector.load %arg6[%c0_11, %c0_12, %c0_13] : memref<2x32x96xf32, #tpu.memory_space<vmem>>, vector<1x32x96xf32>
    %10 = vector.shape_cast %9 : vector<1x32x96xf32> to vector<32x96xf32>
    %cst = arith.constant dense<0.000000e+00> : vector<32x96xf32>
    %11 = tpu.matmul %8, %10, %cst {dimension_numbers = #tpu.dot_dimension_numbers<[1], [0], [0], [1], [0, 0, 1, 1], [], []>} : vector<32x32xf32>, vector<32x96xf32>, vector<32x96xf32> -> vector<32x96xf32>
    %c0_14 = arith.constant 0 : index
    %c0_15 = arith.constant 0 : index
    %c0_16 = arith.constant 0 : index
    %12 = vector.load %arg7[%c0_14, %c0_15, %c0_16] : memref<2x1x96xf32, #tpu.memory_space<vmem>>, vector<1x1x96xf32>
    %13 = vector.shape_cast %12 : vector<1x1x96xf32> to vector<1x96xf32>
    %14 = vector.broadcast %13 : vector<1x96xf32> to vector<32x96xf32>
    %15 = arith.addf %11, %14 : vector<32x96xf32>
    %16 = vector.extract_strided_slice %15 {offsets = [0, 0], sizes = [32, 16], strides = [1, 1]} : vector<32x96xf32> to vector<32x16xf32>
    %17 = vector.extract_strided_slice %15 {offsets = [0, 32], sizes = [32, 16], strides = [1, 1]} : vector<32x96xf32> to vector<32x16xf32>
    %18 = vector.extract_strided_slice %15 {offsets = [0, 64], sizes = [32, 16], strides = [1, 1]} : vector<32x96xf32> to vector<32x16xf32>
    %cst_17 = arith.constant dense<0.000000e+00> : vector<32x32xf32>
    %19 = tpu.matmul %16, %17, %cst_17 {dimension_numbers = #tpu.dot_dimension_numbers<[1], [1], [0], [0], [0, 0, 1, 0], [], []>} : vector<32x16xf32>, vector<32x16xf32>, vector<32x32xf32> -> vector<32x32xf32>
    %cst_18 = arith.constant 2.500000e-01 : f32
    %20 = vector.broadcast %cst_18 : f32 to vector<32x32xf32>
    %21 = arith.mulf %19, %20 : vector<32x32xf32>
    %22 = arith.addf %21, %1 : vector<32x32xf32>
    %cst_19 = arith.constant dense<0xFF800000> : vector<32xf32>
    %23 = vector.multi_reduction <maximumf>, %22, %cst_19 [1] : vector<32x32xf32> to vector<32xf32>
    %24 = vector.shape_cast %23 : vector<32xf32> to vector<32x1xf32>
    %25 = vector.broadcast %24 : vector<32x1xf32> to vector<32x32xf32>
    %26 = arith.subf %22, %25 : vector<32x32xf32>
    %27 = math.exp %26 : vector<32x32xf32>
    %cst_20 = arith.constant dense<0.000000e+00> : vector<32xf32>
    %28 = vector.multi_reduction <add>, %27, %cst_20 [1] : vector<32x32xf32> to vector<32xf32>
    %29 = vector.shape_cast %28 : vector<32xf32> to vector<32x1xf32>
    %30 = tpu.reciprocal %29 {approx = true} : vector<32x1xf32> -> vector<32x1xf32>
    %31 = vector.broadcast %30 : vector<32x1xf32> to vector<32x32xf32>
    %32 = arith.mulf %27, %31 : vector<32x32xf32>
    %cst_21 = arith.constant dense<0.000000e+00> : vector<32x16xf32>
    %33 = tpu.matmul %32, %18, %cst_21 {dimension_numbers = #tpu.dot_dimension_numbers<[1], [0], [0], [1], [0, 0, 1, 1], [], []>} : vector<32x32xf32>, vector<32x16xf32>, vector<32x16xf32> -> vector<32x16xf32>
    %34 = vector.extract_strided_slice %15 {offsets = [0, 16], sizes = [32, 16], strides = [1, 1]} : vector<32x96xf32> to vector<32x16xf32>
    %35 = vector.extract_strided_slice %15 {offsets = [0, 48], sizes = [32, 16], strides = [1, 1]} : vector<32x96xf32> to vector<32x16xf32>
    %36 = vector.extract_strided_slice %15 {offsets = [0, 80], sizes = [32, 16], strides = [1, 1]} : vector<32x96xf32> to vector<32x16xf32>
    %cst_22 = arith.constant dense<0.000000e+00> : vector<32x32xf32>
    %37 = tpu.matmul %34, %35, %cst_22 {dimension_numbers = #tpu.dot_dimension_numbers<[1], [1], [0], [0], [0, 0, 1, 0], [], []>} : vector<32x16xf32>, vector<32x16xf32>, vector<32x32xf32> -> vector<32x32xf32>
    %cst_23 = arith.constant 2.500000e-01 : f32
    %38 = vector.broadcast %cst_23 : f32 to vector<32x32xf32>
    %39 = arith.mulf %37, %38 : vector<32x32xf32>
    %40 = arith.addf %39, %1 : vector<32x32xf32>
    %cst_24 = arith.constant dense<0xFF800000> : vector<32xf32>
    %41 = vector.multi_reduction <maximumf>, %40, %cst_24 [1] : vector<32x32xf32> to vector<32xf32>
    %42 = vector.shape_cast %41 : vector<32xf32> to vector<32x1xf32>
    %43 = vector.broadcast %42 : vector<32x1xf32> to vector<32x32xf32>
    %44 = arith.subf %40, %43 : vector<32x32xf32>
    %45 = math.exp %44 : vector<32x32xf32>
    %cst_25 = arith.constant dense<0.000000e+00> : vector<32xf32>
    %46 = vector.multi_reduction <add>, %45, %cst_25 [1] : vector<32x32xf32> to vector<32xf32>
    %47 = vector.shape_cast %46 : vector<32xf32> to vector<32x1xf32>
    %48 = tpu.reciprocal %47 {approx = true} : vector<32x1xf32> -> vector<32x1xf32>
    %49 = vector.broadcast %48 : vector<32x1xf32> to vector<32x32xf32>
    %50 = arith.mulf %45, %49 : vector<32x32xf32>
    %cst_26 = arith.constant dense<0.000000e+00> : vector<32x16xf32>
    %51 = tpu.matmul %50, %36, %cst_26 {dimension_numbers = #tpu.dot_dimension_numbers<[1], [0], [0], [1], [0, 0, 1, 1], [], []>} : vector<32x32xf32>, vector<32x16xf32>, vector<32x16xf32> -> vector<32x16xf32>
    %52 = tpu.concatenate %33, %51 in 1 : vector<32x16xf32>, vector<32x16xf32> -> vector<32x32xf32>
    %c0_27 = arith.constant 0 : index
    %c0_28 = arith.constant 0 : index
    %c0_29 = arith.constant 0 : index
    %53 = vector.load %arg8[%c0_27, %c0_28, %c0_29] : memref<2x32x32xf32, #tpu.memory_space<vmem>>, vector<1x32x32xf32>
    %54 = vector.shape_cast %53 : vector<1x32x32xf32> to vector<32x32xf32>
    %cst_30 = arith.constant dense<0.000000e+00> : vector<32x32xf32>
    %55 = tpu.matmul %52, %54, %cst_30 {dimension_numbers = #tpu.dot_dimension_numbers<[1], [0], [0], [1], [0, 0, 1, 1], [], []>} : vector<32x32xf32>, vector<32x32xf32>, vector<32x32xf32> -> vector<32x32xf32>
    %56 = arith.addf %8, %55 : vector<32x32xf32>
    %c0_31 = arith.constant 0 : index
    %c0_32 = arith.constant 0 : index
    %c0_33 = arith.constant 0 : index
    %57 = vector.load %arg9[%c0_31, %c0_32, %c0_33] : memref<2x1x32xf32, #tpu.memory_space<vmem>>, vector<1x1x32xf32>
    %58 = vector.shape_cast %57 : vector<1x1x32xf32> to vector<1x32xf32>
    %c0_34 = arith.constant 0 : index
    %c0_35 = arith.constant 0 : index
    %c0_36 = arith.constant 0 : index
    %59 = vector.load %arg10[%c0_34, %c0_35, %c0_36] : memref<2x1x32xf32, #tpu.memory_space<vmem>>, vector<1x1x32xf32>
    %60 = vector.shape_cast %59 : vector<1x1x32xf32> to vector<1x32xf32>
    %cst_37 = arith.constant dense<0.000000e+00> : vector<32xf32>
    %61 = vector.multi_reduction <add>, %56, %cst_37 [1] : vector<32x32xf32> to vector<32xf32>
    %62 = vector.shape_cast %61 : vector<32xf32> to vector<32x1xf32>
    %cst_38 = arith.constant 3.200000e+01 : f32
    %63 = vector.broadcast %cst_38 : f32 to vector<32x1xf32>
    %64 = arith.divf %62, %63 : vector<32x1xf32>
    %65 = vector.broadcast %64 : vector<32x1xf32> to vector<32x32xf32>
    %66 = arith.subf %56, %65 : vector<32x32xf32>
    %67 = arith.mulf %66, %66 : vector<32x32xf32>
    %cst_39 = arith.constant dense<0.000000e+00> : vector<32xf32>
    %68 = vector.multi_reduction <add>, %67, %cst_39 [1] : vector<32x32xf32> to vector<32xf32>
    %69 = vector.shape_cast %68 : vector<32xf32> to vector<32x1xf32>
    %cst_40 = arith.constant 3.200000e+01 : f32
    %70 = vector.broadcast %cst_40 : f32 to vector<32x1xf32>
    %71 = arith.divf %69, %70 : vector<32x1xf32>
    %72 = vector.broadcast %64 : vector<32x1xf32> to vector<32x32xf32>
    %73 = arith.subf %56, %72 : vector<32x32xf32>
    %cst_41 = arith.constant 9.99999974E-6 : f32
    %74 = vector.broadcast %cst_41 : f32 to vector<32x1xf32>
    %75 = arith.addf %71, %74 : vector<32x1xf32>
    %76 = math.rsqrt %75 : vector<32x1xf32>
    %77 = vector.broadcast %76 : vector<32x1xf32> to vector<32x32xf32>
    %78 = arith.mulf %73, %77 : vector<32x32xf32>
    %79 = vector.broadcast %58 : vector<1x32xf32> to vector<32x32xf32>
    %80 = arith.mulf %78, %79 : vector<32x32xf32>
    %81 = vector.broadcast %60 : vector<1x32xf32> to vector<32x32xf32>
    %82 = arith.addf %80, %81 : vector<32x32xf32>
    %83 = vector.broadcast %0 : vector<32x1xf32> to vector<32x32xf32>
    %84 = arith.mulf %82, %83 : vector<32x32xf32>
    %cst_42 = arith.constant dense<0.000000e+00> : vector<32x32xf32>
    %85 = tpu.matmul %2, %84, %cst_42 {dimension_numbers = #tpu.dot_dimension_numbers<[1], [0], [0], [1], [0, 0, 1, 1], [], []>} : vector<32x32xf32>, vector<32x32xf32>, vector<32x32xf32> -> vector<32x32xf32>
    %cst_43 = arith.constant dense<0.000000e+00> : vector<32x32xf32>
    %86 = tpu.matmul %3, %84, %cst_43 {dimension_numbers = #tpu.dot_dimension_numbers<[1], [0], [0], [1], [0, 0, 1, 1], [], []>} : vector<32x32xf32>, vector<32x32xf32>, vector<32x32xf32> -> vector<32x32xf32>
    %c0_44 = arith.constant 0 : index
    %c0_45 = arith.constant 0 : index
    %c0_46 = arith.constant 0 : index
    %c0_47 = arith.constant 0 : index
    %87 = vector.load %arg11[%c0_44, %c0_45, %c0_46, %c0_47] : memref<2x3x32x64xf32, #tpu.memory_space<vmem>>, vector<1x1x32x64xf32>
    %88 = vector.shape_cast %87 : vector<1x1x32x64xf32> to vector<32x64xf32>
    %cst_48 = arith.constant dense<0.000000e+00> : vector<32x64xf32>
    %89 = tpu.matmul %85, %88, %cst_48 {dimension_numbers = #tpu.dot_dimension_numbers<[1], [0], [0], [1], [0, 0, 1, 1], [], []>} : vector<32x32xf32>, vector<32x64xf32>, vector<32x64xf32> -> vector<32x64xf32>
    %c0_49 = arith.constant 0 : index
    %c1 = arith.constant 1 : index
    %c0_50 = arith.constant 0 : index
    %c0_51 = arith.constant 0 : index
    %90 = vector.load %arg11[%c0_49, %c1, %c0_50, %c0_51] : memref<2x3x32x64xf32, #tpu.memory_space<vmem>>, vector<1x1x32x64xf32>
    %91 = vector.shape_cast %90 : vector<1x1x32x64xf32> to vector<32x64xf32>
    %cst_52 = arith.constant dense<0.000000e+00> : vector<32x64xf32>
    %92 = tpu.matmul %84, %91, %cst_52 {dimension_numbers = #tpu.dot_dimension_numbers<[1], [0], [0], [1], [0, 0, 1, 1], [], []>} : vector<32x32xf32>, vector<32x64xf32>, vector<32x64xf32> -> vector<32x64xf32>
    %93 = arith.addf %89, %92 : vector<32x64xf32>
    %c0_53 = arith.constant 0 : index
    %c2 = arith.constant 2 : index
    %c0_54 = arith.constant 0 : index
    %c0_55 = arith.constant 0 : index
    %94 = vector.load %arg11[%c0_53, %c2, %c0_54, %c0_55] : memref<2x3x32x64xf32, #tpu.memory_space<vmem>>, vector<1x1x32x64xf32>
    %95 = vector.shape_cast %94 : vector<1x1x32x64xf32> to vector<32x64xf32>
    %cst_56 = arith.constant dense<0.000000e+00> : vector<32x64xf32>
    %96 = tpu.matmul %86, %95, %cst_56 {dimension_numbers = #tpu.dot_dimension_numbers<[1], [0], [0], [1], [0, 0, 1, 1], [], []>} : vector<32x32xf32>, vector<32x64xf32>, vector<32x64xf32> -> vector<32x64xf32>
    %97 = arith.addf %93, %96 : vector<32x64xf32>
    %c0_57 = arith.constant 0 : index
    %c0_58 = arith.constant 0 : index
    %c0_59 = arith.constant 0 : index
    %98 = vector.load %arg12[%c0_57, %c0_58, %c0_59] : memref<2x1x64xf32, #tpu.memory_space<vmem>>, vector<1x1x64xf32>
    %99 = vector.shape_cast %98 : vector<1x1x64xf32> to vector<1x64xf32>
    %100 = vector.broadcast %99 : vector<1x64xf32> to vector<32x64xf32>
    %101 = arith.addf %97, %100 : vector<32x64xf32>
    %cst_60 = arith.constant 0.000000e+00 : f32
    %102 = vector.broadcast %cst_60 : f32 to vector<32x64xf32>
    %103 = arith.maximumf %101, %102 : vector<32x64xf32>
    %cst_61 = arith.constant dense<0.000000e+00> : vector<32x64xf32>
    %104 = tpu.matmul %2, %103, %cst_61 {dimension_numbers = #tpu.dot_dimension_numbers<[1], [0], [0], [1], [0, 0, 1, 1], [], []>} : vector<32x32xf32>, vector<32x64xf32>, vector<32x64xf32> -> vector<32x64xf32>
    %cst_62 = arith.constant dense<0.000000e+00> : vector<32x64xf32>
    %105 = tpu.matmul %3, %103, %cst_62 {dimension_numbers = #tpu.dot_dimension_numbers<[1], [0], [0], [1], [0, 0, 1, 1], [], []>} : vector<32x32xf32>, vector<32x64xf32>, vector<32x64xf32> -> vector<32x64xf32>
    %c0_63 = arith.constant 0 : index
    %c0_64 = arith.constant 0 : index
    %c0_65 = arith.constant 0 : index
    %c0_66 = arith.constant 0 : index
    %106 = vector.load %arg13[%c0_63, %c0_64, %c0_65, %c0_66] : memref<2x3x64x32xf32, #tpu.memory_space<vmem>>, vector<1x1x64x32xf32>
    %107 = vector.shape_cast %106 : vector<1x1x64x32xf32> to vector<64x32xf32>
    %cst_67 = arith.constant dense<0.000000e+00> : vector<32x32xf32>
    %108 = tpu.matmul %104, %107, %cst_67 {dimension_numbers = #tpu.dot_dimension_numbers<[1], [0], [0], [1], [0, 0, 1, 1], [], []>} : vector<32x64xf32>, vector<64x32xf32>, vector<32x32xf32> -> vector<32x32xf32>
    %c0_68 = arith.constant 0 : index
    %c1_69 = arith.constant 1 : index
    %c0_70 = arith.constant 0 : index
    %c0_71 = arith.constant 0 : index
    %109 = vector.load %arg13[%c0_68, %c1_69, %c0_70, %c0_71] : memref<2x3x64x32xf32, #tpu.memory_space<vmem>>, vector<1x1x64x32xf32>
    %110 = vector.shape_cast %109 : vector<1x1x64x32xf32> to vector<64x32xf32>
    %cst_72 = arith.constant dense<0.000000e+00> : vector<32x32xf32>
    %111 = tpu.matmul %103, %110, %cst_72 {dimension_numbers = #tpu.dot_dimension_numbers<[1], [0], [0], [1], [0, 0, 1, 1], [], []>} : vector<32x64xf32>, vector<64x32xf32>, vector<32x32xf32> -> vector<32x32xf32>
    %112 = arith.addf %108, %111 : vector<32x32xf32>
    %c0_73 = arith.constant 0 : index
    %c2_74 = arith.constant 2 : index
    %c0_75 = arith.constant 0 : index
    %c0_76 = arith.constant 0 : index
    %113 = vector.load %arg13[%c0_73, %c2_74, %c0_75, %c0_76] : memref<2x3x64x32xf32, #tpu.memory_space<vmem>>, vector<1x1x64x32xf32>
    %114 = vector.shape_cast %113 : vector<1x1x64x32xf32> to vector<64x32xf32>
    %cst_77 = arith.constant dense<0.000000e+00> : vector<32x32xf32>
    %115 = tpu.matmul %105, %114, %cst_77 {dimension_numbers = #tpu.dot_dimension_numbers<[1], [0], [0], [1], [0, 0, 1, 1], [], []>} : vector<32x64xf32>, vector<64x32xf32>, vector<32x32xf32> -> vector<32x32xf32>
    %116 = arith.addf %112, %115 : vector<32x32xf32>
    %c0_78 = arith.constant 0 : index
    %c0_79 = arith.constant 0 : index
    %c0_80 = arith.constant 0 : index
    %117 = vector.load %arg14[%c0_78, %c0_79, %c0_80] : memref<2x1x32xf32, #tpu.memory_space<vmem>>, vector<1x1x32xf32>
    %118 = vector.shape_cast %117 : vector<1x1x32xf32> to vector<1x32xf32>
    %119 = vector.broadcast %118 : vector<1x32xf32> to vector<32x32xf32>
    %120 = arith.addf %116, %119 : vector<32x32xf32>
    %121 = arith.addf %84, %120 : vector<32x32xf32>
    %c0_81 = arith.constant 0 : index
    %c0_82 = arith.constant 0 : index
    %c0_83 = arith.constant 0 : index
    %122 = vector.load %arg15[%c0_81, %c0_82, %c0_83] : memref<2x1x32xf32, #tpu.memory_space<vmem>>, vector<1x1x32xf32>
    %123 = vector.shape_cast %122 : vector<1x1x32xf32> to vector<1x32xf32>
    %c0_84 = arith.constant 0 : index
    %c0_85 = arith.constant 0 : index
    %c0_86 = arith.constant 0 : index
    %124 = vector.load %arg16[%c0_84, %c0_85, %c0_86] : memref<2x1x32xf32, #tpu.memory_space<vmem>>, vector<1x1x32xf32>
    %125 = vector.shape_cast %124 : vector<1x1x32xf32> to vector<1x32xf32>
    %cst_87 = arith.constant dense<0.000000e+00> : vector<32xf32>
    %126 = vector.multi_reduction <add>, %121, %cst_87 [1] : vector<32x32xf32> to vector<32xf32>
    %127 = vector.shape_cast %126 : vector<32xf32> to vector<32x1xf32>
    %cst_88 = arith.constant 3.200000e+01 : f32
    %128 = vector.broadcast %cst_88 : f32 to vector<32x1xf32>
    %129 = arith.divf %127, %128 : vector<32x1xf32>
    %130 = vector.broadcast %129 : vector<32x1xf32> to vector<32x32xf32>
    %131 = arith.subf %121, %130 : vector<32x32xf32>
    %132 = arith.mulf %131, %131 : vector<32x32xf32>
    %cst_89 = arith.constant dense<0.000000e+00> : vector<32xf32>
    %133 = vector.multi_reduction <add>, %132, %cst_89 [1] : vector<32x32xf32> to vector<32xf32>
    %134 = vector.shape_cast %133 : vector<32xf32> to vector<32x1xf32>
    %cst_90 = arith.constant 3.200000e+01 : f32
    %135 = vector.broadcast %cst_90 : f32 to vector<32x1xf32>
    %136 = arith.divf %134, %135 : vector<32x1xf32>
    %137 = vector.broadcast %129 : vector<32x1xf32> to vector<32x32xf32>
    %138 = arith.subf %121, %137 : vector<32x32xf32>
    %cst_91 = arith.constant 9.99999974E-6 : f32
    %139 = vector.broadcast %cst_91 : f32 to vector<32x1xf32>
    %140 = arith.addf %136, %139 : vector<32x1xf32>
    %141 = math.rsqrt %140 : vector<32x1xf32>
    %142 = vector.broadcast %141 : vector<32x1xf32> to vector<32x32xf32>
    %143 = arith.mulf %138, %142 : vector<32x32xf32>
    %144 = vector.broadcast %123 : vector<1x32xf32> to vector<32x32xf32>
    %145 = arith.mulf %143, %144 : vector<32x32xf32>
    %146 = vector.broadcast %125 : vector<1x32xf32> to vector<32x32xf32>
    %147 = arith.addf %145, %146 : vector<32x32xf32>
    %148 = vector.broadcast %0 : vector<32x1xf32> to vector<32x32xf32>
    %149 = arith.mulf %147, %148 : vector<32x32xf32>
    %c1_92 = arith.constant 1 : index
    %c0_93 = arith.constant 0 : index
    %c0_94 = arith.constant 0 : index
    %150 = vector.load %arg6[%c1_92, %c0_93, %c0_94] : memref<2x32x96xf32, #tpu.memory_space<vmem>>, vector<1x32x96xf32>
    %151 = vector.shape_cast %150 : vector<1x32x96xf32> to vector<32x96xf32>
    %cst_95 = arith.constant dense<0.000000e+00> : vector<32x96xf32>
    %152 = tpu.matmul %149, %151, %cst_95 {dimension_numbers = #tpu.dot_dimension_numbers<[1], [0], [0], [1], [0, 0, 1, 1], [], []>} : vector<32x32xf32>, vector<32x96xf32>, vector<32x96xf32> -> vector<32x96xf32>
    %c1_96 = arith.constant 1 : index
    %c0_97 = arith.constant 0 : index
    %c0_98 = arith.constant 0 : index
    %153 = vector.load %arg7[%c1_96, %c0_97, %c0_98] : memref<2x1x96xf32, #tpu.memory_space<vmem>>, vector<1x1x96xf32>
    %154 = vector.shape_cast %153 : vector<1x1x96xf32> to vector<1x96xf32>
    %155 = vector.broadcast %154 : vector<1x96xf32> to vector<32x96xf32>
    %156 = arith.addf %152, %155 : vector<32x96xf32>
    %157 = vector.extract_strided_slice %156 {offsets = [0, 0], sizes = [32, 16], strides = [1, 1]} : vector<32x96xf32> to vector<32x16xf32>
    %158 = vector.extract_strided_slice %156 {offsets = [0, 32], sizes = [32, 16], strides = [1, 1]} : vector<32x96xf32> to vector<32x16xf32>
    %159 = vector.extract_strided_slice %156 {offsets = [0, 64], sizes = [32, 16], strides = [1, 1]} : vector<32x96xf32> to vector<32x16xf32>
    %cst_99 = arith.constant dense<0.000000e+00> : vector<32x32xf32>
    %160 = tpu.matmul %157, %158, %cst_99 {dimension_numbers = #tpu.dot_dimension_numbers<[1], [1], [0], [0], [0, 0, 1, 0], [], []>} : vector<32x16xf32>, vector<32x16xf32>, vector<32x32xf32> -> vector<32x32xf32>
    %cst_100 = arith.constant 2.500000e-01 : f32
    %161 = vector.broadcast %cst_100 : f32 to vector<32x32xf32>
    %162 = arith.mulf %160, %161 : vector<32x32xf32>
    %163 = arith.addf %162, %1 : vector<32x32xf32>
    %cst_101 = arith.constant dense<0xFF800000> : vector<32xf32>
    %164 = vector.multi_reduction <maximumf>, %163, %cst_101 [1] : vector<32x32xf32> to vector<32xf32>
    %165 = vector.shape_cast %164 : vector<32xf32> to vector<32x1xf32>
    %166 = vector.broadcast %165 : vector<32x1xf32> to vector<32x32xf32>
    %167 = arith.subf %163, %166 : vector<32x32xf32>
    %168 = math.exp %167 : vector<32x32xf32>
    %cst_102 = arith.constant dense<0.000000e+00> : vector<32xf32>
    %169 = vector.multi_reduction <add>, %168, %cst_102 [1] : vector<32x32xf32> to vector<32xf32>
    %170 = vector.shape_cast %169 : vector<32xf32> to vector<32x1xf32>
    %171 = tpu.reciprocal %170 {approx = true} : vector<32x1xf32> -> vector<32x1xf32>
    %172 = vector.broadcast %171 : vector<32x1xf32> to vector<32x32xf32>
    %173 = arith.mulf %168, %172 : vector<32x32xf32>
    %cst_103 = arith.constant dense<0.000000e+00> : vector<32x16xf32>
    %174 = tpu.matmul %173, %159, %cst_103 {dimension_numbers = #tpu.dot_dimension_numbers<[1], [0], [0], [1], [0, 0, 1, 1], [], []>} : vector<32x32xf32>, vector<32x16xf32>, vector<32x16xf32> -> vector<32x16xf32>
    %175 = vector.extract_strided_slice %156 {offsets = [0, 16], sizes = [32, 16], strides = [1, 1]} : vector<32x96xf32> to vector<32x16xf32>
    %176 = vector.extract_strided_slice %156 {offsets = [0, 48], sizes = [32, 16], strides = [1, 1]} : vector<32x96xf32> to vector<32x16xf32>
    %177 = vector.extract_strided_slice %156 {offsets = [0, 80], sizes = [32, 16], strides = [1, 1]} : vector<32x96xf32> to vector<32x16xf32>
    %cst_104 = arith.constant dense<0.000000e+00> : vector<32x32xf32>
    %178 = tpu.matmul %175, %176, %cst_104 {dimension_numbers = #tpu.dot_dimension_numbers<[1], [1], [0], [0], [0, 0, 1, 0], [], []>} : vector<32x16xf32>, vector<32x16xf32>, vector<32x32xf32> -> vector<32x32xf32>
    %cst_105 = arith.constant 2.500000e-01 : f32
    %179 = vector.broadcast %cst_105 : f32 to vector<32x32xf32>
    %180 = arith.mulf %178, %179 : vector<32x32xf32>
    %181 = arith.addf %180, %1 : vector<32x32xf32>
    %cst_106 = arith.constant dense<0xFF800000> : vector<32xf32>
    %182 = vector.multi_reduction <maximumf>, %181, %cst_106 [1] : vector<32x32xf32> to vector<32xf32>
    %183 = vector.shape_cast %182 : vector<32xf32> to vector<32x1xf32>
    %184 = vector.broadcast %183 : vector<32x1xf32> to vector<32x32xf32>
    %185 = arith.subf %181, %184 : vector<32x32xf32>
    %186 = math.exp %185 : vector<32x32xf32>
    %cst_107 = arith.constant dense<0.000000e+00> : vector<32xf32>
    %187 = vector.multi_reduction <add>, %186, %cst_107 [1] : vector<32x32xf32> to vector<32xf32>
    %188 = vector.shape_cast %187 : vector<32xf32> to vector<32x1xf32>
    %189 = tpu.reciprocal %188 {approx = true} : vector<32x1xf32> -> vector<32x1xf32>
    %190 = vector.broadcast %189 : vector<32x1xf32> to vector<32x32xf32>
    %191 = arith.mulf %186, %190 : vector<32x32xf32>
    %cst_108 = arith.constant dense<0.000000e+00> : vector<32x16xf32>
    %192 = tpu.matmul %191, %177, %cst_108 {dimension_numbers = #tpu.dot_dimension_numbers<[1], [0], [0], [1], [0, 0, 1, 1], [], []>} : vector<32x32xf32>, vector<32x16xf32>, vector<32x16xf32> -> vector<32x16xf32>
    %193 = tpu.concatenate %174, %192 in 1 : vector<32x16xf32>, vector<32x16xf32> -> vector<32x32xf32>
    %c1_109 = arith.constant 1 : index
    %c0_110 = arith.constant 0 : index
    %c0_111 = arith.constant 0 : index
    %194 = vector.load %arg8[%c1_109, %c0_110, %c0_111] : memref<2x32x32xf32, #tpu.memory_space<vmem>>, vector<1x32x32xf32>
    %195 = vector.shape_cast %194 : vector<1x32x32xf32> to vector<32x32xf32>
    %cst_112 = arith.constant dense<0.000000e+00> : vector<32x32xf32>
    %196 = tpu.matmul %193, %195, %cst_112 {dimension_numbers = #tpu.dot_dimension_numbers<[1], [0], [0], [1], [0, 0, 1, 1], [], []>} : vector<32x32xf32>, vector<32x32xf32>, vector<32x32xf32> -> vector<32x32xf32>
    %197 = arith.addf %149, %196 : vector<32x32xf32>
    %c1_113 = arith.constant 1 : index
    %c0_114 = arith.constant 0 : index
    %c0_115 = arith.constant 0 : index
    %198 = vector.load %arg9[%c1_113, %c0_114, %c0_115] : memref<2x1x32xf32, #tpu.memory_space<vmem>>, vector<1x1x32xf32>
    %199 = vector.shape_cast %198 : vector<1x1x32xf32> to vector<1x32xf32>
    %c1_116 = arith.constant 1 : index
    %c0_117 = arith.constant 0 : index
    %c0_118 = arith.constant 0 : index
    %200 = vector.load %arg10[%c1_116, %c0_117, %c0_118] : memref<2x1x32xf32, #tpu.memory_space<vmem>>, vector<1x1x32xf32>
    %201 = vector.shape_cast %200 : vector<1x1x32xf32> to vector<1x32xf32>
    %cst_119 = arith.constant dense<0.000000e+00> : vector<32xf32>
    %202 = vector.multi_reduction <add>, %197, %cst_119 [1] : vector<32x32xf32> to vector<32xf32>
    %203 = vector.shape_cast %202 : vector<32xf32> to vector<32x1xf32>
    %cst_120 = arith.constant 3.200000e+01 : f32
    %204 = vector.broadcast %cst_120 : f32 to vector<32x1xf32>
    %205 = arith.divf %203, %204 : vector<32x1xf32>
    %206 = vector.broadcast %205 : vector<32x1xf32> to vector<32x32xf32>
    %207 = arith.subf %197, %206 : vector<32x32xf32>
    %208 = arith.mulf %207, %207 : vector<32x32xf32>
    %cst_121 = arith.constant dense<0.000000e+00> : vector<32xf32>
    %209 = vector.multi_reduction <add>, %208, %cst_121 [1] : vector<32x32xf32> to vector<32xf32>
    %210 = vector.shape_cast %209 : vector<32xf32> to vector<32x1xf32>
    %cst_122 = arith.constant 3.200000e+01 : f32
    %211 = vector.broadcast %cst_122 : f32 to vector<32x1xf32>
    %212 = arith.divf %210, %211 : vector<32x1xf32>
    %213 = vector.broadcast %205 : vector<32x1xf32> to vector<32x32xf32>
    %214 = arith.subf %197, %213 : vector<32x32xf32>
    %cst_123 = arith.constant 9.99999974E-6 : f32
    %215 = vector.broadcast %cst_123 : f32 to vector<32x1xf32>
    %216 = arith.addf %212, %215 : vector<32x1xf32>
    %217 = math.rsqrt %216 : vector<32x1xf32>
    %218 = vector.broadcast %217 : vector<32x1xf32> to vector<32x32xf32>
    %219 = arith.mulf %214, %218 : vector<32x32xf32>
    %220 = vector.broadcast %199 : vector<1x32xf32> to vector<32x32xf32>
    %221 = arith.mulf %219, %220 : vector<32x32xf32>
    %222 = vector.broadcast %201 : vector<1x32xf32> to vector<32x32xf32>
    %223 = arith.addf %221, %222 : vector<32x32xf32>
    %224 = vector.broadcast %0 : vector<32x1xf32> to vector<32x32xf32>
    %225 = arith.mulf %223, %224 : vector<32x32xf32>
    %cst_124 = arith.constant dense<0.000000e+00> : vector<32x32xf32>
    %226 = tpu.matmul %2, %225, %cst_124 {dimension_numbers = #tpu.dot_dimension_numbers<[1], [0], [0], [1], [0, 0, 1, 1], [], []>} : vector<32x32xf32>, vector<32x32xf32>, vector<32x32xf32> -> vector<32x32xf32>
    %cst_125 = arith.constant dense<0.000000e+00> : vector<32x32xf32>
    %227 = tpu.matmul %3, %225, %cst_125 {dimension_numbers = #tpu.dot_dimension_numbers<[1], [0], [0], [1], [0, 0, 1, 1], [], []>} : vector<32x32xf32>, vector<32x32xf32>, vector<32x32xf32> -> vector<32x32xf32>
    %c1_126 = arith.constant 1 : index
    %c0_127 = arith.constant 0 : index
    %c0_128 = arith.constant 0 : index
    %c0_129 = arith.constant 0 : index
    %228 = vector.load %arg11[%c1_126, %c0_127, %c0_128, %c0_129] : memref<2x3x32x64xf32, #tpu.memory_space<vmem>>, vector<1x1x32x64xf32>
    %229 = vector.shape_cast %228 : vector<1x1x32x64xf32> to vector<32x64xf32>
    %cst_130 = arith.constant dense<0.000000e+00> : vector<32x64xf32>
    %230 = tpu.matmul %226, %229, %cst_130 {dimension_numbers = #tpu.dot_dimension_numbers<[1], [0], [0], [1], [0, 0, 1, 1], [], []>} : vector<32x32xf32>, vector<32x64xf32>, vector<32x64xf32> -> vector<32x64xf32>
    %c1_131 = arith.constant 1 : index
    %c1_132 = arith.constant 1 : index
    %c0_133 = arith.constant 0 : index
    %c0_134 = arith.constant 0 : index
    %231 = vector.load %arg11[%c1_131, %c1_132, %c0_133, %c0_134] : memref<2x3x32x64xf32, #tpu.memory_space<vmem>>, vector<1x1x32x64xf32>
    %232 = vector.shape_cast %231 : vector<1x1x32x64xf32> to vector<32x64xf32>
    %cst_135 = arith.constant dense<0.000000e+00> : vector<32x64xf32>
    %233 = tpu.matmul %225, %232, %cst_135 {dimension_numbers = #tpu.dot_dimension_numbers<[1], [0], [0], [1], [0, 0, 1, 1], [], []>} : vector<32x32xf32>, vector<32x64xf32>, vector<32x64xf32> -> vector<32x64xf32>
    %234 = arith.addf %230, %233 : vector<32x64xf32>
    %c1_136 = arith.constant 1 : index
    %c2_137 = arith.constant 2 : index
    %c0_138 = arith.constant 0 : index
    %c0_139 = arith.constant 0 : index
    %235 = vector.load %arg11[%c1_136, %c2_137, %c0_138, %c0_139] : memref<2x3x32x64xf32, #tpu.memory_space<vmem>>, vector<1x1x32x64xf32>
    %236 = vector.shape_cast %235 : vector<1x1x32x64xf32> to vector<32x64xf32>
    %cst_140 = arith.constant dense<0.000000e+00> : vector<32x64xf32>
    %237 = tpu.matmul %227, %236, %cst_140 {dimension_numbers = #tpu.dot_dimension_numbers<[1], [0], [0], [1], [0, 0, 1, 1], [], []>} : vector<32x32xf32>, vector<32x64xf32>, vector<32x64xf32> -> vector<32x64xf32>
    %238 = arith.addf %234, %237 : vector<32x64xf32>
    %c1_141 = arith.constant 1 : index
    %c0_142 = arith.constant 0 : index
    %c0_143 = arith.constant 0 : index
    %239 = vector.load %arg12[%c1_141, %c0_142, %c0_143] : memref<2x1x64xf32, #tpu.memory_space<vmem>>, vector<1x1x64xf32>
    %240 = vector.shape_cast %239 : vector<1x1x64xf32> to vector<1x64xf32>
    %241 = vector.broadcast %240 : vector<1x64xf32> to vector<32x64xf32>
    %242 = arith.addf %238, %241 : vector<32x64xf32>
    %cst_144 = arith.constant 0.000000e+00 : f32
    %243 = vector.broadcast %cst_144 : f32 to vector<32x64xf32>
    %244 = arith.maximumf %242, %243 : vector<32x64xf32>
    %cst_145 = arith.constant dense<0.000000e+00> : vector<32x64xf32>
    %245 = tpu.matmul %2, %244, %cst_145 {dimension_numbers = #tpu.dot_dimension_numbers<[1], [0], [0], [1], [0, 0, 1, 1], [], []>} : vector<32x32xf32>, vector<32x64xf32>, vector<32x64xf32> -> vector<32x64xf32>
    %cst_146 = arith.constant dense<0.000000e+00> : vector<32x64xf32>
    %246 = tpu.matmul %3, %244, %cst_146 {dimension_numbers = #tpu.dot_dimension_numbers<[1], [0], [0], [1], [0, 0, 1, 1], [], []>} : vector<32x32xf32>, vector<32x64xf32>, vector<32x64xf32> -> vector<32x64xf32>
    %c1_147 = arith.constant 1 : index
    %c0_148 = arith.constant 0 : index
    %c0_149 = arith.constant 0 : index
    %c0_150 = arith.constant 0 : index
    %247 = vector.load %arg13[%c1_147, %c0_148, %c0_149, %c0_150] : memref<2x3x64x32xf32, #tpu.memory_space<vmem>>, vector<1x1x64x32xf32>
    %248 = vector.shape_cast %247 : vector<1x1x64x32xf32> to vector<64x32xf32>
    %cst_151 = arith.constant dense<0.000000e+00> : vector<32x32xf32>
    %249 = tpu.matmul %245, %248, %cst_151 {dimension_numbers = #tpu.dot_dimension_numbers<[1], [0], [0], [1], [0, 0, 1, 1], [], []>} : vector<32x64xf32>, vector<64x32xf32>, vector<32x32xf32> -> vector<32x32xf32>
    %c1_152 = arith.constant 1 : index
    %c1_153 = arith.constant 1 : index
    %c0_154 = arith.constant 0 : index
    %c0_155 = arith.constant 0 : index
    %250 = vector.load %arg13[%c1_152, %c1_153, %c0_154, %c0_155] : memref<2x3x64x32xf32, #tpu.memory_space<vmem>>, vector<1x1x64x32xf32>
    %251 = vector.shape_cast %250 : vector<1x1x64x32xf32> to vector<64x32xf32>
    %cst_156 = arith.constant dense<0.000000e+00> : vector<32x32xf32>
    %252 = tpu.matmul %244, %251, %cst_156 {dimension_numbers = #tpu.dot_dimension_numbers<[1], [0], [0], [1], [0, 0, 1, 1], [], []>} : vector<32x64xf32>, vector<64x32xf32>, vector<32x32xf32> -> vector<32x32xf32>
    %253 = arith.addf %249, %252 : vector<32x32xf32>
    %c1_157 = arith.constant 1 : index
    %c2_158 = arith.constant 2 : index
    %c0_159 = arith.constant 0 : index
    %c0_160 = arith.constant 0 : index
    %254 = vector.load %arg13[%c1_157, %c2_158, %c0_159, %c0_160] : memref<2x3x64x32xf32, #tpu.memory_space<vmem>>, vector<1x1x64x32xf32>
    %255 = vector.shape_cast %254 : vector<1x1x64x32xf32> to vector<64x32xf32>
    %cst_161 = arith.constant dense<0.000000e+00> : vector<32x32xf32>
    %256 = tpu.matmul %246, %255, %cst_161 {dimension_numbers = #tpu.dot_dimension_numbers<[1], [0], [0], [1], [0, 0, 1, 1], [], []>} : vector<32x64xf32>, vector<64x32xf32>, vector<32x32xf32> -> vector<32x32xf32>
    %257 = arith.addf %253, %256 : vector<32x32xf32>
    %c1_162 = arith.constant 1 : index
    %c0_163 = arith.constant 0 : index
    %c0_164 = arith.constant 0 : index
    %258 = vector.load %arg14[%c1_162, %c0_163, %c0_164] : memref<2x1x32xf32, #tpu.memory_space<vmem>>, vector<1x1x32xf32>
    %259 = vector.shape_cast %258 : vector<1x1x32xf32> to vector<1x32xf32>
    %260 = vector.broadcast %259 : vector<1x32xf32> to vector<32x32xf32>
    %261 = arith.addf %257, %260 : vector<32x32xf32>
    %262 = arith.addf %225, %261 : vector<32x32xf32>
    %c1_165 = arith.constant 1 : index
    %c0_166 = arith.constant 0 : index
    %c0_167 = arith.constant 0 : index
    %263 = vector.load %arg15[%c1_165, %c0_166, %c0_167] : memref<2x1x32xf32, #tpu.memory_space<vmem>>, vector<1x1x32xf32>
    %264 = vector.shape_cast %263 : vector<1x1x32xf32> to vector<1x32xf32>
    %c1_168 = arith.constant 1 : index
    %c0_169 = arith.constant 0 : index
    %c0_170 = arith.constant 0 : index
    %265 = vector.load %arg16[%c1_168, %c0_169, %c0_170] : memref<2x1x32xf32, #tpu.memory_space<vmem>>, vector<1x1x32xf32>
    %266 = vector.shape_cast %265 : vector<1x1x32xf32> to vector<1x32xf32>
    %cst_171 = arith.constant dense<0.000000e+00> : vector<32xf32>
    %267 = vector.multi_reduction <add>, %262, %cst_171 [1] : vector<32x32xf32> to vector<32xf32>
    %268 = vector.shape_cast %267 : vector<32xf32> to vector<32x1xf32>
    %cst_172 = arith.constant 3.200000e+01 : f32
    %269 = vector.broadcast %cst_172 : f32 to vector<32x1xf32>
    %270 = arith.divf %268, %269 : vector<32x1xf32>
    %271 = vector.broadcast %270 : vector<32x1xf32> to vector<32x32xf32>
    %272 = arith.subf %262, %271 : vector<32x32xf32>
    %273 = arith.mulf %272, %272 : vector<32x32xf32>
    %cst_173 = arith.constant dense<0.000000e+00> : vector<32xf32>
    %274 = vector.multi_reduction <add>, %273, %cst_173 [1] : vector<32x32xf32> to vector<32xf32>
    %275 = vector.shape_cast %274 : vector<32xf32> to vector<32x1xf32>
    %cst_174 = arith.constant 3.200000e+01 : f32
    %276 = vector.broadcast %cst_174 : f32 to vector<32x1xf32>
    %277 = arith.divf %275, %276 : vector<32x1xf32>
    %278 = vector.broadcast %270 : vector<32x1xf32> to vector<32x32xf32>
    %279 = arith.subf %262, %278 : vector<32x32xf32>
    %cst_175 = arith.constant 9.99999974E-6 : f32
    %280 = vector.broadcast %cst_175 : f32 to vector<32x1xf32>
    %281 = arith.addf %277, %280 : vector<32x1xf32>
    %282 = math.rsqrt %281 : vector<32x1xf32>
    %283 = vector.broadcast %282 : vector<32x1xf32> to vector<32x32xf32>
    %284 = arith.mulf %279, %283 : vector<32x32xf32>
    %285 = vector.broadcast %264 : vector<1x32xf32> to vector<32x32xf32>
    %286 = arith.mulf %284, %285 : vector<32x32xf32>
    %287 = vector.broadcast %266 : vector<1x32xf32> to vector<32x32xf32>
    %288 = arith.addf %286, %287 : vector<32x32xf32>
    %289 = vector.broadcast %0 : vector<32x1xf32> to vector<32x32xf32>
    %290 = arith.mulf %288, %289 : vector<32x32xf32>
    %c0_176 = arith.constant 0 : index
    %c0_177 = arith.constant 0 : index
    %291 = vector.load %arg17[%c0_176, %c0_177] : memref<32x32xf32, #tpu.memory_space<vmem>>, vector<32x32xf32>
    tpu.vector_store %arg17[%c0_176, %c0_177], %290 {strides = array<i32>} : memref<32x32xf32, #tpu.memory_space<vmem>>, vector<32x32xf32>,
    return
  }
}

</mosaic_0001>

<llo_original>
// kernel: fft_forward.1
$region0: #{fft_forward.1}
  #allocation0 [shape = 'u32[]', space=smem, size = 0x4, offset = 0x4, fixed_abs, tag = 'smem constant byte address 0x4 - core index']
  #allocation1 [shape = 'u32[144,128]{1,0:T(1,128)}', space=vmem, size = 0x12000, scoped, tag = 'internal scratch']
  %s0 = inlined_call_operand.vmem [shape: f32[32,32], index: 0, kind: input, shape index: {}]
  %s1 = inlined_call_operand.vmem [shape: f32[32,32], index: 1, kind: input, shape index: {}]
  %s2 = inlined_call_operand.vmem [shape: f32[32,1], index: 2, kind: input, shape index: {}]
  %s3 = inlined_call_operand.vmem [shape: f32[32,32], index: 3, kind: input, shape index: {}]
  %s4 = inlined_call_operand.vmem [shape: f32[32,32], index: 4, kind: input, shape index: {}]
  %s5 = inlined_call_operand.vmem [shape: f32[32,32], index: 5, kind: input, shape index: {}]
  %s6 = inlined_call_operand.vmem [shape: f32[2,32,96], index: 6, kind: input, shape index: {}]
  %s7 = inlined_call_operand.vmem [shape: f32[2,1,96], index: 7, kind: input, shape index: {}]
  %s8 = inlined_call_operand.vmem [shape: f32[2,32,32], index: 8, kind: input, shape index: {}]
  %s9 = inlined_call_operand.vmem [shape: f32[2,1,32], index: 9, kind: input, shape index: {}]
  %s10 = inlined_call_operand.vmem [shape: f32[2,1,32], index: 10, kind: input, shape index: {}]
  %s11 = inlined_call_operand.vmem [shape: f32[2,3,32,64], index: 11, kind: input, shape index: {}]
  %s12 = inlined_call_operand.vmem [shape: f32[2,1,64], index: 12, kind: input, shape index: {}]
  %s13 = inlined_call_operand.vmem [shape: f32[2,3,64,32], index: 13, kind: input, shape index: {}]
  %s14 = inlined_call_operand.vmem [shape: f32[2,1,32], index: 14, kind: input, shape index: {}]
  %s15 = inlined_call_operand.vmem [shape: f32[2,1,32], index: 15, kind: input, shape index: {}]
  %s16 = inlined_call_operand.vmem [shape: f32[2,1,32], index: 16, kind: input, shape index: {}]
  %s17 = inlined_call_operand.hbm [shape: f32[32,32], index: 17, kind: output, shape index: {}]
  %s18 = sld [smem:[#allocation0]]
  $region78: #{fft_forward.1} parent=0
    _
  %s20 = ssub.s32 1, %s18
  %s21 = scalar_select 0, %s20, %s18
  $region1: #{fft_forward.1} parent=0
    #allocation2 [shape = 'u8[16384]{0}', space=vmem, size = 0x4000, scoped, tag = 'output window, operand 0, single buffered']
    #allocation3 [shape = 's32[1]{0}', space=sflag, size = 0x4, scoped, tag = 'scoped memory for fft_forward.1']
    %22 = vsyncpa [#allocation3], 0
    // Predicated region
    $region2: #{fft_forward.1} parent=1 // pred_check
      _
    $region3: #{fft_forward.1} parent=1 // pred_check_branch
      %24 = sbr.rel (0) target = $region5
    $region4: #{fft_forward.1} parent=1 // pred_region
      _
    $region5: #{fft_forward.1} parent=1 // pred_fallthru
      _
    // Predicated region
    $region6: #{fft_forward.1} parent=1 // pred_check
      _
    $region7: #{fft_forward.1} parent=1 // pred_check_branch
      %26 = sbr.rel (0) target = $region9
    $region8: #{fft_forward.1} parent=1 // pred_region
      _
    $region9: #{fft_forward.1} parent=1 // pred_fallthru
      _
    // Predicated region
    $region10: #{fft_forward.1} parent=1 // pred_check
      _
    $region11: #{fft_forward.1} parent=1 // pred_check_branch
      %28 = sbr.rel (0) target = $region13
    $region12: #{fft_forward.1} parent=1 // pred_region
      _
    $region13: #{fft_forward.1} parent=1 // pred_fallthru
      _
    // Predicated region
    $region14: #{fft_forward.1} parent=1 // pred_check
      _
    $region15: #{fft_forward.1} parent=1 // pred_check_branch
      %30 = sbr.rel (0) target = $region17
    $region16: #{fft_forward.1} parent=1 // pred_region
      _
    $region17: #{fft_forward.1} parent=1 // pred_fallthru
      _
    // Predicated region
    $region18: #{fft_forward.1} parent=1 // pred_check
      _
    $region19: #{fft_forward.1} parent=1 // pred_check_branch
      %32 = sbr.rel (0) target = $region21
    $region20: #{fft_forward.1} parent=1 // pred_region
      _
    $region21: #{fft_forward.1} parent=1 // pred_fallthru
      _
    // Predicated region
    $region22: #{fft_forward.1} parent=1 // pred_check
      _
    $region23: #{fft_forward.1} parent=1 // pred_check_branch
      %34 = sbr.rel (0) target = $region25
    $region24: #{fft_forward.1} parent=1 // pred_region
      _
    $region25: #{fft_forward.1} parent=1 // pred_fallthru
      _
    // Predicated region
    $region26: #{fft_forward.1} parent=1 // pred_check
      _
    $region27: #{fft_forward.1} parent=1 // pred_check_branch
      %36 = sbr.rel (0) target = $region29
    $region28: #{fft_forward.1} parent=1 // pred_region
      _
    $region29: #{fft_forward.1} parent=1 // pred_fallthru
      _
    // Predicated region
    $region30: #{fft_forward.1} parent=1 // pred_check
      _
    $region31: #{fft_forward.1} parent=1 // pred_check_branch
      %38 = sbr.rel (0) target = $region33
    $region32: #{fft_forward.1} parent=1 // pred_region
      _
    $region33: #{fft_forward.1} parent=1 // pred_fallthru
      _
    // Predicated region
    $region34: #{fft_forward.1} parent=1 // pred_check
      _
    $region35: #{fft_forward.1} parent=1 // pred_check_branch
      %40 = sbr.rel (0) target = $region37
    $region36: #{fft_forward.1} parent=1 // pred_region
      _
    $region37: #{fft_forward.1} parent=1 // pred_fallthru
      _
    // Predicated region
    $region38: #{fft_forward.1} parent=1 // pred_check
      _
    $region39: #{fft_forward.1} parent=1 // pred_check_branch
      %42 = sbr.rel (0) target = $region41
    $region40: #{fft_forward.1} parent=1 // pred_region
      _
    $region41: #{fft_forward.1} parent=1 // pred_fallthru
      _
    // Predicated region
    $region42: #{fft_forward.1} parent=1 // pred_check
      _
    $region43: #{fft_forward.1} parent=1 // pred_check_branch
      %44 = sbr.rel (0) target = $region45
    $region44: #{fft_forward.1} parent=1 // pred_region
      _
    $region45: #{fft_forward.1} parent=1 // pred_fallthru
      _
    // Predicated region
    $region46: #{fft_forward.1} parent=1 // pred_check
      _
    $region47: #{fft_forward.1} parent=1 // pred_check_branch
      %46 = sbr.rel (0) target = $region49
    $region48: #{fft_forward.1} parent=1 // pred_region
      _
    $region49: #{fft_forward.1} parent=1 // pred_fallthru
      _
    // Predicated region
    $region50: #{fft_forward.1} parent=1 // pred_check
      _
    $region51: #{fft_forward.1} parent=1 // pred_check_branch
      %48 = sbr.rel (0) target = $region53
    $region52: #{fft_forward.1} parent=1 // pred_region
      _
    $region53: #{fft_forward.1} parent=1 // pred_fallthru
      _
    // Predicated region
    $region54: #{fft_forward.1} parent=1 // pred_check
      _
    $region55: #{fft_forward.1} parent=1 // pred_check_branch
      %50 = sbr.rel (0) target = $region57
    $region56: #{fft_forward.1} parent=1 // pred_region
      _
    $region57: #{fft_forward.1} parent=1 // pred_fallthru
      _
    // Predicated region
    $region58: #{fft_forward.1} parent=1 // pred_check
      _
    $region59: #{fft_forward.1} parent=1 // pred_check_branch
      %52 = sbr.rel (0) target = $region61
    $region60: #{fft_forward.1} parent=1 // pred_region
      _
    $region61: #{fft_forward.1} parent=1 // pred_fallthru
      _
    // Predicated region
    $region62: #{fft_forward.1} parent=1 // pred_check
      _
    $region63: #{fft_forward.1} parent=1 // pred_check_branch
      %54 = sbr.rel (0) target = $region65
    $region64: #{fft_forward.1} parent=1 // pred_region
      _
    $region65: #{fft_forward.1} parent=1 // pred_fallthru
      _
    // Predicated region
    $region66: #{fft_forward.1} parent=1 // pred_check
      _
    $region67: #{fft_forward.1} parent=1 // pred_check_branch
      %56 = sbr.rel (0) target = $region69
    $region68: #{fft_forward.1} parent=1 // pred_region
      _
    $region69: #{fft_forward.1} parent=1 // pred_fallthru
      _
    %v57 = vld [vmem:[%s2] sm:$0xff]
    %v58 = vld [vmem:[%s2 + $0x8] sm:$0xff]
    %v59 = vld [vmem:[%s2 + $0x10] sm:$0xff]
    %v60 = vld [vmem:[%s2 + $0x18] sm:$0xff]
    %v61 = vld [vmem:[%s3] sm:$0xff]
    %v62 = vld [vmem:[%s3 + $0x8] sm:$0xff]
    %v63 = vld [vmem:[%s3 + $0x10] sm:$0xff]
    %v64 = vld [vmem:[%s3 + $0x18] sm:$0xff]
    %v65 = vld [vmem:[%s4] sm:$0xff]
    %v66 = vld [vmem:[%s4 + $0x8] sm:$0xff]
    %v67 = vld [vmem:[%s4 + $0x10] sm:$0xff]
    %v68 = vld [vmem:[%s4 + $0x18] sm:$0xff]
    %v69 = vld [vmem:[%s5] sm:$0xff]
    %v70 = vld [vmem:[%s5 + $0x8] sm:$0xff]
    %v71 = vld [vmem:[%s5 + $0x10] sm:$0xff]
    %v72 = vld [vmem:[%s5 + $0x18] sm:$0xff]
    %v73 = vld [vmem:[%s0] sm:$0xff]
    %v74 = vld [vmem:[%s0 + $0x8] sm:$0xff]
    %v75 = vld [vmem:[%s0 + $0x10] sm:$0xff]
    %v76 = vld [vmem:[%s0 + $0x18] sm:$0xff]
    %v77 = vld [vmem:[%s1] sm:$0xff]
    %v78 = vld [vmem:[%s1 + $0x8] sm:$0xff]
    %v79 = vld [vmem:[%s1 + $0x10] sm:$0xff]
    %v80 = vld [vmem:[%s1 + $0x18] sm:$0xff]
    %82 = vset.pattern.permute.xlu0 0
    %83 = vperm.xlu0 %82, %v57
    %v84 = vpop.permute.xlu0 %83
    %87 = vset.pattern.permute.xlu0 0
    %88 = vperm.xlu0 %87, %v58
    %v89 = vpop.permute.xlu0 %88
    %92 = vset.pattern.permute.xlu0 0
    %93 = vperm.xlu0 %92, %v59
    %v94 = vpop.permute.xlu0 %93
    %97 = vset.pattern.permute.xlu0 0
    %98 = vperm.xlu0 %97, %v60
    %v99 = vpop.permute.xlu0 %98
    %v101 = vmul.f32 %v77, %v84
    %v102 = vmul.f32 %v78, %v89
    %v103 = vmul.f32 %v79, %v94
    %v104 = vmul.f32 %v80, %v99
    %v105 = vadd.f32 %v73, %v101
    %v106 = vadd.f32 %v74, %v102
    %v107 = vadd.f32 %v75, %v103
    %v108 = vadd.f32 %v76, %v104
    %v109 = vld [vmem:[%s6] sm:$0xff]
    %v110 = vld [vmem:[%s6 + $0x8] sm:$0xff]
    %v111 = vld [vmem:[%s6 + $0x10] sm:$0xff]
    %v112 = vld [vmem:[%s6 + $0x18] sm:$0xff]
    %v113 = vld [vmem:[%s7] sm:$0x1]
    %v115 = vlaneseq
    %v116 = vshrl.u32 %v115, 7
    %v117 = vsub.s32 0, %v116
    %v118 = vrot.slane %v113, %v117
    %vm120 = vcmask 261120
    %v122 = vsel %vm120, %v105, 0
    %v125 = vsel %vm120, %v106, 0
    %v128 = vsel %vm120, %v107, 0
    %v131 = vsel %vm120, %v108, 0
    %133 = vmatprep.subr.mxu0 0.0
    %134 = vmatpush1.msra.mxu0 %v109
    %135 = vmatprep.subr.mxu0 0.0
    %136 = vmatpush1.msra.mxu0 %v110
    %137 = vmatprep.subr.mxu0 0.0
    %138 = vmatpush1.msra.mxu0 %v111
    %139 = vmatprep.subr.mxu0 0.0
    %140 = vmatpush1.msra.mxu0 %v112
    %141 = vmatprep.subr.mxu0 0.0
    %142 = vmatpush1.msra.mxu0 0.0
    %143 = vmatprep.subr.mxu0 0.0
    %144 = vmatpush1.msra.mxu0 0.0
    %145 = vmatprep.subr.mxu0 0.0
    %146 = vmatpush1.msra.mxu0 0.0
    %147 = vmatprep.subr.mxu0 0.0
    %148 = vmatpush1.msra.mxu0 0.0
    %149 = vmatprep.subr.mxu0 0.0
    %150 = vmatpush1.msra.mxu0 0.0
    %151 = vmatprep.subr.mxu0 0.0
    %152 = vmatpush1.msra.mxu0 0.0
    %153 = vmatprep.subr.mxu0 0.0
    %154 = vmatpush1.msra.mxu0 0.0
    %155 = vmatprep.subr.mxu0 0.0
    %156 = vmatpush1.msra.mxu0 0.0
    %157 = vmatprep.subr.mxu0 0.0
    %158 = vmatpush1.msra.mxu0 0.0
    %159 = vmatprep.subr.mxu0 0.0
    %160 = vmatpush1.msra.mxu0 0.0
    %161 = vmatprep.subr.mxu0 0.0
    %162 = vmatpush1.msra.mxu0 0.0
    %163 = vmatprep.subr.mxu0 0.0
    %164 = vmatpush1.msra.mxu0 0.0
    %165 = vmatprep.subr.mxu0 0.0
    %166 = vmatpush1.msra.mxu0 0.0
    %167 = vmatprep.subr.mxu0 0.0
    %168 = vmatpush1.msra.mxu0 0.0
    %169 = vmatprep.subr.mxu0 0.0
    %170 = vmatpush1.msra.mxu0 0.0
    %171 = vmatprep.subr.mxu0 0.0
    %172 = vmatpush1.msra.mxu0 0.0
    %173 = vmatprep.subr.mxu0 0.0
    %174 = vmatpush1.msra.mxu0 0.0
    %175 = vmatprep.subr.mxu0 0.0
    %176 = vmatpush1.msra.mxu0 0.0
    %177 = vmatprep.subr.mxu0 0.0
    %178 = vmatpush1.msra.mxu0 0.0
    %179 = vmatprep.subr.mxu0 0.0
    %180 = vmatpush1.msra.mxu0 0.0
    %181 = vmatprep.subr.mxu0 0.0
    %182 = vmatpush1.msra.mxu0 0.0
    %183 = vmatprep.subr.mxu0 0.0
    %184 = vmatpush1.msra.mxu0 0.0
    %185 = vmatprep.subr.mxu0 0.0
    %186 = vmatpush1.msra.mxu0 0.0
    %187 = vmatprep.subr.mxu0 0.0
    %188 = vmatpush1.msra.mxu0 0.0
    %189 = vmatprep.subr.mxu0 0.0
    %190 = vmatpush1.msra.mxu0 0.0
    %191 = vmatprep.subr.mxu0 0.0
    %192 = vmatpush1.msra.mxu0 0.0
    %193 = vmatprep.subr.mxu0 0.0
    %194 = vmatpush1.msra.mxu0 0.0
    %195 = vmatprep.subr.mxu0 0.0
    %196 = vmatpush1.msra.mxu0 0.0
    %197 = vmatprep.mubr.f32.mxu0 0.0
    %198 = vmatmul.mubr.f32.gmra.mrb[0].mxu0 %v122
    %v199 = vpop.f32.mrb[0].mxu0
    %v200 = vadd.f32 %v118, %v199
    %v201 = vpop.f32.mrb[0].mxu0
    %202 = vmatprep.mubr.f32.mxu0 0.0
    %203 = vmatmul.mubr.f32.gmra.mrb[0].mxu0 %v125
    %v204 = vpop.f32.mrb[0].mxu0
    %v205 = vadd.f32 %v118, %v204
    %v206 = vpop.f32.mrb[0].mxu0
    %207 = vmatprep.mubr.f32.mxu0 0.0
    %208 = vmatmul.mubr.f32.gmra.mrb[0].mxu0 %v128
    %v209 = vpop.f32.mrb[0].mxu0
    %v210 = vadd.f32 %v118, %v209
    %v211 = vpop.f32.mrb[0].mxu0
    %212 = vmatprep.mubr.f32.mxu0 0.0
    %213 = vmatmul.mubr.f32.gmra.mrb[0].mxu0 %v131
    %v214 = vpop.f32.mrb[0].mxu0
    %v215 = vadd.f32 %v118, %v214
    %v216 = vpop.f32.mrb[0].mxu0
    %217 = vdwg.mxu0
    %222 = vrot.lane.b32.xlu0 %v200, 96
    %v223 = vpop.permute.xlu0 %222
    %224 = vrot.lane.b32.xlu0 %v205, 96
    %v225 = vpop.permute.xlu0 %224
    %226 = vrot.lane.b32.xlu0 %v210, 96
    %v227 = vpop.permute.xlu0 %226
    %228 = vrot.lane.b32.xlu0 %v215, 96
    %v229 = vpop.permute.xlu0 %228
    %vm230 = vcmask 130048
    %v231 = vsel %vm230, %v200, 0
    %v233 = vsel %vm230, %v205, 0
    %v235 = vsel %vm230, %v210, 0
    %v237 = vsel %vm230, %v215, 0
    %v239 = vsel %vm230, %v223, 0
    %v241 = vsel %vm230, %v225, 0
    %v243 = vsel %vm230, %v227, 0
    %v245 = vsel %vm230, %v229, 0
    %247 = vmatprep.subr.mxu0 0.0
    %248 = vmatpush1.xpose.msra.mxu0 %v239
    %249 = vmatprep.subr.mxu0 0.0
    %250 = vmatpush1.xpose.msra.mxu0 %v241
    %251 = vmatprep.subr.mxu0 0.0
    %252 = vmatpush1.xpose.msra.mxu0 %v243
    %253 = vmatprep.subr.mxu0 0.0
    %254 = vmatpush1.xpose.msra.mxu0 %v245
    %255 = vmatprep.subr.mxu0 0.0
    %256 = vmatpush1.xpose.msra.mxu0 0.0
    %257 = vmatprep.subr.mxu0 0.0
    %258 = vmatpush1.xpose.msra.mxu0 0.0
    %259 = vmatprep.subr.mxu0 0.0
    %260 = vmatpush1.xpose.msra.mxu0 0.0
    %261 = vmatprep.subr.mxu0 0.0
    %262 = vmatpush1.xpose.msra.mxu0 0.0
    %263 = vmatprep.subr.mxu0 0.0
    %264 = vmatpush1.xpose.msra.mxu0 0.0
    %265 = vmatprep.subr.mxu0 0.0
    %266 = vmatpush1.xpose.msra.mxu0 0.0
    %267 = vmatprep.subr.mxu0 0.0
    %268 = vmatpush1.xpose.msra.mxu0 0.0
    %269 = vmatprep.subr.mxu0 0.0
    %270 = vmatpush1.xpose.msra.mxu0 0.0
    %271 = vmatprep.subr.mxu0 0.0
    %272 = vmatpush1.xpose.msra.mxu0 0.0
    %273 = vmatprep.subr.mxu0 0.0
    %274 = vmatpush1.xpose.msra.mxu0 0.0
    %275 = vmatprep.subr.mxu0 0.0
    %276 = vmatpush1.xpose.msra.mxu0 0.0
    %277 = vmatprep.subr.mxu0 0.0
    %278 = vmatpush1.xpose.msra.mxu0 0.0
    %279 = vmatprep.subr.mxu0 0.0
    %280 = vmatpush1.xpose.msra.mxu0 0.0
    %281 = vmatprep.subr.mxu0 0.0
    %282 = vmatpush1.xpose.msra.mxu0 0.0
    %283 = vmatprep.subr.mxu0 0.0
    %284 = vmatpush1.xpose.msra.mxu0 0.0
    %285 = vmatprep.subr.mxu0 0.0
    %286 = vmatpush1.xpose.msra.mxu0 0.0
    %287 = vmatprep.subr.mxu0 0.0
    %288 = vmatpush1.xpose.msra.mxu0 0.0
    %289 = vmatprep.subr.mxu0 0.0
    %290 = vmatpush1.xpose.msra.mxu0 0.0
    %291 = vmatprep.subr.mxu0 0.0
    %292 = vmatpush1.xpose.msra.mxu0 0.0
    %293 = vmatprep.subr.mxu0 0.0
    %294 = vmatpush1.xpose.msra.mxu0 0.0
    %295 = vmatprep.subr.mxu0 0.0
    %296 = vmatpush1.xpose.msra.mxu0 0.0
    %297 = vmatprep.subr.mxu0 0.0
    %298 = vmatpush1.xpose.msra.mxu0 0.0
    %299 = vmatprep.subr.mxu0 0.0
    %300 = vmatpush1.xpose.msra.mxu0 0.0
    %301 = vmatprep.subr.mxu0 0.0
    %302 = vmatpush1.xpose.msra.mxu0 0.0
    %303 = vmatprep.subr.mxu0 0.0
    %304 = vmatpush1.xpose.msra.mxu0 0.0
    %305 = vmatprep.subr.mxu0 0.0
    %306 = vmatpush1.xpose.msra.mxu0 0.0
    %307 = vmatprep.subr.mxu0 0.0
    %308 = vmatpush1.xpose.msra.mxu0 0.0
    %309 = vmatprep.subr.mxu0 0.0
    %310 = vmatpush1.xpose.msra.mxu0 0.0
    %311 = vmatprep.mubr.f32.mxu0 0.0
    %312 = vmatmul.mubr.f32.gmra.mrb[0].mxu0 %v231
    %v313 = vpop.f32.mrb[0].mxu0
    %v314 = vadd.f32 0.0, %v313
    %v315 = vpop.f32.mrb[0].mxu0
    %316 = vmatprep.mubr.f32.mxu0 0.0
    %317 = vmatmul.mubr.f32.gmra.mrb[0].mxu0 %v233
    %v318 = vpop.f32.mrb[0].mxu0
    %v319 = vadd.f32 0.0, %v318
    %v320 = vpop.f32.mrb[0].mxu0
    %321 = vmatprep.mubr.f32.mxu0 0.0
    %322 = vmatmul.mubr.f32.gmra.mrb[0].mxu0 %v235
    %v323 = vpop.f32.mrb[0].mxu0
    %v324 = vadd.f32 0.0, %v323
    %v325 = vpop.f32.mrb[0].mxu0
    %326 = vmatprep.mubr.f32.mxu0 0.0
    %327 = vmatmul.mubr.f32.gmra.mrb[0].mxu0 %v237
    %v328 = vpop.f32.mrb[0].mxu0
    %v329 = vadd.f32 0.0, %v328
    %v330 = vpop.f32.mrb[0].mxu0
    %331 = vdwg.mxu0
    %v332 = vmul.f32 %v314, 0.25
    %v333 = vmul.f32 %v319, 0.25
    %v334 = vmul.f32 %v324, 0.25
    %v335 = vmul.f32 %v329, 0.25
    %v336 = vadd.f32 %v332, %v61
    %v337 = vadd.f32 %v333, %v62
    %v338 = vadd.f32 %v334, %v63
    %v339 = vadd.f32 %v335, %v64
    %v340 = vsel %vm120, %v336, -inf
    %341 = vmax.xlane.f32.xlu0 %v340
    %v342 = vpop.xlane.xlu0 %341
    %v343 = vsel %vm120, %v337, -inf
    %344 = vmax.xlane.f32.xlu0 %v343
    %v345 = vpop.xlane.xlu0 %344
    %v346 = vsel %vm120, %v338, -inf
    %347 = vmax.xlane.f32.xlu0 %v346
    %v348 = vpop.xlane.xlu0 %347
    %v349 = vsel %vm120, %v339, -inf
    %350 = vmax.xlane.f32.xlu0 %v349
    %v351 = vpop.xlane.xlu0 %350
    %v352 = vsub.f32 %v336, %v342
    %v353 = vsub.f32 %v337, %v345
    %v354 = vsub.f32 %v338, %v348
    %v355 = vsub.f32 %v339, %v351
    %v356 = vmul.f32 %v352, 1.442695
    %v357 = vpow.pop %v356
    %v358 = vmul.f32 %v353, 1.442695
    %v359 = vpow.pop %v358
    %v360 = vmul.f32 %v354, 1.442695
    %v361 = vpow.pop %v360
    %v362 = vmul.f32 %v355, 1.442695
    %v363 = vpow.pop %v362
    %v364 = vsel %vm120, %v357, 0.0
    %365 = vadd.xlane.f32.xlu0 %v364
    %v366 = vpop.xlane.xlu0 %365
    %v367 = vsel %vm120, %v359, 0.0
    %368 = vadd.xlane.f32.xlu0 %v367
    %v369 = vpop.xlane.xlu0 %368
    %v370 = vsel %vm120, %v361, 0.0
    %371 = vadd.xlane.f32.xlu0 %v370
    %v372 = vpop.xlane.xlu0 %371
    %v373 = vsel %vm120, %v363, 0.0
    %374 = vadd.xlane.f32.xlu0 %v373
    %v375 = vpop.xlane.xlu0 %374
    %v376 = vrcp.pop %v366
    %v377 = vrcp.pop %v369
    %v378 = vrcp.pop %v372
    %v379 = vrcp.pop %v375
    %v380 = vmul.f32 %v357, %v376
    %v381 = vmul.f32 %v359, %v377
    %v382 = vmul.f32 %v361, %v378
    %v383 = vmul.f32 %v363, %v379
    %384 = vrot.lane.b32.xlu0 %v200, 64
    %v385 = vpop.permute.xlu0 %384
    %386 = vrot.lane.b32.xlu0 %v205, 64
    %v387 = vpop.permute.xlu0 %386
    %388 = vrot.lane.b32.xlu0 %v210, 64
    %v389 = vpop.permute.xlu0 %388
    %390 = vrot.lane.b32.xlu0 %v215, 64
    %v391 = vpop.permute.xlu0 %390
    %v397 = vsel %vm120, %v380, 0
    %v400 = vsel %vm120, %v381, 0
    %v403 = vsel %vm120, %v382, 0
    %v406 = vsel %vm120, %v383, 0
    %408 = vmatprep.subr.mxu0 0.0
    %409 = vmatpush1.msra.mxu0 %v385
    %410 = vmatprep.subr.mxu0 0.0
    %411 = vmatpush1.msra.mxu0 %v387
    %412 = vmatprep.subr.mxu0 0.0
    %413 = vmatpush1.msra.mxu0 %v389
    %414 = vmatprep.subr.mxu0 0.0
    %415 = vmatpush1.msra.mxu0 %v391
    %416 = vmatprep.subr.mxu0 0.0
    %417 = vmatpush1.msra.mxu0 0.0
    %418 = vmatprep.subr.mxu0 0.0
    %419 = vmatpush1.msra.mxu0 0.0
    %420 = vmatprep.subr.mxu0 0.0
    %421 = vmatpush1.msra.mxu0 0.0
    %422 = vmatprep.subr.mxu0 0.0
    %423 = vmatpush1.msra.mxu0 0.0
    %424 = vmatprep.subr.mxu0 0.0
    %425 = vmatpush1.msra.mxu0 0.0
    %426 = vmatprep.subr.mxu0 0.0
    %427 = vmatpush1.msra.mxu0 0.0
    %428 = vmatprep.subr.mxu0 0.0
    %429 = vmatpush1.msra.mxu0 0.0
    %430 = vmatprep.subr.mxu0 0.0
    %431 = vmatpush1.msra.mxu0 0.0
    %432 = vmatprep.subr.mxu0 0.0
    %433 = vmatpush1.msra.mxu0 0.0
    %434 = vmatprep.subr.mxu0 0.0
    %435 = vmatpush1.msra.mxu0 0.0
    %436 = vmatprep.subr.mxu0 0.0
    %437 = vmatpush1.msra.mxu0 0.0
    %438 = vmatprep.subr.mxu0 0.0
    %439 = vmatpush1.msra.mxu0 0.0
    %440 = vmatprep.subr.mxu0 0.0
    %441 = vmatpush1.msra.mxu0 0.0
    %442 = vmatprep.subr.mxu0 0.0
    %443 = vmatpush1.msra.mxu0 0.0
    %444 = vmatprep.subr.mxu0 0.0
    %445 = vmatpush1.msra.mxu0 0.0
    %446 = vmatprep.subr.mxu0 0.0
    %447 = vmatpush1.msra.mxu0 0.0
    %448 = vmatprep.subr.mxu0 0.0
    %449 = vmatpush1.msra.mxu0 0.0
    %450 = vmatprep.subr.mxu0 0.0
    %451 = vmatpush1.msra.mxu0 0.0
    %452 = vmatprep.subr.mxu0 0.0
    %453 = vmatpush1.msra.mxu0 0.0
    %454 = vmatprep.subr.mxu0 0.0
    %455 = vmatpush1.msra.mxu0 0.0
    %456 = vmatprep.subr.mxu0 0.0
    %457 = vmatpush1.msra.mxu0 0.0
    %458 = vmatprep.subr.mxu0 0.0
    %459 = vmatpush1.msra.mxu0 0.0
    %460 = vmatprep.subr.mxu0 0.0
    %461 = vmatpush1.msra.mxu0 0.0
    %462 = vmatprep.subr.mxu0 0.0
    %463 = vmatpush1.msra.mxu0 0.0
    %464 = vmatprep.subr.mxu0 0.0
    %465 = vmatpush1.msra.mxu0 0.0
    %466 = vmatprep.subr.mxu0 0.0
    %467 = vmatpush1.msra.mxu0 0.0
    %468 = vmatprep.subr.mxu0 0.0
    %469 = vmatpush1.msra.mxu0 0.0
    %470 = vmatprep.subr.mxu0 0.0
    %471 = vmatpush1.msra.mxu0 0.0
    %472 = vmatprep.mubr.f32.mxu0 0.0
    %473 = vmatmul.mubr.f32.gmra.mrb[0].mxu0 %v397
    %v474 = vpop.f32.mrb[0].mxu0
    %v475 = vadd.f32 0.0, %v474
    %v476 = vpop.f32.mrb[0].mxu0
    %477 = vmatprep.mubr.f32.mxu0 0.0
    %478 = vmatmul.mubr.f32.gmra.mrb[0].mxu0 %v400
    %v479 = vpop.f32.mrb[0].mxu0
    %v480 = vadd.f32 0.0, %v479
    %v481 = vpop.f32.mrb[0].mxu0
    %482 = vmatprep.mubr.f32.mxu0 0.0
    %483 = vmatmul.mubr.f32.gmra.mrb[0].mxu0 %v403
    %v484 = vpop.f32.mrb[0].mxu0
    %v485 = vadd.f32 0.0, %v484
    %v486 = vpop.f32.mrb[0].mxu0
    %487 = vmatprep.mubr.f32.mxu0 0.0
    %488 = vmatmul.mubr.f32.gmra.mrb[0].mxu0 %v406
    %v489 = vpop.f32.mrb[0].mxu0
    %v490 = vadd.f32 0.0, %v489
    %v491 = vpop.f32.mrb[0].mxu0
    %492 = vdwg.mxu0
    %493 = vrot.lane.b32.xlu0 %v200, 112
    %v494 = vpop.permute.xlu0 %493
    %495 = vrot.lane.b32.xlu0 %v205, 112
    %v496 = vpop.permute.xlu0 %495
    %497 = vrot.lane.b32.xlu0 %v210, 112
    %v498 = vpop.permute.xlu0 %497
    %499 = vrot.lane.b32.xlu0 %v215, 112
    %v500 = vpop.permute.xlu0 %499
    %501 = vrot.lane.b32.xlu0 %v200, 80
    %v502 = vpop.permute.xlu0 %501
    %503 = vrot.lane.b32.xlu0 %v205, 80
    %v504 = vpop.permute.xlu0 %503
    %505 = vrot.lane.b32.xlu0 %v210, 80
    %v506 = vpop.permute.xlu0 %505
    %507 = vrot.lane.b32.xlu0 %v215, 80
    %v508 = vpop.permute.xlu0 %507
    %v509 = vsel %vm230, %v494, 0
    %v511 = vsel %vm230, %v496, 0
    %v513 = vsel %vm230, %v498, 0
    %v515 = vsel %vm230, %v500, 0
    %v517 = vsel %vm230, %v502, 0
    %v519 = vsel %vm230, %v504, 0
    %v521 = vsel %vm230, %v506, 0
    %v523 = vsel %vm230, %v508, 0
    %525 = vmatprep.subr.mxu0 0.0
    %526 = vmatpush1.xpose.msra.mxu0 %v517
    %527 = vmatprep.subr.mxu0 0.0
    %528 = vmatpush1.xpose.msra.mxu0 %v519
    %529 = vmatprep.subr.mxu0 0.0
    %530 = vmatpush1.xpose.msra.mxu0 %v521
    %531 = vmatprep.subr.mxu0 0.0
    %532 = vmatpush1.xpose.msra.mxu0 %v523
    %533 = vmatprep.subr.mxu0 0.0
    %534 = vmatpush1.xpose.msra.mxu0 0.0
    %535 = vmatprep.subr.mxu0 0.0
    %536 = vmatpush1.xpose.msra.mxu0 0.0
    %537 = vmatprep.subr.mxu0 0.0
    %538 = vmatpush1.xpose.msra.mxu0 0.0
    %539 = vmatprep.subr.mxu0 0.0
    %540 = vmatpush1.xpose.msra.mxu0 0.0
    %541 = vmatprep.subr.mxu0 0.0
    %542 = vmatpush1.xpose.msra.mxu0 0.0
    %543 = vmatprep.subr.mxu0 0.0
    %544 = vmatpush1.xpose.msra.mxu0 0.0
    %545 = vmatprep.subr.mxu0 0.0
    %546 = vmatpush1.xpose.msra.mxu0 0.0
    %547 = vmatprep.subr.mxu0 0.0
    %548 = vmatpush1.xpose.msra.mxu0 0.0
    %549 = vmatprep.subr.mxu0 0.0
    %550 = vmatpush1.xpose.msra.mxu0 0.0
    %551 = vmatprep.subr.mxu0 0.0
    %552 = vmatpush1.xpose.msra.mxu0 0.0
    %553 = vmatprep.subr.mxu0 0.0
    %554 = vmatpush1.xpose.msra.mxu0 0.0
    %555 = vmatprep.subr.mxu0 0.0
    %556 = vmatpush1.xpose.msra.mxu0 0.0
    %557 = vmatprep.subr.mxu0 0.0
    %558 = vmatpush1.xpose.msra.mxu0 0.0
    %559 = vmatprep.subr.mxu0 0.0
    %560 = vmatpush1.xpose.msra.mxu0 0.0
    %561 = vmatprep.subr.mxu0 0.0
    %562 = vmatpush1.xpose.msra.mxu0 0.0
    %563 = vmatprep.subr.mxu0 0.0
    %564 = vmatpush1.xpose.msra.mxu0 0.0
    %565 = vmatprep.subr.mxu0 0.0
    %566 = vmatpush1.xpose.msra.mxu0 0.0
    %567 = vmatprep.subr.mxu0 0.0
    %568 = vmatpush1.xpose.msra.mxu0 0.0
    %569 = vmatprep.subr.mxu0 0.0
    %570 = vmatpush1.xpose.msra.mxu0 0.0
    %571 = vmatprep.subr.mxu0 0.0
    %572 = vmatpush1.xpose.msra.mxu0 0.0
    %573 = vmatprep.subr.mxu0 0.0
    %574 = vmatpush1.xpose.msra.mxu0 0.0
    %575 = vmatprep.subr.mxu0 0.0
    %576 = vmatpush1.xpose.msra.mxu0 0.0
    %577 = vmatprep.subr.mxu0 0.0
    %578 = vmatpush1.xpose.msra.mxu0 0.0
    %579 = vmatprep.subr.mxu0 0.0
    %580 = vmatpush1.xpose.msra.mxu0 0.0
    %581 = vmatprep.subr.mxu0 0.0
    %582 = vmatpush1.xpose.msra.mxu0 0.0
    %583 = vmatprep.subr.mxu0 0.0
    %584 = vmatpush1.xpose.msra.mxu0 0.0
    %585 = vmatprep.subr.mxu0 0.0
    %586 = vmatpush1.xpose.msra.mxu0 0.0
    %587 = vmatprep.subr.mxu0 0.0
    %588 = vmatpush1.xpose.msra.mxu0 0.0
    %589 = vmatprep.mubr.f32.mxu0 0.0
    %590 = vmatmul.mubr.f32.gmra.mrb[0].mxu0 %v509
    %v591 = vpop.f32.mrb[0].mxu0
    %v592 = vadd.f32 0.0, %v591
    %v593 = vpop.f32.mrb[0].mxu0
    %594 = vmatprep.mubr.f32.mxu0 0.0
    %595 = vmatmul.mubr.f32.gmra.mrb[0].mxu0 %v511
    %v596 = vpop.f32.mrb[0].mxu0
    %v597 = vadd.f32 0.0, %v596
    %v598 = vpop.f32.mrb[0].mxu0
    %599 = vmatprep.mubr.f32.mxu0 0.0
    %600 = vmatmul.mubr.f32.gmra.mrb[0].mxu0 %v513
    %v601 = vpop.f32.mrb[0].mxu0
    %v602 = vadd.f32 0.0, %v601
    %v603 = vpop.f32.mrb[0].mxu0
    %604 = vmatprep.mubr.f32.mxu0 0.0
    %605 = vmatmul.mubr.f32.gmra.mrb[0].mxu0 %v515
    %v606 = vpop.f32.mrb[0].mxu0
    %v607 = vadd.f32 0.0, %v606
    %v608 = vpop.f32.mrb[0].mxu0
    %609 = vdwg.mxu0
    %v610 = vmul.f32 %v592, 0.25
    %v611 = vmul.f32 %v597, 0.25
    %v612 = vmul.f32 %v602, 0.25
    %v613 = vmul.f32 %v607, 0.25
    %v614 = vadd.f32 %v610, %v61
    %v615 = vadd.f32 %v611, %v62
    %v616 = vadd.f32 %v612, %v63
    %v617 = vadd.f32 %v613, %v64
    %v618 = vsel %vm120, %v614, -inf
    %619 = vmax.xlane.f32.xlu0 %v618
    %v620 = vpop.xlane.xlu0 %619
    %v621 = vsel %vm120, %v615, -inf
    %622 = vmax.xlane.f32.xlu0 %v621
    %v623 = vpop.xlane.xlu0 %622
    %v624 = vsel %vm120, %v616, -inf
    %625 = vmax.xlane.f32.xlu0 %v624
    %v626 = vpop.xlane.xlu0 %625
    %v627 = vsel %vm120, %v617, -inf
    %628 = vmax.xlane.f32.xlu0 %v627
    %v629 = vpop.xlane.xlu0 %628
    %v630 = vsub.f32 %v614, %v620
    %v631 = vsub.f32 %v615, %v623
    %v632 = vsub.f32 %v616, %v626
    %v633 = vsub.f32 %v617, %v629
    %v634 = vmul.f32 %v630, 1.442695
    %v635 = vpow.pop %v634
    %v636 = vmul.f32 %v631, 1.442695
    %v637 = vpow.pop %v636
    %v638 = vmul.f32 %v632, 1.442695
    %v639 = vpow.pop %v638
    %v640 = vmul.f32 %v633, 1.442695
    %v641 = vpow.pop %v640
    %v642 = vsel %vm120, %v635, 0.0
    %643 = vadd.xlane.f32.xlu0 %v642
    %v644 = vpop.xlane.xlu0 %643
    %v645 = vsel %vm120, %v637, 0.0
    %646 = vadd.xlane.f32.xlu0 %v645
    %v647 = vpop.xlane.xlu0 %646
    %v648 = vsel %vm120, %v639, 0.0
    %649 = vadd.xlane.f32.xlu0 %v648
    %v650 = vpop.xlane.xlu0 %649
    %v651 = vsel %vm120, %v641, 0.0
    %652 = vadd.xlane.f32.xlu0 %v651
    %v653 = vpop.xlane.xlu0 %652
    %v654 = vrcp.pop %v644
    %v655 = vrcp.pop %v647
    %v656 = vrcp.pop %v650
    %v657 = vrcp.pop %v653
    %v658 = vmul.f32 %v635, %v654
    %v659 = vmul.f32 %v637, %v655
    %v660 = vmul.f32 %v639, %v656
    %v661 = vmul.f32 %v641, %v657
    %662 = vrot.lane.b32.xlu0 %v200, 48
    %v663 = vpop.permute.xlu0 %662
    %664 = vrot.lane.b32.xlu0 %v205, 48
    %v665 = vpop.permute.xlu0 %664
    %666 = vrot.lane.b32.xlu0 %v210, 48
    %v667 = vpop.permute.xlu0 %666
    %668 = vrot.lane.b32.xlu0 %v215, 48
    %v669 = vpop.permute.xlu0 %668
    %v675 = vsel %vm120, %v658, 0
    %v678 = vsel %vm120, %v659, 0
    %v681 = vsel %vm120, %v660, 0
    %v684 = vsel %vm120, %v661, 0
    %686 = vmatprep.subr.mxu0 0.0
    %687 = vmatpush1.msra.mxu0 %v663
    %688 = vmatprep.subr.mxu0 0.0
    %689 = vmatpush1.msra.mxu0 %v665
    %690 = vmatprep.subr.mxu0 0.0
    %691 = vmatpush1.msra.mxu0 %v667
    %692 = vmatprep.subr.mxu0 0.0
    %693 = vmatpush1.msra.mxu0 %v669
    %694 = vmatprep.subr.mxu0 0.0
    %695 = vmatpush1.msra.mxu0 0.0
    %696 = vmatprep.subr.mxu0 0.0
    %697 = vmatpush1.msra.mxu0 0.0
    %698 = vmatprep.subr.mxu0 0.0
    %699 = vmatpush1.msra.mxu0 0.0
    %700 = vmatprep.subr.mxu0 0.0
    %701 = vmatpush1.msra.mxu0 0.0
    %702 = vmatprep.subr.mxu0 0.0
    %703 = vmatpush1.msra.mxu0 0.0
    %704 = vmatprep.subr.mxu0 0.0
    %705 = vmatpush1.msra.mxu0 0.0
    %706 = vmatprep.subr.mxu0 0.0
    %707 = vmatpush1.msra.mxu0 0.0
    %708 = vmatprep.subr.mxu0 0.0
    %709 = vmatpush1.msra.mxu0 0.0
    %710 = vmatprep.subr.mxu0 0.0
    %711 = vmatpush1.msra.mxu0 0.0
    %712 = vmatprep.subr.mxu0 0.0
    %713 = vmatpush1.msra.mxu0 0.0
    %714 = vmatprep.subr.mxu0 0.0
    %715 = vmatpush1.msra.mxu0 0.0
    %716 = vmatprep.subr.mxu0 0.0
    %717 = vmatpush1.msra.mxu0 0.0
    %718 = vmatprep.subr.mxu0 0.0
    %719 = vmatpush1.msra.mxu0 0.0
    %720 = vmatprep.subr.mxu0 0.0
    %721 = vmatpush1.msra.mxu0 0.0
    %722 = vmatprep.subr.mxu0 0.0
    %723 = vmatpush1.msra.mxu0 0.0
    %724 = vmatprep.subr.mxu0 0.0
    %725 = vmatpush1.msra.mxu0 0.0
    %726 = vmatprep.subr.mxu0 0.0
    %727 = vmatpush1.msra.mxu0 0.0
    %728 = vmatprep.subr.mxu0 0.0
    %729 = vmatpush1.msra.mxu0 0.0
    %730 = vmatprep.subr.mxu0 0.0
    %731 = vmatpush1.msra.mxu0 0.0
    %732 = vmatprep.subr.mxu0 0.0
    %733 = vmatpush1.msra.mxu0 0.0
    %734 = vmatprep.subr.mxu0 0.0
    %735 = vmatpush1.msra.mxu0 0.0
    %736 = vmatprep.subr.mxu0 0.0
    %737 = vmatpush1.msra.mxu0 0.0
    %738 = vmatprep.subr.mxu0 0.0
    %739 = vmatpush1.msra.mxu0 0.0
    %740 = vmatprep.subr.mxu0 0.0
    %741 = vmatpush1.msra.mxu0 0.0
    %742 = vmatprep.subr.mxu0 0.0
    %743 = vmatpush1.msra.mxu0 0.0
    %744 = vmatprep.subr.mxu0 0.0
    %745 = vmatpush1.msra.mxu0 0.0
    %746 = vmatprep.subr.mxu0 0.0
    %747 = vmatpush1.msra.mxu0 0.0
    %748 = vmatprep.subr.mxu0 0.0
    %749 = vmatpush1.msra.mxu0 0.0
    %750 = vmatprep.mubr.f32.mxu0 0.0
    %751 = vmatmul.mubr.f32.gmra.mrb[0].mxu0 %v675
    %v752 = vpop.f32.mrb[0].mxu0
    %v753 = vadd.f32 0.0, %v752
    %v754 = vpop.f32.mrb[0].mxu0
    %755 = vmatprep.mubr.f32.mxu0 0.0
    %756 = vmatmul.mubr.f32.gmra.mrb[0].mxu0 %v678
    %v757 = vpop.f32.mrb[0].mxu0
    %v758 = vadd.f32 0.0, %v757
    %v759 = vpop.f32.mrb[0].mxu0
    %760 = vmatprep.mubr.f32.mxu0 0.0
    %761 = vmatmul.mubr.f32.gmra.mrb[0].mxu0 %v681
    %v762 = vpop.f32.mrb[0].mxu0
    %v763 = vadd.f32 0.0, %v762
    %v764 = vpop.f32.mrb[0].mxu0
    %765 = vmatprep.mubr.f32.mxu0 0.0
    %766 = vmatmul.mubr.f32.gmra.mrb[0].mxu0 %v684
    %v767 = vpop.f32.mrb[0].mxu0
    %v768 = vadd.f32 0.0, %v767
    %v769 = vpop.f32.mrb[0].mxu0
    %770 = vdwg.mxu0
    %775 = vrot.lane.b32.xlu0 %v753, 16
    %v776 = vpop.permute.xlu0 %775
    %777 = vrot.lane.b32.xlu0 %v758, 16
    %v778 = vpop.permute.xlu0 %777
    %779 = vrot.lane.b32.xlu0 %v763, 16
    %v780 = vpop.permute.xlu0 %779
    %781 = vrot.lane.b32.xlu0 %v768, 16
    %v782 = vpop.permute.xlu0 %781
    %v787 = vsel %vm230, %v475, %v776
    %v788 = vsel %vm230, %v480, %v778
    %v789 = vsel %vm230, %v485, %v780
    %v790 = vsel %vm230, %v490, %v782
    %v791 = vld [vmem:[%s8] sm:$0xff]
    %v792 = vld [vmem:[%s8 + $0x8] sm:$0xff]
    %v793 = vld [vmem:[%s8 + $0x10] sm:$0xff]
    %v794 = vld [vmem:[%s8 + $0x18] sm:$0xff]
    %v796 = vsel %vm120, %v787, 0
    %v799 = vsel %vm120, %v788, 0
    %v802 = vsel %vm120, %v789, 0
    %v805 = vsel %vm120, %v790, 0
    %807 = vmatprep.subr.mxu0 0.0
    %808 = vmatpush1.msra.mxu0 %v791
    %809 = vmatprep.subr.mxu0 0.0
    %810 = vmatpush1.msra.mxu0 %v792
    %811 = vmatprep.subr.mxu0 0.0
    %812 = vmatpush1.msra.mxu0 %v793
    %813 = vmatprep.subr.mxu0 0.0
    %814 = vmatpush1.msra.mxu0 %v794
    %815 = vmatprep.subr.mxu0 0.0
    %816 = vmatpush1.msra.mxu0 0.0
    %817 = vmatprep.subr.mxu0 0.0
    %818 = vmatpush1.msra.mxu0 0.0
    %819 = vmatprep.subr.mxu0 0.0
    %820 = vmatpush1.msra.mxu0 0.0
    %821 = vmatprep.subr.mxu0 0.0
    %822 = vmatpush1.msra.mxu0 0.0
    %823 = vmatprep.subr.mxu0 0.0
    %824 = vmatpush1.msra.mxu0 0.0
    %825 = vmatprep.subr.mxu0 0.0
    %826 = vmatpush1.msra.mxu0 0.0
    %827 = vmatprep.subr.mxu0 0.0
    %828 = vmatpush1.msra.mxu0 0.0
    %829 = vmatprep.subr.mxu0 0.0
    %830 = vmatpush1.msra.mxu0 0.0
    %831 = vmatprep.subr.mxu0 0.0
    %832 = vmatpush1.msra.mxu0 0.0
    %833 = vmatprep.subr.mxu0 0.0
    %834 = vmatpush1.msra.mxu0 0.0
    %835 = vmatprep.subr.mxu0 0.0
    %836 = vmatpush1.msra.mxu0 0.0
    %837 = vmatprep.subr.mxu0 0.0
    %838 = vmatpush1.msra.mxu0 0.0
    %839 = vmatprep.subr.mxu0 0.0
    %840 = vmatpush1.msra.mxu0 0.0
    %841 = vmatprep.subr.mxu0 0.0
    %842 = vmatpush1.msra.mxu0 0.0
    %843 = vmatprep.subr.mxu0 0.0
    %844 = vmatpush1.msra.mxu0 0.0
    %845 = vmatprep.subr.mxu0 0.0
    %846 = vmatpush1.msra.mxu0 0.0
    %847 = vmatprep.subr.mxu0 0.0
    %848 = vmatpush1.msra.mxu0 0.0
    %849 = vmatprep.subr.mxu0 0.0
    %850 = vmatpush1.msra.mxu0 0.0
    %851 = vmatprep.subr.mxu0 0.0
    %852 = vmatpush1.msra.mxu0 0.0
    %853 = vmatprep.subr.mxu0 0.0
    %854 = vmatpush1.msra.mxu0 0.0
    %855 = vmatprep.subr.mxu0 0.0
    %856 = vmatpush1.msra.mxu0 0.0
    %857 = vmatprep.subr.mxu0 0.0
    %858 = vmatpush1.msra.mxu0 0.0
    %859 = vmatprep.subr.mxu0 0.0
    %860 = vmatpush1.msra.mxu0 0.0
    %861 = vmatprep.subr.mxu0 0.0
    %862 = vmatpush1.msra.mxu0 0.0
    %863 = vmatprep.subr.mxu0 0.0
    %864 = vmatpush1.msra.mxu0 0.0
    %865 = vmatprep.subr.mxu0 0.0
    %866 = vmatpush1.msra.mxu0 0.0
    %867 = vmatprep.subr.mxu0 0.0
    %868 = vmatpush1.msra.mxu0 0.0
    %869 = vmatprep.subr.mxu0 0.0
    %870 = vmatpush1.msra.mxu0 0.0
    %871 = vmatprep.mubr.f32.mxu0 0.0
    %872 = vmatmul.mubr.f32.gmra.mrb[0].mxu0 %v796
    %v873 = vpop.f32.mrb[0].mxu0
    %v874 = vadd.f32 0.0, %v873
    %v875 = vpop.f32.mrb[0].mxu0
    %876 = vmatprep.mubr.f32.mxu0 0.0
    %877 = vmatmul.mubr.f32.gmra.mrb[0].mxu0 %v799
    %v878 = vpop.f32.mrb[0].mxu0
    %v879 = vadd.f32 0.0, %v878
    %v880 = vpop.f32.mrb[0].mxu0
    %881 = vmatprep.mubr.f32.mxu0 0.0
    %882 = vmatmul.mubr.f32.gmra.mrb[0].mxu0 %v802
    %v883 = vpop.f32.mrb[0].mxu0
    %v884 = vadd.f32 0.0, %v883
    %v885 = vpop.f32.mrb[0].mxu0
    %886 = vmatprep.mubr.f32.mxu0 0.0
    %887 = vmatmul.mubr.f32.gmra.mrb[0].mxu0 %v805
    %v888 = vpop.f32.mrb[0].mxu0
    %v889 = vadd.f32 0.0, %v888
    %v890 = vpop.f32.mrb[0].mxu0
    %891 = vdwg.mxu0
    %v892 = vadd.f32 %v105, %v874
    %v893 = vadd.f32 %v106, %v879
    %v894 = vadd.f32 %v107, %v884
    %v895 = vadd.f32 %v108, %v889
    %v896 = vld [vmem:[%s9] sm:$0x1]
    %v897 = vld [vmem:[%s10] sm:$0x1]
    %v898 = vsel %vm120, %v892, 0.0
    %899 = vadd.xlane.f32.xlu0 %v898
    %v900 = vpop.xlane.xlu0 %899
    %v901 = vsel %vm120, %v893, 0.0
    %902 = vadd.xlane.f32.xlu0 %v901
    %v903 = vpop.xlane.xlu0 %902
    %v904 = vsel %vm120, %v894, 0.0
    %905 = vadd.xlane.f32.xlu0 %v904
    %v906 = vpop.xlane.xlu0 %905
    %v907 = vsel %vm120, %v895, 0.0
    %908 = vadd.xlane.f32.xlu0 %v907
    %v909 = vpop.xlane.xlu0 %908
    %v910 = vrcp.pop 32.0
    %v911 = vmul.f32 %v900, %v910
    %v912 = vmul.f32 %v903, %v910
    %v913 = vmul.f32 %v906, %v910
    %v914 = vmul.f32 %v909, %v910
    %v915 = vsub.f32 %v892, %v911
    %v916 = vsub.f32 %v893, %v912
    %v917 = vsub.f32 %v894, %v913
    %v918 = vsub.f32 %v895, %v914
    %v919 = vmul.f32 %v915, %v915
    %v920 = vmul.f32 %v916, %v916
    %v921 = vmul.f32 %v917, %v917
    %v922 = vmul.f32 %v918, %v918
    %v923 = vsel %vm120, %v919, 0.0
    %924 = vadd.xlane.f32.xlu0 %v923
    %v925 = vpop.xlane.xlu0 %924
    %v926 = vsel %vm120, %v920, 0.0
    %927 = vadd.xlane.f32.xlu0 %v926
    %v928 = vpop.xlane.xlu0 %927
    %v929 = vsel %vm120, %v921, 0.0
    %930 = vadd.xlane.f32.xlu0 %v929
    %v931 = vpop.xlane.xlu0 %930
    %v932 = vsel %vm120, %v922, 0.0
    %933 = vadd.xlane.f32.xlu0 %v932
    %v934 = vpop.xlane.xlu0 %933
    %v935 = vmul.f32 %v925, %v910
    %v936 = vmul.f32 %v928, %v910
    %v937 = vmul.f32 %v931, %v910
    %v938 = vmul.f32 %v934, %v910
    %v939 = vadd.f32 %v935, 1e-05
    %v940 = vadd.f32 %v936, 1e-05
    %v941 = vadd.f32 %v937, 1e-05
    %v942 = vadd.f32 %v938, 1e-05
    %v943 = vrsqrt.pop %v939
    %v944 = vrsqrt.pop %v940
    %v945 = vrsqrt.pop %v941
    %v946 = vrsqrt.pop %v942
    %v947 = vmul.f32 %v915, %v943
    %v948 = vmul.f32 %v916, %v944
    %v949 = vmul.f32 %v917, %v945
    %v950 = vmul.f32 %v918, %v946
    %v952 = vlaneseq
    %v953 = vshrl.u32 %v952, 7
    %v954 = vsub.s32 0, %v953
    %v955 = vrot.slane %v896, %v954
    %v957 = vmul.f32 %v947, %v955
    %v958 = vmul.f32 %v948, %v955
    %v959 = vmul.f32 %v949, %v955
    %v960 = vmul.f32 %v950, %v955
    %v962 = vlaneseq
    %v963 = vshrl.u32 %v962, 7
    %v964 = vsub.s32 0, %v963
    %v965 = vrot.slane %v897, %v964
    %v967 = vadd.f32 %v957, %v965
    %v968 = vadd.f32 %v958, %v965
    %v969 = vadd.f32 %v959, %v965
    %v970 = vadd.f32 %v960, %v965
    %v971 = vmul.f32 %v967, %v84
    %v972 = vmul.f32 %v968, %v89
    %v973 = vmul.f32 %v969, %v94
    %v974 = vmul.f32 %v970, %v99
    %v976 = vsel %vm120, %v65, 0
    %v979 = vsel %vm120, %v66, 0
    %v982 = vsel %vm120, %v67, 0
    %v985 = vsel %vm120, %v68, 0
    %987 = vmatprep.subr.mxu0 0.0
    %988 = vmatpush1.msra.mxu0 %v971
    %989 = vmatprep.subr.mxu0 0.0
    %990 = vmatpush1.msra.mxu0 %v972
    %991 = vmatprep.subr.mxu0 0.0
    %992 = vmatpush1.msra.mxu0 %v973
    %993 = vmatprep.subr.mxu0 0.0
    %994 = vmatpush1.msra.mxu0 %v974
    %995 = vmatprep.subr.mxu0 0.0
    %996 = vmatpush1.msra.mxu0 0.0
    %997 = vmatprep.subr.mxu0 0.0
    %998 = vmatpush1.msra.mxu0 0.0
    %999 = vmatprep.subr.mxu0 0.0
    %1000 = vmatpush1.msra.mxu0 0.0
    %1001 = vmatprep.subr.mxu0 0.0
    %1002 = vmatpush1.msra.mxu0 0.0
    %1003 = vmatprep.subr.mxu0 0.0
    %1004 = vmatpush1.msra.mxu0 0.0
    %1005 = vmatprep.subr.mxu0 0.0
    %1006 = vmatpush1.msra.mxu0 0.0
    %1007 = vmatprep.subr.mxu0 0.0
    %1008 = vmatpush1.msra.mxu0 0.0
    %1009 = vmatprep.subr.mxu0 0.0
    %1010 = vmatpush1.msra.mxu0 0.0
    %1011 = vmatprep.subr.mxu0 0.0
    %1012 = vmatpush1.msra.mxu0 0.0
    %1013 = vmatprep.subr.mxu0 0.0
    %1014 = vmatpush1.msra.mxu0 0.0
    %1015 = vmatprep.subr.mxu0 0.0
    %1016 = vmatpush1.msra.mxu0 0.0
    %1017 = vmatprep.subr.mxu0 0.0
    %1018 = vmatpush1.msra.mxu0 0.0
    %1019 = vmatprep.subr.mxu0 0.0
    %1020 = vmatpush1.msra.mxu0 0.0
    %1021 = vmatprep.subr.mxu0 0.0
    %1022 = vmatpush1.msra.mxu0 0.0
    %1023 = vmatprep.subr.mxu0 0.0
    %1024 = vmatpush1.msra.mxu0 0.0
    %1025 = vmatprep.subr.mxu0 0.0
    %1026 = vmatpush1.msra.mxu0 0.0
    %1027 = vmatprep.subr.mxu0 0.0
    %1028 = vmatpush1.msra.mxu0 0.0
    %1029 = vmatprep.subr.mxu0 0.0
    %1030 = vmatpush1.msra.mxu0 0.0
    %1031 = vmatprep.subr.mxu0 0.0
    %1032 = vmatpush1.msra.mxu0 0.0
    %1033 = vmatprep.subr.mxu0 0.0
    %1034 = vmatpush1.msra.mxu0 0.0
    %1035 = vmatprep.subr.mxu0 0.0
    %1036 = vmatpush1.msra.mxu0 0.0
    %1037 = vmatprep.subr.mxu0 0.0
    %1038 = vmatpush1.msra.mxu0 0.0
    %1039 = vmatprep.subr.mxu0 0.0
    %1040 = vmatpush1.msra.mxu0 0.0
    %1041 = vmatprep.subr.mxu0 0.0
    %1042 = vmatpush1.msra.mxu0 0.0
    %1043 = vmatprep.subr.mxu0 0.0
    %1044 = vmatpush1.msra.mxu0 0.0
    %1045 = vmatprep.subr.mxu0 0.0
    %1046 = vmatpush1.msra.mxu0 0.0
    %1047 = vmatprep.subr.mxu0 0.0
    %1048 = vmatpush1.msra.mxu0 0.0
    %1049 = vmatprep.subr.mxu0 0.0
    %1050 = vmatpush1.msra.mxu0 0.0
    %1051 = vmatprep.mubr.f32.mxu0 0.0
    %1052 = vmatmul.mubr.f32.gmra.mrb[0].mxu0 %v976
    %v1053 = vpop.f32.mrb[0].mxu0
    %v1054 = vadd.f32 0.0, %v1053
    %v1055 = vpop.f32.mrb[0].mxu0
    %1056 = vmatprep.mubr.f32.mxu0 0.0
    %1057 = vmatmul.mubr.f32.gmra.mrb[0].mxu0 %v979
    %v1058 = vpop.f32.mrb[0].mxu0
    %v1059 = vadd.f32 0.0, %v1058
    %v1060 = vpop.f32.mrb[0].mxu0
    %1061 = vmatprep.mubr.f32.mxu0 0.0
    %1062 = vmatmul.mubr.f32.gmra.mrb[0].mxu0 %v982
    %v1063 = vpop.f32.mrb[0].mxu0
    %v1064 = vadd.f32 0.0, %v1063
    %v1065 = vpop.f32.mrb[0].mxu0
    %1066 = vmatprep.mubr.f32.mxu0 0.0
    %1067 = vmatmul.mubr.f32.gmra.mrb[0].mxu0 %v985
    %v1068 = vpop.f32.mrb[0].mxu0
    %v1069 = vadd.f32 0.0, %v1068
    %v1070 = vpop.f32.mrb[0].mxu0
    %1071 = vdwg.mxu0
    %v1073 = vsel %vm120, %v69, 0
    %v1076 = vsel %vm120, %v70, 0
    %v1079 = vsel %vm120, %v71, 0
    %v1082 = vsel %vm120, %v72, 0
    %1084 = vmatprep.subr.mxu0 0.0
    %1085 = vmatpush1.msra.mxu0 %v971
    %1086 = vmatprep.subr.mxu0 0.0
    %1087 = vmatpush1.msra.mxu0 %v972
    %1088 = vmatprep.subr.mxu0 0.0
    %1089 = vmatpush1.msra.mxu0 %v973
    %1090 = vmatprep.subr.mxu0 0.0
    %1091 = vmatpush1.msra.mxu0 %v974
    %1092 = vmatprep.subr.mxu0 0.0
    %1093 = vmatpush1.msra.mxu0 0.0
    %1094 = vmatprep.subr.mxu0 0.0
    %1095 = vmatpush1.msra.mxu0 0.0
    %1096 = vmatprep.subr.mxu0 0.0
    %1097 = vmatpush1.msra.mxu0 0.0
    %1098 = vmatprep.subr.mxu0 0.0
    %1099 = vmatpush1.msra.mxu0 0.0
    %1100 = vmatprep.subr.mxu0 0.0
    %1101 = vmatpush1.msra.mxu0 0.0
    %1102 = vmatprep.subr.mxu0 0.0
    %1103 = vmatpush1.msra.mxu0 0.0
    %1104 = vmatprep.subr.mxu0 0.0
    %1105 = vmatpush1.msra.mxu0 0.0
    %1106 = vmatprep.subr.mxu0 0.0
    %1107 = vmatpush1.msra.mxu0 0.0
    %1108 = vmatprep.subr.mxu0 0.0
    %1109 = vmatpush1.msra.mxu0 0.0
    %1110 = vmatprep.subr.mxu0 0.0
    %1111 = vmatpush1.msra.mxu0 0.0
    %1112 = vmatprep.subr.mxu0 0.0
    %1113 = vmatpush1.msra.mxu0 0.0
    %1114 = vmatprep.subr.mxu0 0.0
    %1115 = vmatpush1.msra.mxu0 0.0
    %1116 = vmatprep.subr.mxu0 0.0
    %1117 = vmatpush1.msra.mxu0 0.0
    %1118 = vmatprep.subr.mxu0 0.0
    %1119 = vmatpush1.msra.mxu0 0.0
    %1120 = vmatprep.subr.mxu0 0.0
    %1121 = vmatpush1.msra.mxu0 0.0
    %1122 = vmatprep.subr.mxu0 0.0
    %1123 = vmatpush1.msra.mxu0 0.0
    %1124 = vmatprep.subr.mxu0 0.0
    %1125 = vmatpush1.msra.mxu0 0.0
    %1126 = vmatprep.subr.mxu0 0.0
    %1127 = vmatpush1.msra.mxu0 0.0
    %1128 = vmatprep.subr.mxu0 0.0
    %1129 = vmatpush1.msra.mxu0 0.0
    %1130 = vmatprep.subr.mxu0 0.0
    %1131 = vmatpush1.msra.mxu0 0.0
    %1132 = vmatprep.subr.mxu0 0.0
    %1133 = vmatpush1.msra.mxu0 0.0
    %1134 = vmatprep.subr.mxu0 0.0
    %1135 = vmatpush1.msra.mxu0 0.0
    %1136 = vmatprep.subr.mxu0 0.0
    %1137 = vmatpush1.msra.mxu0 0.0
    %1138 = vmatprep.subr.mxu0 0.0
    %1139 = vmatpush1.msra.mxu0 0.0
    %1140 = vmatprep.subr.mxu0 0.0
    %1141 = vmatpush1.msra.mxu0 0.0
    %1142 = vmatprep.subr.mxu0 0.0
    %1143 = vmatpush1.msra.mxu0 0.0
    %1144 = vmatprep.subr.mxu0 0.0
    %1145 = vmatpush1.msra.mxu0 0.0
    %1146 = vmatprep.subr.mxu0 0.0
    %1147 = vmatpush1.msra.mxu0 0.0
    %1148 = vmatprep.mubr.f32.mxu0 0.0
    %1149 = vmatmul.mubr.f32.gmra.mrb[0].mxu0 %v1073
    %v1150 = vpop.f32.mrb[0].mxu0
    %v1151 = vadd.f32 0.0, %v1150
    %v1152 = vpop.f32.mrb[0].mxu0
    %1153 = vmatprep.mubr.f32.mxu0 0.0
    %1154 = vmatmul.mubr.f32.gmra.mrb[0].mxu0 %v1076
    %v1155 = vpop.f32.mrb[0].mxu0
    %v1156 = vadd.f32 0.0, %v1155
    %v1157 = vpop.f32.mrb[0].mxu0
    %1158 = vmatprep.mubr.f32.mxu0 0.0
    %1159 = vmatmul.mubr.f32.gmra.mrb[0].mxu0 %v1079
    %v1160 = vpop.f32.mrb[0].mxu0
    %v1161 = vadd.f32 0.0, %v1160
    %v1162 = vpop.f32.mrb[0].mxu0
    %1163 = vmatprep.mubr.f32.mxu0 0.0
    %1164 = vmatmul.mubr.f32.gmra.mrb[0].mxu0 %v1082
    %v1165 = vpop.f32.mrb[0].mxu0
    %v1166 = vadd.f32 0.0, %v1165
    %v1167 = vpop.f32.mrb[0].mxu0
    %1168 = vdwg.mxu0
    %v1169 = vld [vmem:[%s11] sm:$0xff]
    %v1170 = vld [vmem:[%s11 + $0x8] sm:$0xff]
    %v1171 = vld [vmem:[%s11 + $0x10] sm:$0xff]
    %v1172 = vld [vmem:[%s11 + $0x18] sm:$0xff]
    %s1173 = scalar_lea.vmem %s11, 32
    %v1174 = vld [vmem:[%s1173] sm:$0xff]
    %v1175 = vld [vmem:[%s1173 + $0x8] sm:$0xff]
    %v1176 = vld [vmem:[%s1173 + $0x10] sm:$0xff]
    %v1177 = vld [vmem:[%s1173 + $0x18] sm:$0xff]
    %v1179 = vsel %vm120, %v971, 0
    %v1182 = vsel %vm120, %v972, 0
    %v1185 = vsel %vm120, %v973, 0
    %v1188 = vsel %vm120, %v974, 0
    %1190 = vmatprep.subr.mxu0 0.0
    %1191 = vmatpush1.msra.mxu0 %v1174
    %1192 = vmatprep.subr.mxu0 0.0
    %1193 = vmatpush1.msra.mxu0 %v1175
    %1194 = vmatprep.subr.mxu0 0.0
    %1195 = vmatpush1.msra.mxu0 %v1176
    %1196 = vmatprep.subr.mxu0 0.0
    %1197 = vmatpush1.msra.mxu0 %v1177
    %1198 = vmatprep.subr.mxu0 0.0
    %1199 = vmatpush1.msra.mxu0 0.0
    %1200 = vmatprep.subr.mxu0 0.0
    %1201 = vmatpush1.msra.mxu0 0.0
    %1202 = vmatprep.subr.mxu0 0.0
    %1203 = vmatpush1.msra.mxu0 0.0
    %1204 = vmatprep.subr.mxu0 0.0
    %1205 = vmatpush1.msra.mxu0 0.0
    %1206 = vmatprep.subr.mxu0 0.0
    %1207 = vmatpush1.msra.mxu0 0.0
    %1208 = vmatprep.subr.mxu0 0.0
    %1209 = vmatpush1.msra.mxu0 0.0
    %1210 = vmatprep.subr.mxu0 0.0
    %1211 = vmatpush1.msra.mxu0 0.0
    %1212 = vmatprep.subr.mxu0 0.0
    %1213 = vmatpush1.msra.mxu0 0.0
    %1214 = vmatprep.subr.mxu0 0.0
    %1215 = vmatpush1.msra.mxu0 0.0
    %1216 = vmatprep.subr.mxu0 0.0
    %1217 = vmatpush1.msra.mxu0 0.0
    %1218 = vmatprep.subr.mxu0 0.0
    %1219 = vmatpush1.msra.mxu0 0.0
    %1220 = vmatprep.subr.mxu0 0.0
    %1221 = vmatpush1.msra.mxu0 0.0
    %1222 = vmatprep.subr.mxu0 0.0
    %1223 = vmatpush1.msra.mxu0 0.0
    %1224 = vmatprep.subr.mxu0 0.0
    %1225 = vmatpush1.msra.mxu0 0.0
    %1226 = vmatprep.subr.mxu0 0.0
    %1227 = vmatpush1.msra.mxu0 0.0
    %1228 = vmatprep.subr.mxu0 0.0
    %1229 = vmatpush1.msra.mxu0 0.0
    %1230 = vmatprep.subr.mxu0 0.0
    %1231 = vmatpush1.msra.mxu0 0.0
    %1232 = vmatprep.subr.mxu0 0.0
    %1233 = vmatpush1.msra.mxu0 0.0
    %1234 = vmatprep.subr.mxu0 0.0
    %1235 = vmatpush1.msra.mxu0 0.0
    %1236 = vmatprep.subr.mxu0 0.0
    %1237 = vmatpush1.msra.mxu0 0.0
    %1238 = vmatprep.subr.mxu0 0.0
    %1239 = vmatpush1.msra.mxu0 0.0
    %1240 = vmatprep.subr.mxu0 0.0
    %1241 = vmatpush1.msra.mxu0 0.0
    %1242 = vmatprep.subr.mxu0 0.0
    %1243 = vmatpush1.msra.mxu0 0.0
    %1244 = vmatprep.subr.mxu0 0.0
    %1245 = vmatpush1.msra.mxu0 0.0
    %1246 = vmatprep.subr.mxu0 0.0
    %1247 = vmatpush1.msra.mxu0 0.0
    %1248 = vmatprep.subr.mxu0 0.0
    %1249 = vmatpush1.msra.mxu0 0.0
    %1250 = vmatprep.subr.mxu0 0.0
    %1251 = vmatpush1.msra.mxu0 0.0
    %1252 = vmatprep.subr.mxu0 0.0
    %1253 = vmatpush1.msra.mxu0 0.0
    %1254 = vmatprep.mubr.f32.mxu0 0.0
    %1255 = vmatmul.mubr.f32.gmra.mrb[0].mxu0 %v1179
    %v1256 = vpop.f32.mrb[0].mxu0
    %v1257 = vadd.f32 0.0, %v1256
    %v1258 = vpop.f32.mrb[0].mxu0
    %1259 = vmatprep.mubr.f32.mxu0 0.0
    %1260 = vmatmul.mubr.f32.gmra.mrb[0].mxu0 %v1182
    %v1261 = vpop.f32.mrb[0].mxu0
    %v1262 = vadd.f32 0.0, %v1261
    %v1263 = vpop.f32.mrb[0].mxu0
    %1264 = vmatprep.mubr.f32.mxu0 0.0
    %1265 = vmatmul.mubr.f32.gmra.mrb[0].mxu0 %v1185
    %v1266 = vpop.f32.mrb[0].mxu0
    %v1267 = vadd.f32 0.0, %v1266
    %v1268 = vpop.f32.mrb[0].mxu0
    %1269 = vmatprep.mubr.f32.mxu0 0.0
    %1270 = vmatmul.mubr.f32.gmra.mrb[0].mxu0 %v1188
    %v1271 = vpop.f32.mrb[0].mxu0
    %v1272 = vadd.f32 0.0, %v1271
    %v1273 = vpop.f32.mrb[0].mxu0
    %1274 = vdwg.mxu0
    %v1276 = vsel %vm120, %v1054, 0
    %v1279 = vsel %vm120, %v1059, 0
    %v1282 = vsel %vm120, %v1064, 0
    %v1285 = vsel %vm120, %v1069, 0
    %1287 = vmatprep.subr.mxu0 0.0
    %1288 = vmatpush1.msra.mxu0 %v1169
    %1289 = vmatprep.subr.mxu0 0.0
    %1290 = vmatpush1.msra.mxu0 %v1170
    %1291 = vmatprep.subr.mxu0 0.0
    %1292 = vmatpush1.msra.mxu0 %v1171
    %1293 = vmatprep.subr.mxu0 0.0
    %1294 = vmatpush1.msra.mxu0 %v1172
    %1295 = vmatprep.subr.mxu0 0.0
    %1296 = vmatpush1.msra.mxu0 0.0
    %1297 = vmatprep.subr.mxu0 0.0
    %1298 = vmatpush1.msra.mxu0 0.0
    %1299 = vmatprep.subr.mxu0 0.0
    %1300 = vmatpush1.msra.mxu0 0.0
    %1301 = vmatprep.subr.mxu0 0.0
    %1302 = vmatpush1.msra.mxu0 0.0
    %1303 = vmatprep.subr.mxu0 0.0
    %1304 = vmatpush1.msra.mxu0 0.0
    %1305 = vmatprep.subr.mxu0 0.0
    %1306 = vmatpush1.msra.mxu0 0.0
    %1307 = vmatprep.subr.mxu0 0.0
    %1308 = vmatpush1.msra.mxu0 0.0
    %1309 = vmatprep.subr.mxu0 0.0
    %1310 = vmatpush1.msra.mxu0 0.0
    %1311 = vmatprep.subr.mxu0 0.0
    %1312 = vmatpush1.msra.mxu0 0.0
    %1313 = vmatprep.subr.mxu0 0.0
    %1314 = vmatpush1.msra.mxu0 0.0
    %1315 = vmatprep.subr.mxu0 0.0
    %1316 = vmatpush1.msra.mxu0 0.0
    %1317 = vmatprep.subr.mxu0 0.0
    %1318 = vmatpush1.msra.mxu0 0.0
    %1319 = vmatprep.subr.mxu0 0.0
    %1320 = vmatpush1.msra.mxu0 0.0
    %1321 = vmatprep.subr.mxu0 0.0
    %1322 = vmatpush1.msra.mxu0 0.0
    %1323 = vmatprep.subr.mxu0 0.0
    %1324 = vmatpush1.msra.mxu0 0.0
    %1325 = vmatprep.subr.mxu0 0.0
    %1326 = vmatpush1.msra.mxu0 0.0
    %1327 = vmatprep.subr.mxu0 0.0
    %1328 = vmatpush1.msra.mxu0 0.0
    %1329 = vmatprep.subr.mxu0 0.0
    %1330 = vmatpush1.msra.mxu0 0.0
    %1331 = vmatprep.subr.mxu0 0.0
    %1332 = vmatpush1.msra.mxu0 0.0
    %1333 = vmatprep.subr.mxu0 0.0
    %1334 = vmatpush1.msra.mxu0 0.0
    %1335 = vmatprep.subr.mxu0 0.0
    %1336 = vmatpush1.msra.mxu0 0.0
    %1337 = vmatprep.subr.mxu0 0.0
    %1338 = vmatpush1.msra.mxu0 0.0
    %1339 = vmatprep.subr.mxu0 0.0
    %1340 = vmatpush1.msra.mxu0 0.0
    %1341 = vmatprep.subr.mxu0 0.0
    %1342 = vmatpush1.msra.mxu0 0.0
    %1343 = vmatprep.subr.mxu0 0.0
    %1344 = vmatpush1.msra.mxu0 0.0
    %1345 = vmatprep.subr.mxu0 0.0
    %1346 = vmatpush1.msra.mxu0 0.0
    %1347 = vmatprep.subr.mxu0 0.0
    %1348 = vmatpush1.msra.mxu0 0.0
    %1349 = vmatprep.subr.mxu0 0.0
    %1350 = vmatpush1.msra.mxu0 0.0
    %1351 = vmatprep.mubr.f32.mxu0 0.0
    %1352 = vmatmul.mubr.f32.gmra.mrb[0].mxu0 %v1276
    %v1353 = vpop.f32.mrb[0].mxu0
    %v1354 = vadd.f32 %v1257, %v1353
    %v1355 = vpop.f32.mrb[0].mxu0
    %1356 = vmatprep.mubr.f32.mxu0 0.0
    %1357 = vmatmul.mubr.f32.gmra.mrb[0].mxu0 %v1279
    %v1358 = vpop.f32.mrb[0].mxu0
    %v1359 = vadd.f32 %v1262, %v1358
    %v1360 = vpop.f32.mrb[0].mxu0
    %1361 = vmatprep.mubr.f32.mxu0 0.0
    %1362 = vmatmul.mubr.f32.gmra.mrb[0].mxu0 %v1282
    %v1363 = vpop.f32.mrb[0].mxu0
    %v1364 = vadd.f32 %v1267, %v1363
    %v1365 = vpop.f32.mrb[0].mxu0
    %1366 = vmatprep.mubr.f32.mxu0 0.0
    %1367 = vmatmul.mubr.f32.gmra.mrb[0].mxu0 %v1285
    %v1368 = vpop.f32.mrb[0].mxu0
    %v1369 = vadd.f32 %v1272, %v1368
    %v1370 = vpop.f32.mrb[0].mxu0
    %1371 = vdwg.mxu0
    %s1372 = scalar_lea.vmem %s11, 64
    %v1373 = vld [vmem:[%s1372] sm:$0xff]
    %v1374 = vld [vmem:[%s1372 + $0x8] sm:$0xff]
    %v1375 = vld [vmem:[%s1372 + $0x10] sm:$0xff]
    %v1376 = vld [vmem:[%s1372 + $0x18] sm:$0xff]
    %v1378 = vsel %vm120, %v1151, 0
    %v1381 = vsel %vm120, %v1156, 0
    %v1384 = vsel %vm120, %v1161, 0
    %v1387 = vsel %vm120, %v1166, 0
    %1389 = vmatprep.subr.mxu0 0.0
    %1390 = vmatpush1.msra.mxu0 %v1373
    %1391 = vmatprep.subr.mxu0 0.0
    %1392 = vmatpush1.msra.mxu0 %v1374
    %1393 = vmatprep.subr.mxu0 0.0
    %1394 = vmatpush1.msra.mxu0 %v1375
    %1395 = vmatprep.subr.mxu0 0.0
    %1396 = vmatpush1.msra.mxu0 %v1376
    %1397 = vmatprep.subr.mxu0 0.0
    %1398 = vmatpush1.msra.mxu0 0.0
    %1399 = vmatprep.subr.mxu0 0.0
    %1400 = vmatpush1.msra.mxu0 0.0
    %1401 = vmatprep.subr.mxu0 0.0
    %1402 = vmatpush1.msra.mxu0 0.0
    %1403 = vmatprep.subr.mxu0 0.0
    %1404 = vmatpush1.msra.mxu0 0.0
    %1405 = vmatprep.subr.mxu0 0.0
    %1406 = vmatpush1.msra.mxu0 0.0
    %1407 = vmatprep.subr.mxu0 0.0
    %1408 = vmatpush1.msra.mxu0 0.0
    %1409 = vmatprep.subr.mxu0 0.0
    %1410 = vmatpush1.msra.mxu0 0.0
    %1411 = vmatprep.subr.mxu0 0.0
    %1412 = vmatpush1.msra.mxu0 0.0
    %1413 = vmatprep.subr.mxu0 0.0
    %1414 = vmatpush1.msra.mxu0 0.0
    %1415 = vmatprep.subr.mxu0 0.0
    %1416 = vmatpush1.msra.mxu0 0.0
    %1417 = vmatprep.subr.mxu0 0.0
    %1418 = vmatpush1.msra.mxu0 0.0
    %1419 = vmatprep.subr.mxu0 0.0
    %1420 = vmatpush1.msra.mxu0 0.0
    %1421 = vmatprep.subr.mxu0 0.0
    %1422 = vmatpush1.msra.mxu0 0.0
    %1423 = vmatprep.subr.mxu0 0.0
    %1424 = vmatpush1.msra.mxu0 0.0
    %1425 = vmatprep.subr.mxu0 0.0
    %1426 = vmatpush1.msra.mxu0 0.0
    %1427 = vmatprep.subr.mxu0 0.0
    %1428 = vmatpush1.msra.mxu0 0.0
    %1429 = vmatprep.subr.mxu0 0.0
    %1430 = vmatpush1.msra.mxu0 0.0
    %1431 = vmatprep.subr.mxu0 0.0
    %1432 = vmatpush1.msra.mxu0 0.0
    %1433 = vmatprep.subr.mxu0 0.0
    %1434 = vmatpush1.msra.mxu0 0.0
    %1435 = vmatprep.subr.mxu0 0.0
    %1436 = vmatpush1.msra.mxu0 0.0
    %1437 = vmatprep.subr.mxu0 0.0
    %1438 = vmatpush1.msra.mxu0 0.0
    %1439 = vmatprep.subr.mxu0 0.0
    %1440 = vmatpush1.msra.mxu0 0.0
    %1441 = vmatprep.subr.mxu0 0.0
    %1442 = vmatpush1.msra.mxu0 0.0
    %1443 = vmatprep.subr.mxu0 0.0
    %1444 = vmatpush1.msra.mxu0 0.0
    %1445 = vmatprep.subr.mxu0 0.0
    %1446 = vmatpush1.msra.mxu0 0.0
    %1447 = vmatprep.subr.mxu0 0.0
    %1448 = vmatpush1.msra.mxu0 0.0
    %1449 = vmatprep.subr.mxu0 0.0
    %1450 = vmatpush1.msra.mxu0 0.0
    %1451 = vmatprep.subr.mxu0 0.0
    %1452 = vmatpush1.msra.mxu0 0.0
    %1453 = vmatprep.mubr.f32.mxu0 0.0
    %1454 = vmatmul.mubr.f32.gmra.mrb[0].mxu0 %v1378
    %v1455 = vpop.f32.mrb[0].mxu0
    %v1456 = vadd.f32 0.0, %v1455
    %v1457 = vpop.f32.mrb[0].mxu0
    %1458 = vmatprep.mubr.f32.mxu0 0.0
    %1459 = vmatmul.mubr.f32.gmra.mrb[0].mxu0 %v1381
    %v1460 = vpop.f32.mrb[0].mxu0
    %v1461 = vadd.f32 0.0, %v1460
    %v1462 = vpop.f32.mrb[0].mxu0
    %1463 = vmatprep.mubr.f32.mxu0 0.0
    %1464 = vmatmul.mubr.f32.gmra.mrb[0].mxu0 %v1384
    %v1465 = vpop.f32.mrb[0].mxu0
    %v1466 = vadd.f32 0.0, %v1465
    %v1467 = vpop.f32.mrb[0].mxu0
    %1468 = vmatprep.mubr.f32.mxu0 0.0
    %1469 = vmatmul.mubr.f32.gmra.mrb[0].mxu0 %v1387
    %v1470 = vpop.f32.mrb[0].mxu0
    %v1471 = vadd.f32 0.0, %v1470
    %v1472 = vpop.f32.mrb[0].mxu0
    %1473 = vdwg.mxu0
    %v1474 = vadd.f32 %v1354, %v1456
    %v1475 = vadd.f32 %v1359, %v1461
    %v1476 = vadd.f32 %v1364, %v1466
    %v1477 = vadd.f32 %v1369, %v1471
    %v1478 = vld [vmem:[%s12] sm:$0x1]
    %v1480 = vlaneseq
    %v1481 = vshrl.u32 %v1480, 7
    %v1482 = vsub.s32 0, %v1481
    %v1483 = vrot.slane %v1478, %v1482
    %v1485 = vadd.f32 %v1474, %v1483
    %v1486 = vadd.f32 %v1475, %v1483
    %v1487 = vadd.f32 %v1476, %v1483
    %v1488 = vadd.f32 %v1477, %v1483
    %v1489 = vmax.f32 %v1485, 0.0
    %v1490 = vmax.f32 %v1486, 0.0
    %v1491 = vmax.f32 %v1487, 0.0
    %v1492 = vmax.f32 %v1488, 0.0
    %1493 = vmatprep.subr.mxu0 0.0
    %1494 = vmatpush1.msra.mxu0 %v1489
    %1495 = vmatprep.subr.mxu0 0.0
    %1496 = vmatpush1.msra.mxu0 %v1490
    %1497 = vmatprep.subr.mxu0 0.0
    %1498 = vmatpush1.msra.mxu0 %v1491
    %1499 = vmatprep.subr.mxu0 0.0
    %1500 = vmatpush1.msra.mxu0 %v1492
    %1501 = vmatprep.subr.mxu0 0.0
    %1502 = vmatpush1.msra.mxu0 0.0
    %1503 = vmatprep.subr.mxu0 0.0
    %1504 = vmatpush1.msra.mxu0 0.0
    %1505 = vmatprep.subr.mxu0 0.0
    %1506 = vmatpush1.msra.mxu0 0.0
    %1507 = vmatprep.subr.mxu0 0.0
    %1508 = vmatpush1.msra.mxu0 0.0
    %1509 = vmatprep.subr.mxu0 0.0
    %1510 = vmatpush1.msra.mxu0 0.0
    %1511 = vmatprep.subr.mxu0 0.0
    %1512 = vmatpush1.msra.mxu0 0.0
    %1513 = vmatprep.subr.mxu0 0.0
    %1514 = vmatpush1.msra.mxu0 0.0
    %1515 = vmatprep.subr.mxu0 0.0
    %1516 = vmatpush1.msra.mxu0 0.0
    %1517 = vmatprep.subr.mxu0 0.0
    %1518 = vmatpush1.msra.mxu0 0.0
    %1519 = vmatprep.subr.mxu0 0.0
    %1520 = vmatpush1.msra.mxu0 0.0
    %1521 = vmatprep.subr.mxu0 0.0
    %1522 = vmatpush1.msra.mxu0 0.0
    %1523 = vmatprep.subr.mxu0 0.0
    %1524 = vmatpush1.msra.mxu0 0.0
    %1525 = vmatprep.subr.mxu0 0.0
    %1526 = vmatpush1.msra.mxu0 0.0
    %1527 = vmatprep.subr.mxu0 0.0
    %1528 = vmatpush1.msra.mxu0 0.0
    %1529 = vmatprep.subr.mxu0 0.0
    %1530 = vmatpush1.msra.mxu0 0.0
    %1531 = vmatprep.subr.mxu0 0.0
    %1532 = vmatpush1.msra.mxu0 0.0
    %1533 = vmatprep.subr.mxu0 0.0
    %1534 = vmatpush1.msra.mxu0 0.0
    %1535 = vmatprep.subr.mxu0 0.0
    %1536 = vmatpush1.msra.mxu0 0.0
    %1537 = vmatprep.subr.mxu0 0.0
    %1538 = vmatpush1.msra.mxu0 0.0
    %1539 = vmatprep.subr.mxu0 0.0
    %1540 = vmatpush1.msra.mxu0 0.0
    %1541 = vmatprep.subr.mxu0 0.0
    %1542 = vmatpush1.msra.mxu0 0.0
    %1543 = vmatprep.subr.mxu0 0.0
    %1544 = vmatpush1.msra.mxu0 0.0
    %1545 = vmatprep.subr.mxu0 0.0
    %1546 = vmatpush1.msra.mxu0 0.0
    %1547 = vmatprep.subr.mxu0 0.0
    %1548 = vmatpush1.msra.mxu0 0.0
    %1549 = vmatprep.subr.mxu0 0.0
    %1550 = vmatpush1.msra.mxu0 0.0
    %1551 = vmatprep.subr.mxu0 0.0
    %1552 = vmatpush1.msra.mxu0 0.0
    %1553 = vmatprep.subr.mxu0 0.0
    %1554 = vmatpush1.msra.mxu0 0.0
    %1555 = vmatprep.subr.mxu0 0.0
    %1556 = vmatpush1.msra.mxu0 0.0
    %1557 = vmatprep.mubr.f32.mxu0 0.0
    %1558 = vmatmul.mubr.f32.gmra.mrb[0].mxu0 %v976
    %v1559 = vpop.f32.mrb[0].mxu0
    %v1560 = vadd.f32 0.0, %v1559
    %v1561 = vpop.f32.mrb[0].mxu0
    %1562 = vmatprep.mubr.f32.mxu0 0.0
    %1563 = vmatmul.mubr.f32.gmra.mrb[0].mxu0 %v979
    %v1564 = vpop.f32.mrb[0].mxu0
    %v1565 = vadd.f32 0.0, %v1564
    %v1566 = vpop.f32.mrb[0].mxu0
    %1567 = vmatprep.mubr.f32.mxu0 0.0
    %1568 = vmatmul.mubr.f32.gmra.mrb[0].mxu0 %v982
    %v1569 = vpop.f32.mrb[0].mxu0
    %v1570 = vadd.f32 0.0, %v1569
    %v1571 = vpop.f32.mrb[0].mxu0
    %1572 = vmatprep.mubr.f32.mxu0 0.0
    %1573 = vmatmul.mubr.f32.gmra.mrb[0].mxu0 %v985
    %v1574 = vpop.f32.mrb[0].mxu0
    %v1575 = vadd.f32 0.0, %v1574
    %v1576 = vpop.f32.mrb[0].mxu0
    %1577 = vdwg.mxu0
    %1578 = vmatprep.subr.mxu0 0.0
    %1579 = vmatpush1.msra.mxu0 %v1489
    %1580 = vmatprep.subr.mxu0 0.0
    %1581 = vmatpush1.msra.mxu0 %v1490
    %1582 = vmatprep.subr.mxu0 0.0
    %1583 = vmatpush1.msra.mxu0 %v1491
    %1584 = vmatprep.subr.mxu0 0.0
    %1585 = vmatpush1.msra.mxu0 %v1492
    %1586 = vmatprep.subr.mxu0 0.0
    %1587 = vmatpush1.msra.mxu0 0.0
    %1588 = vmatprep.subr.mxu0 0.0
    %1589 = vmatpush1.msra.mxu0 0.0
    %1590 = vmatprep.subr.mxu0 0.0
    %1591 = vmatpush1.msra.mxu0 0.0
    %1592 = vmatprep.subr.mxu0 0.0
    %1593 = vmatpush1.msra.mxu0 0.0
    %1594 = vmatprep.subr.mxu0 0.0
    %1595 = vmatpush1.msra.mxu0 0.0
    %1596 = vmatprep.subr.mxu0 0.0
    %1597 = vmatpush1.msra.mxu0 0.0
    %1598 = vmatprep.subr.mxu0 0.0
    %1599 = vmatpush1.msra.mxu0 0.0
    %1600 = vmatprep.subr.mxu0 0.0
    %1601 = vmatpush1.msra.mxu0 0.0
    %1602 = vmatprep.subr.mxu0 0.0
    %1603 = vmatpush1.msra.mxu0 0.0
    %1604 = vmatprep.subr.mxu0 0.0
    %1605 = vmatpush1.msra.mxu0 0.0
    %1606 = vmatprep.subr.mxu0 0.0
    %1607 = vmatpush1.msra.mxu0 0.0
    %1608 = vmatprep.subr.mxu0 0.0
    %1609 = vmatpush1.msra.mxu0 0.0
    %1610 = vmatprep.subr.mxu0 0.0
    %1611 = vmatpush1.msra.mxu0 0.0
    %1612 = vmatprep.subr.mxu0 0.0
    %1613 = vmatpush1.msra.mxu0 0.0
    %1614 = vmatprep.subr.mxu0 0.0
    %1615 = vmatpush1.msra.mxu0 0.0
    %1616 = vmatprep.subr.mxu0 0.0
    %1617 = vmatpush1.msra.mxu0 0.0
    %1618 = vmatprep.subr.mxu0 0.0
    %1619 = vmatpush1.msra.mxu0 0.0
    %1620 = vmatprep.subr.mxu0 0.0
    %1621 = vmatpush1.msra.mxu0 0.0
    %1622 = vmatprep.subr.mxu0 0.0
    %1623 = vmatpush1.msra.mxu0 0.0
    %1624 = vmatprep.subr.mxu0 0.0
    %1625 = vmatpush1.msra.mxu0 0.0
    %1626 = vmatprep.subr.mxu0 0.0
    %1627 = vmatpush1.msra.mxu0 0.0
    %1628 = vmatprep.subr.mxu0 0.0
    %1629 = vmatpush1.msra.mxu0 0.0
    %1630 = vmatprep.subr.mxu0 0.0
    %1631 = vmatpush1.msra.mxu0 0.0
    %1632 = vmatprep.subr.mxu0 0.0
    %1633 = vmatpush1.msra.mxu0 0.0
    %1634 = vmatprep.subr.mxu0 0.0
    %1635 = vmatpush1.msra.mxu0 0.0
    %1636 = vmatprep.subr.mxu0 0.0
    %1637 = vmatpush1.msra.mxu0 0.0
    %1638 = vmatprep.subr.mxu0 0.0
    %1639 = vmatpush1.msra.mxu0 0.0
    %1640 = vmatprep.subr.mxu0 0.0
    %1641 = vmatpush1.msra.mxu0 0.0
    %1642 = vmatprep.mubr.f32.mxu0 0.0
    %1643 = vmatmul.mubr.f32.gmra.mrb[0].mxu0 %v1073
    %v1644 = vpop.f32.mrb[0].mxu0
    %v1645 = vadd.f32 0.0, %v1644
    %v1646 = vpop.f32.mrb[0].mxu0
    %1647 = vmatprep.mubr.f32.mxu0 0.0
    %1648 = vmatmul.mubr.f32.gmra.mrb[0].mxu0 %v1076
    %v1649 = vpop.f32.mrb[0].mxu0
    %v1650 = vadd.f32 0.0, %v1649
    %v1651 = vpop.f32.mrb[0].mxu0
    %1652 = vmatprep.mubr.f32.mxu0 0.0
    %1653 = vmatmul.mubr.f32.gmra.mrb[0].mxu0 %v1079
    %v1654 = vpop.f32.mrb[0].mxu0
    %v1655 = vadd.f32 0.0, %v1654
    %v1656 = vpop.f32.mrb[0].mxu0
    %1657 = vmatprep.mubr.f32.mxu0 0.0
    %1658 = vmatmul.mubr.f32.gmra.mrb[0].mxu0 %v1082
    %v1659 = vpop.f32.mrb[0].mxu0
    %v1660 = vadd.f32 0.0, %v1659
    %v1661 = vpop.f32.mrb[0].mxu0
    %1662 = vdwg.mxu0
    %v1663 = vld [vmem:[%s13] sm:$0xff]
    %v1664 = vld [vmem:[%s13 + $0x8] sm:$0xff]
    %v1665 = vld [vmem:[%s13 + $0x10] sm:$0xff]
    %v1666 = vld [vmem:[%s13 + $0x18] sm:$0xff]
    %v1667 = vld [vmem:[%s13 + $0x20] sm:$0xff]
    %v1668 = vld [vmem:[%s13 + $0x28] sm:$0xff]
    %v1669 = vld [vmem:[%s13 + $0x30] sm:$0xff]
    %v1670 = vld [vmem:[%s13 + $0x38] sm:$0xff]
    %s1671 = scalar_lea.vmem %s13, 64
    %v1672 = vld [vmem:[%s1671] sm:$0xff]
    %v1673 = vld [vmem:[%s1671 + $0x8] sm:$0xff]
    %v1674 = vld [vmem:[%s1671 + $0x10] sm:$0xff]
    %v1675 = vld [vmem:[%s1671 + $0x18] sm:$0xff]
    %v1676 = vld [vmem:[%s1671 + $0x20] sm:$0xff]
    %v1677 = vld [vmem:[%s1671 + $0x28] sm:$0xff]
    %v1678 = vld [vmem:[%s1671 + $0x30] sm:$0xff]
    %v1679 = vld [vmem:[%s1671 + $0x38] sm:$0xff]
    %vm1680 = vcmask 523264
    %v1682 = vsel %vm1680, %v1489, 0
    %v1685 = vsel %vm1680, %v1490, 0
    %v1688 = vsel %vm1680, %v1491, 0
    %v1691 = vsel %vm1680, %v1492, 0
    %1693 = vmatprep.subr.mxu0 0.0
    %1694 = vmatpush1.msra.mxu0 %v1672
    %1695 = vmatprep.subr.mxu0 0.0
    %1696 = vmatpush1.msra.mxu0 %v1673
    %1697 = vmatprep.subr.mxu0 0.0
    %1698 = vmatpush1.msra.mxu0 %v1674
    %1699 = vmatprep.subr.mxu0 0.0
    %1700 = vmatpush1.msra.mxu0 %v1675
    %1701 = vmatprep.subr.mxu0 0.0
    %1702 = vmatpush1.msra.mxu0 %v1676
    %1703 = vmatprep.subr.mxu0 0.0
    %1704 = vmatpush1.msra.mxu0 %v1677
    %1705 = vmatprep.subr.mxu0 0.0
    %1706 = vmatpush1.msra.mxu0 %v1678
    %1707 = vmatprep.subr.mxu0 0.0
    %1708 = vmatpush1.msra.mxu0 %v1679
    %1709 = vmatprep.subr.mxu0 0.0
    %1710 = vmatpush1.msra.mxu0 0.0
    %1711 = vmatprep.subr.mxu0 0.0
    %1712 = vmatpush1.msra.mxu0 0.0
    %1713 = vmatprep.subr.mxu0 0.0
    %1714 = vmatpush1.msra.mxu0 0.0
    %1715 = vmatprep.subr.mxu0 0.0
    %1716 = vmatpush1.msra.mxu0 0.0
    %1717 = vmatprep.subr.mxu0 0.0
    %1718 = vmatpush1.msra.mxu0 0.0
    %1719 = vmatprep.subr.mxu0 0.0
    %1720 = vmatpush1.msra.mxu0 0.0
    %1721 = vmatprep.subr.mxu0 0.0
    %1722 = vmatpush1.msra.mxu0 0.0
    %1723 = vmatprep.subr.mxu0 0.0
    %1724 = vmatpush1.msra.mxu0 0.0
    %1725 = vmatprep.subr.mxu0 0.0
    %1726 = vmatpush1.msra.mxu0 0.0
    %1727 = vmatprep.subr.mxu0 0.0
    %1728 = vmatpush1.msra.mxu0 0.0
    %1729 = vmatprep.subr.mxu0 0.0
    %1730 = vmatpush1.msra.mxu0 0.0
    %1731 = vmatprep.subr.mxu0 0.0
    %1732 = vmatpush1.msra.mxu0 0.0
    %1733 = vmatprep.subr.mxu0 0.0
    %1734 = vmatpush1.msra.mxu0 0.0
    %1735 = vmatprep.subr.mxu0 0.0
    %1736 = vmatpush1.msra.mxu0 0.0
    %1737 = vmatprep.subr.mxu0 0.0
    %1738 = vmatpush1.msra.mxu0 0.0
    %1739 = vmatprep.subr.mxu0 0.0
    %1740 = vmatpush1.msra.mxu0 0.0
    %1741 = vmatprep.subr.mxu0 0.0
    %1742 = vmatpush1.msra.mxu0 0.0
    %1743 = vmatprep.subr.mxu0 0.0
    %1744 = vmatpush1.msra.mxu0 0.0
    %1745 = vmatprep.subr.mxu0 0.0
    %1746 = vmatpush1.msra.mxu0 0.0
    %1747 = vmatprep.subr.mxu0 0.0
    %1748 = vmatpush1.msra.mxu0 0.0
    %1749 = vmatprep.subr.mxu0 0.0
    %1750 = vmatpush1.msra.mxu0 0.0
    %1751 = vmatprep.subr.mxu0 0.0
    %1752 = vmatpush1.msra.mxu0 0.0
    %1753 = vmatprep.subr.mxu0 0.0
    %1754 = vmatpush1.msra.mxu0 0.0
    %1755 = vmatprep.subr.mxu0 0.0
    %1756 = vmatpush1.msra.mxu0 0.0
    %1757 = vmatprep.mubr.f32.mxu0 0.0
    %1758 = vmatmul.mubr.f32.gmra.mrb[0].mxu0 %v1682
    %v1759 = vpop.f32.mrb[0].mxu0
    %v1760 = vadd.f32 0.0, %v1759
    %v1761 = vpop.f32.mrb[0].mxu0
    %1762 = vmatprep.mubr.f32.mxu0 0.0
    %1763 = vmatmul.mubr.f32.gmra.mrb[0].mxu0 %v1685
    %v1764 = vpop.f32.mrb[0].mxu0
    %v1765 = vadd.f32 0.0, %v1764
    %v1766 = vpop.f32.mrb[0].mxu0
    %1767 = vmatprep.mubr.f32.mxu0 0.0
    %1768 = vmatmul.mubr.f32.gmra.mrb[0].mxu0 %v1688
    %v1769 = vpop.f32.mrb[0].mxu0
    %v1770 = vadd.f32 0.0, %v1769
    %v1771 = vpop.f32.mrb[0].mxu0
    %1772 = vmatprep.mubr.f32.mxu0 0.0
    %1773 = vmatmul.mubr.f32.gmra.mrb[0].mxu0 %v1691
    %v1774 = vpop.f32.mrb[0].mxu0
    %v1775 = vadd.f32 0.0, %v1774
    %v1776 = vpop.f32.mrb[0].mxu0
    %1777 = vdwg.mxu0
    %v1779 = vsel %vm1680, %v1560, 0
    %v1782 = vsel %vm1680, %v1565, 0
    %v1785 = vsel %vm1680, %v1570, 0
    %v1788 = vsel %vm1680, %v1575, 0
    %1790 = vmatprep.subr.mxu0 0.0
    %1791 = vmatpush1.msra.mxu0 %v1663
    %1792 = vmatprep.subr.mxu0 0.0
    %1793 = vmatpush1.msra.mxu0 %v1664
    %1794 = vmatprep.subr.mxu0 0.0
    %1795 = vmatpush1.msra.mxu0 %v1665
    %1796 = vmatprep.subr.mxu0 0.0
    %1797 = vmatpush1.msra.mxu0 %v1666
    %1798 = vmatprep.subr.mxu0 0.0
    %1799 = vmatpush1.msra.mxu0 %v1667
    %1800 = vmatprep.subr.mxu0 0.0
    %1801 = vmatpush1.msra.mxu0 %v1668
    %1802 = vmatprep.subr.mxu0 0.0
    %1803 = vmatpush1.msra.mxu0 %v1669
    %1804 = vmatprep.subr.mxu0 0.0
    %1805 = vmatpush1.msra.mxu0 %v1670
    %1806 = vmatprep.subr.mxu0 0.0
    %1807 = vmatpush1.msra.mxu0 0.0
    %1808 = vmatprep.subr.mxu0 0.0
    %1809 = vmatpush1.msra.mxu0 0.0
    %1810 = vmatprep.subr.mxu0 0.0
    %1811 = vmatpush1.msra.mxu0 0.0
    %1812 = vmatprep.subr.mxu0 0.0
    %1813 = vmatpush1.msra.mxu0 0.0
    %1814 = vmatprep.subr.mxu0 0.0
    %1815 = vmatpush1.msra.mxu0 0.0
    %1816 = vmatprep.subr.mxu0 0.0
    %1817 = vmatpush1.msra.mxu0 0.0
    %1818 = vmatprep.subr.mxu0 0.0
    %1819 = vmatpush1.msra.mxu0 0.0
    %1820 = vmatprep.subr.mxu0 0.0
    %1821 = vmatpush1.msra.mxu0 0.0
    %1822 = vmatprep.subr.mxu0 0.0
    %1823 = vmatpush1.msra.mxu0 0.0
    %1824 = vmatprep.subr.mxu0 0.0
    %1825 = vmatpush1.msra.mxu0 0.0
    %1826 = vmatprep.subr.mxu0 0.0
    %1827 = vmatpush1.msra.mxu0 0.0
    %1828 = vmatprep.subr.mxu0 0.0
    %1829 = vmatpush1.msra.mxu0 0.0
    %1830 = vmatprep.subr.mxu0 0.0
    %1831 = vmatpush1.msra.mxu0 0.0
    %1832 = vmatprep.subr.mxu0 0.0
    %1833 = vmatpush1.msra.mxu0 0.0
    %1834 = vmatprep.subr.mxu0 0.0
    %1835 = vmatpush1.msra.mxu0 0.0
    %1836 = vmatprep.subr.mxu0 0.0
    %1837 = vmatpush1.msra.mxu0 0.0
    %1838 = vmatprep.subr.mxu0 0.0
    %1839 = vmatpush1.msra.mxu0 0.0
    %1840 = vmatprep.subr.mxu0 0.0
    %1841 = vmatpush1.msra.mxu0 0.0
    %1842 = vmatprep.subr.mxu0 0.0
    %1843 = vmatpush1.msra.mxu0 0.0
    %1844 = vmatprep.subr.mxu0 0.0
    %1845 = vmatpush1.msra.mxu0 0.0
    %1846 = vmatprep.subr.mxu0 0.0
    %1847 = vmatpush1.msra.mxu0 0.0
    %1848 = vmatprep.subr.mxu0 0.0
    %1849 = vmatpush1.msra.mxu0 0.0
    %1850 = vmatprep.subr.mxu0 0.0
    %1851 = vmatpush1.msra.mxu0 0.0
    %1852 = vmatprep.subr.mxu0 0.0
    %1853 = vmatpush1.msra.mxu0 0.0
    %1854 = vmatprep.mubr.f32.mxu0 0.0
    %1855 = vmatmul.mubr.f32.gmra.mrb[0].mxu0 %v1779
    %v1856 = vpop.f32.mrb[0].mxu0
    %v1857 = vadd.f32 %v1760, %v1856
    %v1858 = vpop.f32.mrb[0].mxu0
    %1859 = vmatprep.mubr.f32.mxu0 0.0
    %1860 = vmatmul.mubr.f32.gmra.mrb[0].mxu0 %v1782
    %v1861 = vpop.f32.mrb[0].mxu0
    %v1862 = vadd.f32 %v1765, %v1861
    %v1863 = vpop.f32.mrb[0].mxu0
    %1864 = vmatprep.mubr.f32.mxu0 0.0
    %1865 = vmatmul.mubr.f32.gmra.mrb[0].mxu0 %v1785
    %v1866 = vpop.f32.mrb[0].mxu0
    %v1867 = vadd.f32 %v1770, %v1866
    %v1868 = vpop.f32.mrb[0].mxu0
    %1869 = vmatprep.mubr.f32.mxu0 0.0
    %1870 = vmatmul.mubr.f32.gmra.mrb[0].mxu0 %v1788
    %v1871 = vpop.f32.mrb[0].mxu0
    %v1872 = vadd.f32 %v1775, %v1871
    %v1873 = vpop.f32.mrb[0].mxu0
    %1874 = vdwg.mxu0
    %s1875 = scalar_lea.vmem %s13, 128
    %v1876 = vld [vmem:[%s1875] sm:$0xff]
    %v1877 = vld [vmem:[%s1875 + $0x8] sm:$0xff]
    %v1878 = vld [vmem:[%s1875 + $0x10] sm:$0xff]
    %v1879 = vld [vmem:[%s1875 + $0x18] sm:$0xff]
    %v1880 = vld [vmem:[%s1875 + $0x20] sm:$0xff]
    %v1881 = vld [vmem:[%s1875 + $0x28] sm:$0xff]
    %v1882 = vld [vmem:[%s1875 + $0x30] sm:$0xff]
    %v1883 = vld [vmem:[%s1875 + $0x38] sm:$0xff]
    %v1885 = vsel %vm1680, %v1645, 0
    %v1888 = vsel %vm1680, %v1650, 0
    %v1891 = vsel %vm1680, %v1655, 0
    %v1894 = vsel %vm1680, %v1660, 0
    %1896 = vmatprep.subr.mxu0 0.0
    %1897 = vmatpush1.msra.mxu0 %v1876
    %1898 = vmatprep.subr.mxu0 0.0
    %1899 = vmatpush1.msra.mxu0 %v1877
    %1900 = vmatprep.subr.mxu0 0.0
    %1901 = vmatpush1.msra.mxu0 %v1878
    %1902 = vmatprep.subr.mxu0 0.0
    %1903 = vmatpush1.msra.mxu0 %v1879
    %1904 = vmatprep.subr.mxu0 0.0
    %1905 = vmatpush1.msra.mxu0 %v1880
    %1906 = vmatprep.subr.mxu0 0.0
    %1907 = vmatpush1.msra.mxu0 %v1881
    %1908 = vmatprep.subr.mxu0 0.0
    %1909 = vmatpush1.msra.mxu0 %v1882
    %1910 = vmatprep.subr.mxu0 0.0
    %1911 = vmatpush1.msra.mxu0 %v1883
    %1912 = vmatprep.subr.mxu0 0.0
    %1913 = vmatpush1.msra.mxu0 0.0
    %1914 = vmatprep.subr.mxu0 0.0
    %1915 = vmatpush1.msra.mxu0 0.0
    %1916 = vmatprep.subr.mxu0 0.0
    %1917 = vmatpush1.msra.mxu0 0.0
    %1918 = vmatprep.subr.mxu0 0.0
    %1919 = vmatpush1.msra.mxu0 0.0
    %1920 = vmatprep.subr.mxu0 0.0
    %1921 = vmatpush1.msra.mxu0 0.0
    %1922 = vmatprep.subr.mxu0 0.0
    %1923 = vmatpush1.msra.mxu0 0.0
    %1924 = vmatprep.subr.mxu0 0.0
    %1925 = vmatpush1.msra.mxu0 0.0
    %1926 = vmatprep.subr.mxu0 0.0
    %1927 = vmatpush1.msra.mxu0 0.0
    %1928 = vmatprep.subr.mxu0 0.0
    %1929 = vmatpush1.msra.mxu0 0.0
    %1930 = vmatprep.subr.mxu0 0.0
    %1931 = vmatpush1.msra.mxu0 0.0
    %1932 = vmatprep.subr.mxu0 0.0
    %1933 = vmatpush1.msra.mxu0 0.0
    %1934 = vmatprep.subr.mxu0 0.0
    %1935 = vmatpush1.msra.mxu0 0.0
    %1936 = vmatprep.subr.mxu0 0.0
    %1937 = vmatpush1.msra.mxu0 0.0
    %1938 = vmatprep.subr.mxu0 0.0
    %1939 = vmatpush1.msra.mxu0 0.0
    %1940 = vmatprep.subr.mxu0 0.0
    %1941 = vmatpush1.msra.mxu0 0.0
    %1942 = vmatprep.subr.mxu0 0.0
    %1943 = vmatpush1.msra.mxu0 0.0
    %1944 = vmatprep.subr.mxu0 0.0
    %1945 = vmatpush1.msra.mxu0 0.0
    %1946 = vmatprep.subr.mxu0 0.0
    %1947 = vmatpush1.msra.mxu0 0.0
    %1948 = vmatprep.subr.mxu0 0.0
    %1949 = vmatpush1.msra.mxu0 0.0
    %1950 = vmatprep.subr.mxu0 0.0
    %1951 = vmatpush1.msra.mxu0 0.0
    %1952 = vmatprep.subr.mxu0 0.0
    %1953 = vmatpush1.msra.mxu0 0.0
    %1954 = vmatprep.subr.mxu0 0.0
    %1955 = vmatpush1.msra.mxu0 0.0
    %1956 = vmatprep.subr.mxu0 0.0
    %1957 = vmatpush1.msra.mxu0 0.0
    %1958 = vmatprep.subr.mxu0 0.0
    %1959 = vmatpush1.msra.mxu0 0.0
    %1960 = vmatprep.mubr.f32.mxu0 0.0
    %1961 = vmatmul.mubr.f32.gmra.mrb[0].mxu0 %v1885
    %v1962 = vpop.f32.mrb[0].mxu0
    %v1963 = vadd.f32 0.0, %v1962
    %v1964 = vpop.f32.mrb[0].mxu0
    %1965 = vmatprep.mubr.f32.mxu0 0.0
    %1966 = vmatmul.mubr.f32.gmra.mrb[0].mxu0 %v1888
    %v1967 = vpop.f32.mrb[0].mxu0
    %v1968 = vadd.f32 0.0, %v1967
    %v1969 = vpop.f32.mrb[0].mxu0
    %1970 = vmatprep.mubr.f32.mxu0 0.0
    %1971 = vmatmul.mubr.f32.gmra.mrb[0].mxu0 %v1891
    %v1972 = vpop.f32.mrb[0].mxu0
    %v1973 = vadd.f32 0.0, %v1972
    %v1974 = vpop.f32.mrb[0].mxu0
    %1975 = vmatprep.mubr.f32.mxu0 0.0
    %1976 = vmatmul.mubr.f32.gmra.mrb[0].mxu0 %v1894
    %v1977 = vpop.f32.mrb[0].mxu0
    %v1978 = vadd.f32 0.0, %v1977
    %v1979 = vpop.f32.mrb[0].mxu0
    %1980 = vdwg.mxu0
    %v1981 = vadd.f32 %v1857, %v1963
    %v1982 = vadd.f32 %v1862, %v1968
    %v1983 = vadd.f32 %v1867, %v1973
    %v1984 = vadd.f32 %v1872, %v1978
    %v1985 = vld [vmem:[%s14] sm:$0x1]
    %v1987 = vlaneseq
    %v1988 = vshrl.u32 %v1987, 7
    %v1989 = vsub.s32 0, %v1988
    %v1990 = vrot.slane %v1985, %v1989
    %v1992 = vadd.f32 %v1981, %v1990
    %v1993 = vadd.f32 %v1982, %v1990
    %v1994 = vadd.f32 %v1983, %v1990
    %v1995 = vadd.f32 %v1984, %v1990
    %v1996 = vadd.f32 %v971, %v1992
    %v1997 = vadd.f32 %v972, %v1993
    %v1998 = vadd.f32 %v973, %v1994
    %v1999 = vadd.f32 %v974, %v1995
    %v2000 = vld [vmem:[%s15] sm:$0x1]
    %v2001 = vld [vmem:[%s16] sm:$0x1]
    %v2002 = vsel %vm120, %v1996, 0.0
    %2003 = vadd.xlane.f32.xlu0 %v2002
    %v2004 = vpop.xlane.xlu0 %2003
    %v2005 = vsel %vm120, %v1997, 0.0
    %2006 = vadd.xlane.f32.xlu0 %v2005
    %v2007 = vpop.xlane.xlu0 %2006
    %v2008 = vsel %vm120, %v1998, 0.0
    %2009 = vadd.xlane.f32.xlu0 %v2008
    %v2010 = vpop.xlane.xlu0 %2009
    %v2011 = vsel %vm120, %v1999, 0.0
    %2012 = vadd.xlane.f32.xlu0 %v2011
    %v2013 = vpop.xlane.xlu0 %2012
    %v2014 = vmul.f32 %v2004, %v910
    %v2015 = vmul.f32 %v2007, %v910
    %v2016 = vmul.f32 %v2010, %v910
    %v2017 = vmul.f32 %v2013, %v910
    %v2018 = vsub.f32 %v1996, %v2014
    %v2019 = vsub.f32 %v1997, %v2015
    %v2020 = vsub.f32 %v1998, %v2016
    %v2021 = vsub.f32 %v1999, %v2017
    %v2022 = vmul.f32 %v2018, %v2018
    %v2023 = vmul.f32 %v2019, %v2019
    %v2024 = vmul.f32 %v2020, %v2020
    %v2025 = vmul.f32 %v2021, %v2021
    %v2026 = vsel %vm120, %v2022, 0.0
    %2027 = vadd.xlane.f32.xlu0 %v2026
    %v2028 = vpop.xlane.xlu0 %2027
    %v2029 = vsel %vm120, %v2023, 0.0
    %2030 = vadd.xlane.f32.xlu0 %v2029
    %v2031 = vpop.xlane.xlu0 %2030
    %v2032 = vsel %vm120, %v2024, 0.0
    %2033 = vadd.xlane.f32.xlu0 %v2032
    %v2034 = vpop.xlane.xlu0 %2033
    %v2035 = vsel %vm120, %v2025, 0.0
    %2036 = vadd.xlane.f32.xlu0 %v2035
    %v2037 = vpop.xlane.xlu0 %2036
    %v2038 = vmul.f32 %v2028, %v910
    %v2039 = vmul.f32 %v2031, %v910
    %v2040 = vmul.f32 %v2034, %v910
    %v2041 = vmul.f32 %v2037, %v910
    %v2042 = vadd.f32 %v2038, 1e-05
    %v2043 = vadd.f32 %v2039, 1e-05
    %v2044 = vadd.f32 %v2040, 1e-05
    %v2045 = vadd.f32 %v2041, 1e-05
    %v2046 = vrsqrt.pop %v2042
    %v2047 = vrsqrt.pop %v2043
    %v2048 = vrsqrt.pop %v2044
    %v2049 = vrsqrt.pop %v2045
    %v2050 = vmul.f32 %v2018, %v2046
    %v2051 = vmul.f32 %v2019, %v2047
    %v2052 = vmul.f32 %v2020, %v2048
    %v2053 = vmul.f32 %v2021, %v2049
    %v2055 = vlaneseq
    %v2056 = vshrl.u32 %v2055, 7
    %v2057 = vsub.s32 0, %v2056
    %v2058 = vrot.slane %v2000, %v2057
    %v2060 = vmul.f32 %v2050, %v2058
    %v2061 = vmul.f32 %v2051, %v2058
    %v2062 = vmul.f32 %v2052, %v2058
    %v2063 = vmul.f32 %v2053, %v2058
    %v2065 = vlaneseq
    %v2066 = vshrl.u32 %v2065, 7
    %v2067 = vsub.s32 0, %v2066
    %v2068 = vrot.slane %v2001, %v2067
    %v2070 = vadd.f32 %v2060, %v2068
    %v2071 = vadd.f32 %v2061, %v2068
    %v2072 = vadd.f32 %v2062, %v2068
    %v2073 = vadd.f32 %v2063, %v2068
    %v2074 = vmul.f32 %v2070, %v84
    %v2075 = vmul.f32 %v2071, %v89
    %v2076 = vmul.f32 %v2072, %v94
    %v2077 = vmul.f32 %v2073, %v99
    %s2078 = scalar_lea.vmem %s6, 32
    %v2079 = vld [vmem:[%s2078] sm:$0xff]
    %v2080 = vld [vmem:[%s2078 + $0x8] sm:$0xff]
    %v2081 = vld [vmem:[%s2078 + $0x10] sm:$0xff]
    %v2082 = vld [vmem:[%s2078 + $0x18] sm:$0xff]
    %s2083 = scalar_lea.vmem %s7, 1
    %v2084 = vld [vmem:[%s2083] sm:$0x1]
    %v2086 = vlaneseq
    %v2087 = vshrl.u32 %v2086, 7
    %v2088 = vsub.s32 0, %v2087
    %v2089 = vrot.slane %v2084, %v2088
    %v2092 = vsel %vm120, %v2074, 0
    %v2095 = vsel %vm120, %v2075, 0
    %v2098 = vsel %vm120, %v2076, 0
    %v2101 = vsel %vm120, %v2077, 0
    %2103 = vmatprep.subr.mxu0 0.0
    %2104 = vmatpush1.msra.mxu0 %v2079
    %2105 = vmatprep.subr.mxu0 0.0
    %2106 = vmatpush1.msra.mxu0 %v2080
    %2107 = vmatprep.subr.mxu0 0.0
    %2108 = vmatpush1.msra.mxu0 %v2081
    %2109 = vmatprep.subr.mxu0 0.0
    %2110 = vmatpush1.msra.mxu0 %v2082
    %2111 = vmatprep.subr.mxu0 0.0
    %2112 = vmatpush1.msra.mxu0 0.0
    %2113 = vmatprep.subr.mxu0 0.0
    %2114 = vmatpush1.msra.mxu0 0.0
    %2115 = vmatprep.subr.mxu0 0.0
    %2116 = vmatpush1.msra.mxu0 0.0
    %2117 = vmatprep.subr.mxu0 0.0
    %2118 = vmatpush1.msra.mxu0 0.0
    %2119 = vmatprep.subr.mxu0 0.0
    %2120 = vmatpush1.msra.mxu0 0.0
    %2121 = vmatprep.subr.mxu0 0.0
    %2122 = vmatpush1.msra.mxu0 0.0
    %2123 = vmatprep.subr.mxu0 0.0
    %2124 = vmatpush1.msra.mxu0 0.0
    %2125 = vmatprep.subr.mxu0 0.0
    %2126 = vmatpush1.msra.mxu0 0.0
    %2127 = vmatprep.subr.mxu0 0.0
    %2128 = vmatpush1.msra.mxu0 0.0
    %2129 = vmatprep.subr.mxu0 0.0
    %2130 = vmatpush1.msra.mxu0 0.0
    %2131 = vmatprep.subr.mxu0 0.0
    %2132 = vmatpush1.msra.mxu0 0.0
    %2133 = vmatprep.subr.mxu0 0.0
    %2134 = vmatpush1.msra.mxu0 0.0
    %2135 = vmatprep.subr.mxu0 0.0
    %2136 = vmatpush1.msra.mxu0 0.0
    %2137 = vmatprep.subr.mxu0 0.0
    %2138 = vmatpush1.msra.mxu0 0.0
    %2139 = vmatprep.subr.mxu0 0.0
    %2140 = vmatpush1.msra.mxu0 0.0
    %2141 = vmatprep.subr.mxu0 0.0
    %2142 = vmatpush1.msra.mxu0 0.0
    %2143 = vmatprep.subr.mxu0 0.0
    %2144 = vmatpush1.msra.mxu0 0.0
    %2145 = vmatprep.subr.mxu0 0.0
    %2146 = vmatpush1.msra.mxu0 0.0
    %2147 = vmatprep.subr.mxu0 0.0
    %2148 = vmatpush1.msra.mxu0 0.0
    %2149 = vmatprep.subr.mxu0 0.0
    %2150 = vmatpush1.msra.mxu0 0.0
    %2151 = vmatprep.subr.mxu0 0.0
    %2152 = vmatpush1.msra.mxu0 0.0
    %2153 = vmatprep.subr.mxu0 0.0
    %2154 = vmatpush1.msra.mxu0 0.0
    %2155 = vmatprep.subr.mxu0 0.0
    %2156 = vmatpush1.msra.mxu0 0.0
    %2157 = vmatprep.subr.mxu0 0.0
    %2158 = vmatpush1.msra.mxu0 0.0
    %2159 = vmatprep.subr.mxu0 0.0
    %2160 = vmatpush1.msra.mxu0 0.0
    %2161 = vmatprep.subr.mxu0 0.0
    %2162 = vmatpush1.msra.mxu0 0.0
    %2163 = vmatprep.subr.mxu0 0.0
    %2164 = vmatpush1.msra.mxu0 0.0
    %2165 = vmatprep.subr.mxu0 0.0
    %2166 = vmatpush1.msra.mxu0 0.0
    %2167 = vmatprep.mubr.f32.mxu0 0.0
    %2168 = vmatmul.mubr.f32.gmra.mrb[0].mxu0 %v2092
    %v2169 = vpop.f32.mrb[0].mxu0
    %v2170 = vadd.f32 %v2089, %v2169
    %v2171 = vpop.f32.mrb[0].mxu0
    %2172 = vmatprep.mubr.f32.mxu0 0.0
    %2173 = vmatmul.mubr.f32.gmra.mrb[0].mxu0 %v2095
    %v2174 = vpop.f32.mrb[0].mxu0
    %v2175 = vadd.f32 %v2089, %v2174
    %v2176 = vpop.f32.mrb[0].mxu0
    %2177 = vmatprep.mubr.f32.mxu0 0.0
    %2178 = vmatmul.mubr.f32.gmra.mrb[0].mxu0 %v2098
    %v2179 = vpop.f32.mrb[0].mxu0
    %v2180 = vadd.f32 %v2089, %v2179
    %v2181 = vpop.f32.mrb[0].mxu0
    %2182 = vmatprep.mubr.f32.mxu0 0.0
    %2183 = vmatmul.mubr.f32.gmra.mrb[0].mxu0 %v2101
    %v2184 = vpop.f32.mrb[0].mxu0
    %v2185 = vadd.f32 %v2089, %v2184
    %v2186 = vpop.f32.mrb[0].mxu0
    %2187 = vdwg.mxu0
    %2192 = vrot.lane.b32.xlu0 %v2170, 96
    %v2193 = vpop.permute.xlu0 %2192
    %2194 = vrot.lane.b32.xlu0 %v2175, 96
    %v2195 = vpop.permute.xlu0 %2194
    %2196 = vrot.lane.b32.xlu0 %v2180, 96
    %v2197 = vpop.permute.xlu0 %2196
    %2198 = vrot.lane.b32.xlu0 %v2185, 96
    %v2199 = vpop.permute.xlu0 %2198
    %v2200 = vsel %vm230, %v2170, 0
    %v2202 = vsel %vm230, %v2175, 0
    %v2204 = vsel %vm230, %v2180, 0
    %v2206 = vsel %vm230, %v2185, 0
    %v2208 = vsel %vm230, %v2193, 0
    %v2210 = vsel %vm230, %v2195, 0
    %v2212 = vsel %vm230, %v2197, 0
    %v2214 = vsel %vm230, %v2199, 0
    %2216 = vmatprep.subr.mxu0 0.0
    %2217 = vmatpush1.xpose.msra.mxu0 %v2208
    %2218 = vmatprep.subr.mxu0 0.0
    %2219 = vmatpush1.xpose.msra.mxu0 %v2210
    %2220 = vmatprep.subr.mxu0 0.0
    %2221 = vmatpush1.xpose.msra.mxu0 %v2212
    %2222 = vmatprep.subr.mxu0 0.0
    %2223 = vmatpush1.xpose.msra.mxu0 %v2214
    %2224 = vmatprep.subr.mxu0 0.0
    %2225 = vmatpush1.xpose.msra.mxu0 0.0
    %2226 = vmatprep.subr.mxu0 0.0
    %2227 = vmatpush1.xpose.msra.mxu0 0.0
    %2228 = vmatprep.subr.mxu0 0.0
    %2229 = vmatpush1.xpose.msra.mxu0 0.0
    %2230 = vmatprep.subr.mxu0 0.0
    %2231 = vmatpush1.xpose.msra.mxu0 0.0
    %2232 = vmatprep.subr.mxu0 0.0
    %2233 = vmatpush1.xpose.msra.mxu0 0.0
    %2234 = vmatprep.subr.mxu0 0.0
    %2235 = vmatpush1.xpose.msra.mxu0 0.0
    %2236 = vmatprep.subr.mxu0 0.0
    %2237 = vmatpush1.xpose.msra.mxu0 0.0
    %2238 = vmatprep.subr.mxu0 0.0
    %2239 = vmatpush1.xpose.msra.mxu0 0.0
    %2240 = vmatprep.subr.mxu0 0.0
    %2241 = vmatpush1.xpose.msra.mxu0 0.0
    %2242 = vmatprep.subr.mxu0 0.0
    %2243 = vmatpush1.xpose.msra.mxu0 0.0
    %2244 = vmatprep.subr.mxu0 0.0
    %2245 = vmatpush1.xpose.msra.mxu0 0.0
    %2246 = vmatprep.subr.mxu0 0.0
    %2247 = vmatpush1.xpose.msra.mxu0 0.0
    %2248 = vmatprep.subr.mxu0 0.0
    %2249 = vmatpush1.xpose.msra.mxu0 0.0
    %2250 = vmatprep.subr.mxu0 0.0
    %2251 = vmatpush1.xpose.msra.mxu0 0.0
    %2252 = vmatprep.subr.mxu0 0.0
    %2253 = vmatpush1.xpose.msra.mxu0 0.0
    %2254 = vmatprep.subr.mxu0 0.0
    %2255 = vmatpush1.xpose.msra.mxu0 0.0
    %2256 = vmatprep.subr.mxu0 0.0
    %2257 = vmatpush1.xpose.msra.mxu0 0.0
    %2258 = vmatprep.subr.mxu0 0.0
    %2259 = vmatpush1.xpose.msra.mxu0 0.0
    %2260 = vmatprep.subr.mxu0 0.0
    %2261 = vmatpush1.xpose.msra.mxu0 0.0
    %2262 = vmatprep.subr.mxu0 0.0
    %2263 = vmatpush1.xpose.msra.mxu0 0.0
    %2264 = vmatprep.subr.mxu0 0.0
    %2265 = vmatpush1.xpose.msra.mxu0 0.0
    %2266 = vmatprep.subr.mxu0 0.0
    %2267 = vmatpush1.xpose.msra.mxu0 0.0
    %2268 = vmatprep.subr.mxu0 0.0
    %2269 = vmatpush1.xpose.msra.mxu0 0.0
    %2270 = vmatprep.subr.mxu0 0.0
    %2271 = vmatpush1.xpose.msra.mxu0 0.0
    %2272 = vmatprep.subr.mxu0 0.0
    %2273 = vmatpush1.xpose.msra.mxu0 0.0
    %2274 = vmatprep.subr.mxu0 0.0
    %2275 = vmatpush1.xpose.msra.mxu0 0.0
    %2276 = vmatprep.subr.mxu0 0.0
    %2277 = vmatpush1.xpose.msra.mxu0 0.0
    %2278 = vmatprep.subr.mxu0 0.0
    %2279 = vmatpush1.xpose.msra.mxu0 0.0
    %2280 = vmatprep.mubr.f32.mxu0 0.0
    %2281 = vmatmul.mubr.f32.gmra.mrb[0].mxu0 %v2200
    %v2282 = vpop.f32.mrb[0].mxu0
    %v2283 = vadd.f32 0.0, %v2282
    %v2284 = vpop.f32.mrb[0].mxu0
    %2285 = vmatprep.mubr.f32.mxu0 0.0
    %2286 = vmatmul.mubr.f32.gmra.mrb[0].mxu0 %v2202
    %v2287 = vpop.f32.mrb[0].mxu0
    %v2288 = vadd.f32 0.0, %v2287
    %v2289 = vpop.f32.mrb[0].mxu0
    %2290 = vmatprep.mubr.f32.mxu0 0.0
    %2291 = vmatmul.mubr.f32.gmra.mrb[0].mxu0 %v2204
    %v2292 = vpop.f32.mrb[0].mxu0
    %v2293 = vadd.f32 0.0, %v2292
    %v2294 = vpop.f32.mrb[0].mxu0
    %2295 = vmatprep.mubr.f32.mxu0 0.0
    %2296 = vmatmul.mubr.f32.gmra.mrb[0].mxu0 %v2206
    %v2297 = vpop.f32.mrb[0].mxu0
    %v2298 = vadd.f32 0.0, %v2297
    %v2299 = vpop.f32.mrb[0].mxu0
    %2300 = vdwg.mxu0
    %v2301 = vmul.f32 %v2283, 0.25
    %v2302 = vmul.f32 %v2288, 0.25
    %v2303 = vmul.f32 %v2293, 0.25
    %v2304 = vmul.f32 %v2298, 0.25
    %v2305 = vadd.f32 %v2301, %v61
    %v2306 = vadd.f32 %v2302, %v62
    %v2307 = vadd.f32 %v2303, %v63
    %v2308 = vadd.f32 %v2304, %v64
    %v2309 = vsel %vm120, %v2305, -inf
    %2310 = vmax.xlane.f32.xlu0 %v2309
    %v2311 = vpop.xlane.xlu0 %2310
    %v2312 = vsel %vm120, %v2306, -inf
    %2313 = vmax.xlane.f32.xlu0 %v2312
    %v2314 = vpop.xlane.xlu0 %2313
    %v2315 = vsel %vm120, %v2307, -inf
    %2316 = vmax.xlane.f32.xlu0 %v2315
    %v2317 = vpop.xlane.xlu0 %2316
    %v2318 = vsel %vm120, %v2308, -inf
    %2319 = vmax.xlane.f32.xlu0 %v2318
    %v2320 = vpop.xlane.xlu0 %2319
    %v2321 = vsub.f32 %v2305, %v2311
    %v2322 = vsub.f32 %v2306, %v2314
    %v2323 = vsub.f32 %v2307, %v2317
    %v2324 = vsub.f32 %v2308, %v2320
    %v2325 = vmul.f32 %v2321, 1.442695
    %v2326 = vpow.pop %v2325
    %v2327 = vmul.f32 %v2322, 1.442695
    %v2328 = vpow.pop %v2327
    %v2329 = vmul.f32 %v2323, 1.442695
    %v2330 = vpow.pop %v2329
    %v2331 = vmul.f32 %v2324, 1.442695
    %v2332 = vpow.pop %v2331
    %v2333 = vsel %vm120, %v2326, 0.0
    %2334 = vadd.xlane.f32.xlu0 %v2333
    %v2335 = vpop.xlane.xlu0 %2334
    %v2336 = vsel %vm120, %v2328, 0.0
    %2337 = vadd.xlane.f32.xlu0 %v2336
    %v2338 = vpop.xlane.xlu0 %2337
    %v2339 = vsel %vm120, %v2330, 0.0
    %2340 = vadd.xlane.f32.xlu0 %v2339
    %v2341 = vpop.xlane.xlu0 %2340
    %v2342 = vsel %vm120, %v2332, 0.0
    %2343 = vadd.xlane.f32.xlu0 %v2342
    %v2344 = vpop.xlane.xlu0 %2343
    %v2345 = vrcp.pop %v2335
    %v2346 = vrcp.pop %v2338
    %v2347 = vrcp.pop %v2341
    %v2348 = vrcp.pop %v2344
    %v2349 = vmul.f32 %v2326, %v2345
    %v2350 = vmul.f32 %v2328, %v2346
    %v2351 = vmul.f32 %v2330, %v2347
    %v2352 = vmul.f32 %v2332, %v2348
    %2353 = vrot.lane.b32.xlu0 %v2170, 64
    %v2354 = vpop.permute.xlu0 %2353
    %2355 = vrot.lane.b32.xlu0 %v2175, 64
    %v2356 = vpop.permute.xlu0 %2355
    %2357 = vrot.lane.b32.xlu0 %v2180, 64
    %v2358 = vpop.permute.xlu0 %2357
    %2359 = vrot.lane.b32.xlu0 %v2185, 64
    %v2360 = vpop.permute.xlu0 %2359
    %v2366 = vsel %vm120, %v2349, 0
    %v2369 = vsel %vm120, %v2350, 0
    %v2372 = vsel %vm120, %v2351, 0
    %v2375 = vsel %vm120, %v2352, 0
    %2377 = vmatprep.subr.mxu0 0.0
    %2378 = vmatpush1.msra.mxu0 %v2354
    %2379 = vmatprep.subr.mxu0 0.0
    %2380 = vmatpush1.msra.mxu0 %v2356
    %2381 = vmatprep.subr.mxu0 0.0
    %2382 = vmatpush1.msra.mxu0 %v2358
    %2383 = vmatprep.subr.mxu0 0.0
    %2384 = vmatpush1.msra.mxu0 %v2360
    %2385 = vmatprep.subr.mxu0 0.0
    %2386 = vmatpush1.msra.mxu0 0.0
    %2387 = vmatprep.subr.mxu0 0.0
    %2388 = vmatpush1.msra.mxu0 0.0
    %2389 = vmatprep.subr.mxu0 0.0
    %2390 = vmatpush1.msra.mxu0 0.0
    %2391 = vmatprep.subr.mxu0 0.0
    %2392 = vmatpush1.msra.mxu0 0.0
    %2393 = vmatprep.subr.mxu0 0.0
    %2394 = vmatpush1.msra.mxu0 0.0
    %2395 = vmatprep.subr.mxu0 0.0
    %2396 = vmatpush1.msra.mxu0 0.0
    %2397 = vmatprep.subr.mxu0 0.0
    %2398 = vmatpush1.msra.mxu0 0.0
    %2399 = vmatprep.subr.mxu0 0.0
    %2400 = vmatpush1.msra.mxu0 0.0
    %2401 = vmatprep.subr.mxu0 0.0
    %2402 = vmatpush1.msra.mxu0 0.0
    %2403 = vmatprep.subr.mxu0 0.0
    %2404 = vmatpush1.msra.mxu0 0.0
    %2405 = vmatprep.subr.mxu0 0.0
    %2406 = vmatpush1.msra.mxu0 0.0
    %2407 = vmatprep.subr.mxu0 0.0
    %2408 = vmatpush1.msra.mxu0 0.0
    %2409 = vmatprep.subr.mxu0 0.0
    %2410 = vmatpush1.msra.mxu0 0.0
    %2411 = vmatprep.subr.mxu0 0.0
    %2412 = vmatpush1.msra.mxu0 0.0
    %2413 = vmatprep.subr.mxu0 0.0
    %2414 = vmatpush1.msra.mxu0 0.0
    %2415 = vmatprep.subr.mxu0 0.0
    %2416 = vmatpush1.msra.mxu0 0.0
    %2417 = vmatprep.subr.mxu0 0.0
    %2418 = vmatpush1.msra.mxu0 0.0
    %2419 = vmatprep.subr.mxu0 0.0
    %2420 = vmatpush1.msra.mxu0 0.0
    %2421 = vmatprep.subr.mxu0 0.0
    %2422 = vmatpush1.msra.mxu0 0.0
    %2423 = vmatprep.subr.mxu0 0.0
    %2424 = vmatpush1.msra.mxu0 0.0
    %2425 = vmatprep.subr.mxu0 0.0
    %2426 = vmatpush1.msra.mxu0 0.0
    %2427 = vmatprep.subr.mxu0 0.0
    %2428 = vmatpush1.msra.mxu0 0.0
    %2429 = vmatprep.subr.mxu0 0.0
    %2430 = vmatpush1.msra.mxu0 0.0
    %2431 = vmatprep.subr.mxu0 0.0
    %2432 = vmatpush1.msra.mxu0 0.0
    %2433 = vmatprep.subr.mxu0 0.0
    %2434 = vmatpush1.msra.mxu0 0.0
    %2435 = vmatprep.subr.mxu0 0.0
    %2436 = vmatpush1.msra.mxu0 0.0
    %2437 = vmatprep.subr.mxu0 0.0
    %2438 = vmatpush1.msra.mxu0 0.0
    %2439 = vmatprep.subr.mxu0 0.0
    %2440 = vmatpush1.msra.mxu0 0.0
    %2441 = vmatprep.mubr.f32.mxu0 0.0
    %2442 = vmatmul.mubr.f32.gmra.mrb[0].mxu0 %v2366
    %v2443 = vpop.f32.mrb[0].mxu0
    %v2444 = vadd.f32 0.0, %v2443
    %v2445 = vpop.f32.mrb[0].mxu0
    %2446 = vmatprep.mubr.f32.mxu0 0.0
    %2447 = vmatmul.mubr.f32.gmra.mrb[0].mxu0 %v2369
    %v2448 = vpop.f32.mrb[0].mxu0
    %v2449 = vadd.f32 0.0, %v2448
    %v2450 = vpop.f32.mrb[0].mxu0
    %2451 = vmatprep.mubr.f32.mxu0 0.0
    %2452 = vmatmul.mubr.f32.gmra.mrb[0].mxu0 %v2372
    %v2453 = vpop.f32.mrb[0].mxu0
    %v2454 = vadd.f32 0.0, %v2453
    %v2455 = vpop.f32.mrb[0].mxu0
    %2456 = vmatprep.mubr.f32.mxu0 0.0
    %2457 = vmatmul.mubr.f32.gmra.mrb[0].mxu0 %v2375
    %v2458 = vpop.f32.mrb[0].mxu0
    %v2459 = vadd.f32 0.0, %v2458
    %v2460 = vpop.f32.mrb[0].mxu0
    %2461 = vdwg.mxu0
    %2462 = vrot.lane.b32.xlu0 %v2170, 112
    %v2463 = vpop.permute.xlu0 %2462
    %2464 = vrot.lane.b32.xlu0 %v2175, 112
    %v2465 = vpop.permute.xlu0 %2464
    %2466 = vrot.lane.b32.xlu0 %v2180, 112
    %v2467 = vpop.permute.xlu0 %2466
    %2468 = vrot.lane.b32.xlu0 %v2185, 112
    %v2469 = vpop.permute.xlu0 %2468
    %2470 = vrot.lane.b32.xlu0 %v2170, 80
    %v2471 = vpop.permute.xlu0 %2470
    %2472 = vrot.lane.b32.xlu0 %v2175, 80
    %v2473 = vpop.permute.xlu0 %2472
    %2474 = vrot.lane.b32.xlu0 %v2180, 80
    %v2475 = vpop.permute.xlu0 %2474
    %2476 = vrot.lane.b32.xlu0 %v2185, 80
    %v2477 = vpop.permute.xlu0 %2476
    %v2478 = vsel %vm230, %v2463, 0
    %v2480 = vsel %vm230, %v2465, 0
    %v2482 = vsel %vm230, %v2467, 0
    %v2484 = vsel %vm230, %v2469, 0
    %v2486 = vsel %vm230, %v2471, 0
    %v2488 = vsel %vm230, %v2473, 0
    %v2490 = vsel %vm230, %v2475, 0
    %v2492 = vsel %vm230, %v2477, 0
    %2494 = vmatprep.subr.mxu0 0.0
    %2495 = vmatpush1.xpose.msra.mxu0 %v2486
    %2496 = vmatprep.subr.mxu0 0.0
    %2497 = vmatpush1.xpose.msra.mxu0 %v2488
    %2498 = vmatprep.subr.mxu0 0.0
    %2499 = vmatpush1.xpose.msra.mxu0 %v2490
    %2500 = vmatprep.subr.mxu0 0.0
    %2501 = vmatpush1.xpose.msra.mxu0 %v2492
    %2502 = vmatprep.subr.mxu0 0.0
    %2503 = vmatpush1.xpose.msra.mxu0 0.0
    %2504 = vmatprep.subr.mxu0 0.0
    %2505 = vmatpush1.xpose.msra.mxu0 0.0
    %2506 = vmatprep.subr.mxu0 0.0
    %2507 = vmatpush1.xpose.msra.mxu0 0.0
    %2508 = vmatprep.subr.mxu0 0.0
    %2509 = vmatpush1.xpose.msra.mxu0 0.0
    %2510 = vmatprep.subr.mxu0 0.0
    %2511 = vmatpush1.xpose.msra.mxu0 0.0
    %2512 = vmatprep.subr.mxu0 0.0
    %2513 = vmatpush1.xpose.msra.mxu0 0.0
    %2514 = vmatprep.subr.mxu0 0.0
    %2515 = vmatpush1.xpose.msra.mxu0 0.0
    %2516 = vmatprep.subr.mxu0 0.0
    %2517 = vmatpush1.xpose.msra.mxu0 0.0
    %2518 = vmatprep.subr.mxu0 0.0
    %2519 = vmatpush1.xpose.msra.mxu0 0.0
    %2520 = vmatprep.subr.mxu0 0.0
    %2521 = vmatpush1.xpose.msra.mxu0 0.0
    %2522 = vmatprep.subr.mxu0 0.0
    %2523 = vmatpush1.xpose.msra.mxu0 0.0
    %2524 = vmatprep.subr.mxu0 0.0
    %2525 = vmatpush1.xpose.msra.mxu0 0.0
    %2526 = vmatprep.subr.mxu0 0.0
    %2527 = vmatpush1.xpose.msra.mxu0 0.0
    %2528 = vmatprep.subr.mxu0 0.0
    %2529 = vmatpush1.xpose.msra.mxu0 0.0
    %2530 = vmatprep.subr.mxu0 0.0
    %2531 = vmatpush1.xpose.msra.mxu0 0.0
    %2532 = vmatprep.subr.mxu0 0.0
    %2533 = vmatpush1.xpose.msra.mxu0 0.0
    %2534 = vmatprep.subr.mxu0 0.0
    %2535 = vmatpush1.xpose.msra.mxu0 0.0
    %2536 = vmatprep.subr.mxu0 0.0
    %2537 = vmatpush1.xpose.msra.mxu0 0.0
    %2538 = vmatprep.subr.mxu0 0.0
    %2539 = vmatpush1.xpose.msra.mxu0 0.0
    %2540 = vmatprep.subr.mxu0 0.0
    %2541 = vmatpush1.xpose.msra.mxu0 0.0
    %2542 = vmatprep.subr.mxu0 0.0
    %2543 = vmatpush1.xpose.msra.mxu0 0.0
    %2544 = vmatprep.subr.mxu0 0.0
    %2545 = vmatpush1.xpose.msra.mxu0 0.0
    %2546 = vmatprep.subr.mxu0 0.0
    %2547 = vmatpush1.xpose.msra.mxu0 0.0
    %2548 = vmatprep.subr.mxu0 0.0
    %2549 = vmatpush1.xpose.msra.mxu0 0.0
    %2550 = vmatprep.subr.mxu0 0.0
    %2551 = vmatpush1.xpose.msra.mxu0 0.0
    %2552 = vmatprep.subr.mxu0 0.0
    %2553 = vmatpush1.xpose.msra.mxu0 0.0
    %2554 = vmatprep.subr.mxu0 0.0
    %2555 = vmatpush1.xpose.msra.mxu0 0.0
    %2556 = vmatprep.subr.mxu0 0.0
    %2557 = vmatpush1.xpose.msra.mxu0 0.0
    %2558 = vmatprep.mubr.f32.mxu0 0.0
    %2559 = vmatmul.mubr.f32.gmra.mrb[0].mxu0 %v2478
    %v2560 = vpop.f32.mrb[0].mxu0
    %v2561 = vadd.f32 0.0, %v2560
    %v2562 = vpop.f32.mrb[0].mxu0
    %2563 = vmatprep.mubr.f32.mxu0 0.0
    %2564 = vmatmul.mubr.f32.gmra.mrb[0].mxu0 %v2480
    %v2565 = vpop.f32.mrb[0].mxu0
    %v2566 = vadd.f32 0.0, %v2565
    %v2567 = vpop.f32.mrb[0].mxu0
    %2568 = vmatprep.mubr.f32.mxu0 0.0
    %2569 = vmatmul.mubr.f32.gmra.mrb[0].mxu0 %v2482
    %v2570 = vpop.f32.mrb[0].mxu0
    %v2571 = vadd.f32 0.0, %v2570
    %v2572 = vpop.f32.mrb[0].mxu0
    %2573 = vmatprep.mubr.f32.mxu0 0.0
    %2574 = vmatmul.mubr.f32.gmra.mrb[0].mxu0 %v2484
    %v2575 = vpop.f32.mrb[0].mxu0
    %v2576 = vadd.f32 0.0, %v2575
    %v2577 = vpop.f32.mrb[0].mxu0
    %2578 = vdwg.mxu0
    %v2579 = vmul.f32 %v2561, 0.25
    %v2580 = vmul.f32 %v2566, 0.25
    %v2581 = vmul.f32 %v2571, 0.25
    %v2582 = vmul.f32 %v2576, 0.25
    %v2583 = vadd.f32 %v2579, %v61
    %v2584 = vadd.f32 %v2580, %v62
    %v2585 = vadd.f32 %v2581, %v63
    %v2586 = vadd.f32 %v2582, %v64
    %v2587 = vsel %vm120, %v2583, -inf
    %2588 = vmax.xlane.f32.xlu0 %v2587
    %v2589 = vpop.xlane.xlu0 %2588
    %v2590 = vsel %vm120, %v2584, -inf
    %2591 = vmax.xlane.f32.xlu0 %v2590
    %v2592 = vpop.xlane.xlu0 %2591
    %v2593 = vsel %vm120, %v2585, -inf
    %2594 = vmax.xlane.f32.xlu0 %v2593
    %v2595 = vpop.xlane.xlu0 %2594
    %v2596 = vsel %vm120, %v2586, -inf
    %2597 = vmax.xlane.f32.xlu0 %v2596
    %v2598 = vpop.xlane.xlu0 %2597
    %v2599 = vsub.f32 %v2583, %v2589
    %v2600 = vsub.f32 %v2584, %v2592
    %v2601 = vsub.f32 %v2585, %v2595
    %v2602 = vsub.f32 %v2586, %v2598
    %v2603 = vmul.f32 %v2599, 1.442695
    %v2604 = vpow.pop %v2603
    %v2605 = vmul.f32 %v2600, 1.442695
    %v2606 = vpow.pop %v2605
    %v2607 = vmul.f32 %v2601, 1.442695
    %v2608 = vpow.pop %v2607
    %v2609 = vmul.f32 %v2602, 1.442695
    %v2610 = vpow.pop %v2609
    %v2611 = vsel %vm120, %v2604, 0.0
    %2612 = vadd.xlane.f32.xlu0 %v2611
    %v2613 = vpop.xlane.xlu0 %2612
    %v2614 = vsel %vm120, %v2606, 0.0
    %2615 = vadd.xlane.f32.xlu0 %v2614
    %v2616 = vpop.xlane.xlu0 %2615
    %v2617 = vsel %vm120, %v2608, 0.0
    %2618 = vadd.xlane.f32.xlu0 %v2617
    %v2619 = vpop.xlane.xlu0 %2618
    %v2620 = vsel %vm120, %v2610, 0.0
    %2621 = vadd.xlane.f32.xlu0 %v2620
    %v2622 = vpop.xlane.xlu0 %2621
    %v2623 = vrcp.pop %v2613
    %v2624 = vrcp.pop %v2616
    %v2625 = vrcp.pop %v2619
    %v2626 = vrcp.pop %v2622
    %v2627 = vmul.f32 %v2604, %v2623
    %v2628 = vmul.f32 %v2606, %v2624
    %v2629 = vmul.f32 %v2608, %v2625
    %v2630 = vmul.f32 %v2610, %v2626
    %2631 = vrot.lane.b32.xlu0 %v2170, 48
    %v2632 = vpop.permute.xlu0 %2631
    %2633 = vrot.lane.b32.xlu0 %v2175, 48
    %v2634 = vpop.permute.xlu0 %2633
    %2635 = vrot.lane.b32.xlu0 %v2180, 48
    %v2636 = vpop.permute.xlu0 %2635
    %2637 = vrot.lane.b32.xlu0 %v2185, 48
    %v2638 = vpop.permute.xlu0 %2637
    %v2644 = vsel %vm120, %v2627, 0
    %v2647 = vsel %vm120, %v2628, 0
    %v2650 = vsel %vm120, %v2629, 0
    %v2653 = vsel %vm120, %v2630, 0
    %2655 = vmatprep.subr.mxu0 0.0
    %2656 = vmatpush1.msra.mxu0 %v2632
    %2657 = vmatprep.subr.mxu0 0.0
    %2658 = vmatpush1.msra.mxu0 %v2634
    %2659 = vmatprep.subr.mxu0 0.0
    %2660 = vmatpush1.msra.mxu0 %v2636
    %2661 = vmatprep.subr.mxu0 0.0
    %2662 = vmatpush1.msra.mxu0 %v2638
    %2663 = vmatprep.subr.mxu0 0.0
    %2664 = vmatpush1.msra.mxu0 0.0
    %2665 = vmatprep.subr.mxu0 0.0
    %2666 = vmatpush1.msra.mxu0 0.0
    %2667 = vmatprep.subr.mxu0 0.0
    %2668 = vmatpush1.msra.mxu0 0.0
    %2669 = vmatprep.subr.mxu0 0.0
    %2670 = vmatpush1.msra.mxu0 0.0
    %2671 = vmatprep.subr.mxu0 0.0
    %2672 = vmatpush1.msra.mxu0 0.0
    %2673 = vmatprep.subr.mxu0 0.0
    %2674 = vmatpush1.msra.mxu0 0.0
    %2675 = vmatprep.subr.mxu0 0.0
    %2676 = vmatpush1.msra.mxu0 0.0
    %2677 = vmatprep.subr.mxu0 0.0
    %2678 = vmatpush1.msra.mxu0 0.0
    %2679 = vmatprep.subr.mxu0 0.0
    %2680 = vmatpush1.msra.mxu0 0.0
    %2681 = vmatprep.subr.mxu0 0.0
    %2682 = vmatpush1.msra.mxu0 0.0
    %2683 = vmatprep.subr.mxu0 0.0
    %2684 = vmatpush1.msra.mxu0 0.0
    %2685 = vmatprep.subr.mxu0 0.0
    %2686 = vmatpush1.msra.mxu0 0.0
    %2687 = vmatprep.subr.mxu0 0.0
    %2688 = vmatpush1.msra.mxu0 0.0
    %2689 = vmatprep.subr.mxu0 0.0
    %2690 = vmatpush1.msra.mxu0 0.0
    %2691 = vmatprep.subr.mxu0 0.0
    %2692 = vmatpush1.msra.mxu0 0.0
    %2693 = vmatprep.subr.mxu0 0.0
    %2694 = vmatpush1.msra.mxu0 0.0
    %2695 = vmatprep.subr.mxu0 0.0
    %2696 = vmatpush1.msra.mxu0 0.0
    %2697 = vmatprep.subr.mxu0 0.0
    %2698 = vmatpush1.msra.mxu0 0.0
    %2699 = vmatprep.subr.mxu0 0.0
    %2700 = vmatpush1.msra.mxu0 0.0
    %2701 = vmatprep.subr.mxu0 0.0
    %2702 = vmatpush1.msra.mxu0 0.0
    %2703 = vmatprep.subr.mxu0 0.0
    %2704 = vmatpush1.msra.mxu0 0.0
    %2705 = vmatprep.subr.mxu0 0.0
    %2706 = vmatpush1.msra.mxu0 0.0
    %2707 = vmatprep.subr.mxu0 0.0
    %2708 = vmatpush1.msra.mxu0 0.0
    %2709 = vmatprep.subr.mxu0 0.0
    %2710 = vmatpush1.msra.mxu0 0.0
    %2711 = vmatprep.subr.mxu0 0.0
    %2712 = vmatpush1.msra.mxu0 0.0
    %2713 = vmatprep.subr.mxu0 0.0
    %2714 = vmatpush1.msra.mxu0 0.0
    %2715 = vmatprep.subr.mxu0 0.0
    %2716 = vmatpush1.msra.mxu0 0.0
    %2717 = vmatprep.subr.mxu0 0.0
    %2718 = vmatpush1.msra.mxu0 0.0
    %2719 = vmatprep.mubr.f32.mxu0 0.0
    %2720 = vmatmul.mubr.f32.gmra.mrb[0].mxu0 %v2644
    %v2721 = vpop.f32.mrb[0].mxu0
    %v2722 = vadd.f32 0.0, %v2721
    %v2723 = vpop.f32.mrb[0].mxu0
    %2724 = vmatprep.mubr.f32.mxu0 0.0
    %2725 = vmatmul.mubr.f32.gmra.mrb[0].mxu0 %v2647
    %v2726 = vpop.f32.mrb[0].mxu0
    %v2727 = vadd.f32 0.0, %v2726
    %v2728 = vpop.f32.mrb[0].mxu0
    %2729 = vmatprep.mubr.f32.mxu0 0.0
    %2730 = vmatmul.mubr.f32.gmra.mrb[0].mxu0 %v2650
    %v2731 = vpop.f32.mrb[0].mxu0
    %v2732 = vadd.f32 0.0, %v2731
    %v2733 = vpop.f32.mrb[0].mxu0
    %2734 = vmatprep.mubr.f32.mxu0 0.0
    %2735 = vmatmul.mubr.f32.gmra.mrb[0].mxu0 %v2653
    %v2736 = vpop.f32.mrb[0].mxu0
    %v2737 = vadd.f32 0.0, %v2736
    %v2738 = vpop.f32.mrb[0].mxu0
    %2739 = vdwg.mxu0
    %2744 = vrot.lane.b32.xlu0 %v2722, 16
    %v2745 = vpop.permute.xlu0 %2744
    %2746 = vrot.lane.b32.xlu0 %v2727, 16
    %v2747 = vpop.permute.xlu0 %2746
    %2748 = vrot.lane.b32.xlu0 %v2732, 16
    %v2749 = vpop.permute.xlu0 %2748
    %2750 = vrot.lane.b32.xlu0 %v2737, 16
    %v2751 = vpop.permute.xlu0 %2750
    %v2756 = vsel %vm230, %v2444, %v2745
    %v2757 = vsel %vm230, %v2449, %v2747
    %v2758 = vsel %vm230, %v2454, %v2749
    %v2759 = vsel %vm230, %v2459, %v2751
    %s2760 = scalar_lea.vmem %s8, 32
    %v2761 = vld [vmem:[%s2760] sm:$0xff]
    %v2762 = vld [vmem:[%s2760 + $0x8] sm:$0xff]
    %v2763 = vld [vmem:[%s2760 + $0x10] sm:$0xff]
    %v2764 = vld [vmem:[%s2760 + $0x18] sm:$0xff]
    %v2766 = vsel %vm120, %v2756, 0
    %v2769 = vsel %vm120, %v2757, 0
    %v2772 = vsel %vm120, %v2758, 0
    %v2775 = vsel %vm120, %v2759, 0
    %2777 = vmatprep.subr.mxu0 0.0
    %2778 = vmatpush1.msra.mxu0 %v2761
    %2779 = vmatprep.subr.mxu0 0.0
    %2780 = vmatpush1.msra.mxu0 %v2762
    %2781 = vmatprep.subr.mxu0 0.0
    %2782 = vmatpush1.msra.mxu0 %v2763
    %2783 = vmatprep.subr.mxu0 0.0
    %2784 = vmatpush1.msra.mxu0 %v2764
    %2785 = vmatprep.subr.mxu0 0.0
    %2786 = vmatpush1.msra.mxu0 0.0
    %2787 = vmatprep.subr.mxu0 0.0
    %2788 = vmatpush1.msra.mxu0 0.0
    %2789 = vmatprep.subr.mxu0 0.0
    %2790 = vmatpush1.msra.mxu0 0.0
    %2791 = vmatprep.subr.mxu0 0.0
    %2792 = vmatpush1.msra.mxu0 0.0
    %2793 = vmatprep.subr.mxu0 0.0
    %2794 = vmatpush1.msra.mxu0 0.0
    %2795 = vmatprep.subr.mxu0 0.0
    %2796 = vmatpush1.msra.mxu0 0.0
    %2797 = vmatprep.subr.mxu0 0.0
    %2798 = vmatpush1.msra.mxu0 0.0
    %2799 = vmatprep.subr.mxu0 0.0
    %2800 = vmatpush1.msra.mxu0 0.0
    %2801 = vmatprep.subr.mxu0 0.0
    %2802 = vmatpush1.msra.mxu0 0.0
    %2803 = vmatprep.subr.mxu0 0.0
    %2804 = vmatpush1.msra.mxu0 0.0
    %2805 = vmatprep.subr.mxu0 0.0
    %2806 = vmatpush1.msra.mxu0 0.0
    %2807 = vmatprep.subr.mxu0 0.0
    %2808 = vmatpush1.msra.mxu0 0.0
    %2809 = vmatprep.subr.mxu0 0.0
    %2810 = vmatpush1.msra.mxu0 0.0
    %2811 = vmatprep.subr.mxu0 0.0
    %2812 = vmatpush1.msra.mxu0 0.0
    %2813 = vmatprep.subr.mxu0 0.0
    %2814 = vmatpush1.msra.mxu0 0.0
    %2815 = vmatprep.subr.mxu0 0.0
    %2816 = vmatpush1.msra.mxu0 0.0
    %2817 = vmatprep.subr.mxu0 0.0
    %2818 = vmatpush1.msra.mxu0 0.0
    %2819 = vmatprep.subr.mxu0 0.0
    %2820 = vmatpush1.msra.mxu0 0.0
    %2821 = vmatprep.subr.mxu0 0.0
    %2822 = vmatpush1.msra.mxu0 0.0
    %2823 = vmatprep.subr.mxu0 0.0
    %2824 = vmatpush1.msra.mxu0 0.0
    %2825 = vmatprep.subr.mxu0 0.0
    %2826 = vmatpush1.msra.mxu0 0.0
    %2827 = vmatprep.subr.mxu0 0.0
    %2828 = vmatpush1.msra.mxu0 0.0
    %2829 = vmatprep.subr.mxu0 0.0
    %2830 = vmatpush1.msra.mxu0 0.0
    %2831 = vmatprep.subr.mxu0 0.0
    %2832 = vmatpush1.msra.mxu0 0.0
    %2833 = vmatprep.subr.mxu0 0.0
    %2834 = vmatpush1.msra.mxu0 0.0
    %2835 = vmatprep.subr.mxu0 0.0
    %2836 = vmatpush1.msra.mxu0 0.0
    %2837 = vmatprep.subr.mxu0 0.0
    %2838 = vmatpush1.msra.mxu0 0.0
    %2839 = vmatprep.subr.mxu0 0.0
    %2840 = vmatpush1.msra.mxu0 0.0
    %2841 = vmatprep.mubr.f32.mxu0 0.0
    %2842 = vmatmul.mubr.f32.gmra.mrb[0].mxu0 %v2766
    %v2843 = vpop.f32.mrb[0].mxu0
    %v2844 = vadd.f32 0.0, %v2843
    %v2845 = vpop.f32.mrb[0].mxu0
    %2846 = vmatprep.mubr.f32.mxu0 0.0
    %2847 = vmatmul.mubr.f32.gmra.mrb[0].mxu0 %v2769
    %v2848 = vpop.f32.mrb[0].mxu0
    %v2849 = vadd.f32 0.0, %v2848
    %v2850 = vpop.f32.mrb[0].mxu0
    %2851 = vmatprep.mubr.f32.mxu0 0.0
    %2852 = vmatmul.mubr.f32.gmra.mrb[0].mxu0 %v2772
    %v2853 = vpop.f32.mrb[0].mxu0
    %v2854 = vadd.f32 0.0, %v2853
    %v2855 = vpop.f32.mrb[0].mxu0
    %2856 = vmatprep.mubr.f32.mxu0 0.0
    %2857 = vmatmul.mubr.f32.gmra.mrb[0].mxu0 %v2775
    %v2858 = vpop.f32.mrb[0].mxu0
    %v2859 = vadd.f32 0.0, %v2858
    %v2860 = vpop.f32.mrb[0].mxu0
    %2861 = vdwg.mxu0
    %v2862 = vadd.f32 %v2074, %v2844
    %v2863 = vadd.f32 %v2075, %v2849
    %v2864 = vadd.f32 %v2076, %v2854
    %v2865 = vadd.f32 %v2077, %v2859
    %s2866 = scalar_lea.vmem %s9, 1
    %v2867 = vld [vmem:[%s2866] sm:$0x1]
    %s2868 = scalar_lea.vmem %s10, 1
    %v2869 = vld [vmem:[%s2868] sm:$0x1]
    %v2870 = vsel %vm120, %v2862, 0.0
    %2871 = vadd.xlane.f32.xlu0 %v2870
    %v2872 = vpop.xlane.xlu0 %2871
    %v2873 = vsel %vm120, %v2863, 0.0
    %2874 = vadd.xlane.f32.xlu0 %v2873
    %v2875 = vpop.xlane.xlu0 %2874
    %v2876 = vsel %vm120, %v2864, 0.0
    %2877 = vadd.xlane.f32.xlu0 %v2876
    %v2878 = vpop.xlane.xlu0 %2877
    %v2879 = vsel %vm120, %v2865, 0.0
    %2880 = vadd.xlane.f32.xlu0 %v2879
    %v2881 = vpop.xlane.xlu0 %2880
    %v2882 = vmul.f32 %v2872, %v910
    %v2883 = vmul.f32 %v2875, %v910
    %v2884 = vmul.f32 %v2878, %v910
    %v2885 = vmul.f32 %v2881, %v910
    %v2886 = vsub.f32 %v2862, %v2882
    %v2887 = vsub.f32 %v2863, %v2883
    %v2888 = vsub.f32 %v2864, %v2884
    %v2889 = vsub.f32 %v2865, %v2885
    %v2890 = vmul.f32 %v2886, %v2886
    %v2891 = vmul.f32 %v2887, %v2887
    %v2892 = vmul.f32 %v2888, %v2888
    %v2893 = vmul.f32 %v2889, %v2889
    %v2894 = vsel %vm120, %v2890, 0.0
    %2895 = vadd.xlane.f32.xlu0 %v2894
    %v2896 = vpop.xlane.xlu0 %2895
    %v2897 = vsel %vm120, %v2891, 0.0
    %2898 = vadd.xlane.f32.xlu0 %v2897
    %v2899 = vpop.xlane.xlu0 %2898
    %v2900 = vsel %vm120, %v2892, 0.0
    %2901 = vadd.xlane.f32.xlu0 %v2900
    %v2902 = vpop.xlane.xlu0 %2901
    %v2903 = vsel %vm120, %v2893, 0.0
    %2904 = vadd.xlane.f32.xlu0 %v2903
    %v2905 = vpop.xlane.xlu0 %2904
    %v2906 = vmul.f32 %v2896, %v910
    %v2907 = vmul.f32 %v2899, %v910
    %v2908 = vmul.f32 %v2902, %v910
    %v2909 = vmul.f32 %v2905, %v910
    %v2910 = vadd.f32 %v2906, 1e-05
    %v2911 = vadd.f32 %v2907, 1e-05
    %v2912 = vadd.f32 %v2908, 1e-05
    %v2913 = vadd.f32 %v2909, 1e-05
    %v2914 = vrsqrt.pop %v2910
    %v2915 = vrsqrt.pop %v2911
    %v2916 = vrsqrt.pop %v2912
    %v2917 = vrsqrt.pop %v2913
    %v2918 = vmul.f32 %v2886, %v2914
    %v2919 = vmul.f32 %v2887, %v2915
    %v2920 = vmul.f32 %v2888, %v2916
    %v2921 = vmul.f32 %v2889, %v2917
    %v2923 = vlaneseq
    %v2924 = vshrl.u32 %v2923, 7
    %v2925 = vsub.s32 0, %v2924
    %v2926 = vrot.slane %v2867, %v2925
    %v2928 = vmul.f32 %v2918, %v2926
    %v2929 = vmul.f32 %v2919, %v2926
    %v2930 = vmul.f32 %v2920, %v2926
    %v2931 = vmul.f32 %v2921, %v2926
    %v2933 = vlaneseq
    %v2934 = vshrl.u32 %v2933, 7
    %v2935 = vsub.s32 0, %v2934
    %v2936 = vrot.slane %v2869, %v2935
    %v2938 = vadd.f32 %v2928, %v2936
    %v2939 = vadd.f32 %v2929, %v2936
    %v2940 = vadd.f32 %v2930, %v2936
    %v2941 = vadd.f32 %v2931, %v2936
    %v2942 = vmul.f32 %v2938, %v84
    %v2943 = vmul.f32 %v2939, %v89
    %v2944 = vmul.f32 %v2940, %v94
    %v2945 = vmul.f32 %v2941, %v99
    %2946 = vmatprep.subr.mxu0 0.0
    %2947 = vmatpush1.msra.mxu0 %v2942
    %2948 = vmatprep.subr.mxu0 0.0
    %2949 = vmatpush1.msra.mxu0 %v2943
    %2950 = vmatprep.subr.mxu0 0.0
    %2951 = vmatpush1.msra.mxu0 %v2944
    %2952 = vmatprep.subr.mxu0 0.0
    %2953 = vmatpush1.msra.mxu0 %v2945
    %2954 = vmatprep.subr.mxu0 0.0
    %2955 = vmatpush1.msra.mxu0 0.0
    %2956 = vmatprep.subr.mxu0 0.0
    %2957 = vmatpush1.msra.mxu0 0.0
    %2958 = vmatprep.subr.mxu0 0.0
    %2959 = vmatpush1.msra.mxu0 0.0
    %2960 = vmatprep.subr.mxu0 0.0
    %2961 = vmatpush1.msra.mxu0 0.0
    %2962 = vmatprep.subr.mxu0 0.0
    %2963 = vmatpush1.msra.mxu0 0.0
    %2964 = vmatprep.subr.mxu0 0.0
    %2965 = vmatpush1.msra.mxu0 0.0
    %2966 = vmatprep.subr.mxu0 0.0
    %2967 = vmatpush1.msra.mxu0 0.0
    %2968 = vmatprep.subr.mxu0 0.0
    %2969 = vmatpush1.msra.mxu0 0.0
    %2970 = vmatprep.subr.mxu0 0.0
    %2971 = vmatpush1.msra.mxu0 0.0
    %2972 = vmatprep.subr.mxu0 0.0
    %2973 = vmatpush1.msra.mxu0 0.0
    %2974 = vmatprep.subr.mxu0 0.0
    %2975 = vmatpush1.msra.mxu0 0.0
    %2976 = vmatprep.subr.mxu0 0.0
    %2977 = vmatpush1.msra.mxu0 0.0
    %2978 = vmatprep.subr.mxu0 0.0
    %2979 = vmatpush1.msra.mxu0 0.0
    %2980 = vmatprep.subr.mxu0 0.0
    %2981 = vmatpush1.msra.mxu0 0.0
    %2982 = vmatprep.subr.mxu0 0.0
    %2983 = vmatpush1.msra.mxu0 0.0
    %2984 = vmatprep.subr.mxu0 0.0
    %2985 = vmatpush1.msra.mxu0 0.0
    %2986 = vmatprep.subr.mxu0 0.0
    %2987 = vmatpush1.msra.mxu0 0.0
    %2988 = vmatprep.subr.mxu0 0.0
    %2989 = vmatpush1.msra.mxu0 0.0
    %2990 = vmatprep.subr.mxu0 0.0
    %2991 = vmatpush1.msra.mxu0 0.0
    %2992 = vmatprep.subr.mxu0 0.0
    %2993 = vmatpush1.msra.mxu0 0.0
    %2994 = vmatprep.subr.mxu0 0.0
    %2995 = vmatpush1.msra.mxu0 0.0
    %2996 = vmatprep.subr.mxu0 0.0
    %2997 = vmatpush1.msra.mxu0 0.0
    %2998 = vmatprep.subr.mxu0 0.0
    %2999 = vmatpush1.msra.mxu0 0.0
    %3000 = vmatprep.subr.mxu0 0.0
    %3001 = vmatpush1.msra.mxu0 0.0
    %3002 = vmatprep.subr.mxu0 0.0
    %3003 = vmatpush1.msra.mxu0 0.0
    %3004 = vmatprep.subr.mxu0 0.0
    %3005 = vmatpush1.msra.mxu0 0.0
    %3006 = vmatprep.subr.mxu0 0.0
    %3007 = vmatpush1.msra.mxu0 0.0
    %3008 = vmatprep.subr.mxu0 0.0
    %3009 = vmatpush1.msra.mxu0 0.0
    %3010 = vmatprep.mubr.f32.mxu0 0.0
    %3011 = vmatmul.mubr.f32.gmra.mrb[0].mxu0 %v976
    %v3012 = vpop.f32.mrb[0].mxu0
    %v3013 = vadd.f32 0.0, %v3012
    %v3014 = vpop.f32.mrb[0].mxu0
    %3015 = vmatprep.mubr.f32.mxu0 0.0
    %3016 = vmatmul.mubr.f32.gmra.mrb[0].mxu0 %v979
    %v3017 = vpop.f32.mrb[0].mxu0
    %v3018 = vadd.f32 0.0, %v3017
    %v3019 = vpop.f32.mrb[0].mxu0
    %3020 = vmatprep.mubr.f32.mxu0 0.0
    %3021 = vmatmul.mubr.f32.gmra.mrb[0].mxu0 %v982
    %v3022 = vpop.f32.mrb[0].mxu0
    %v3023 = vadd.f32 0.0, %v3022
    %v3024 = vpop.f32.mrb[0].mxu0
    %3025 = vmatprep.mubr.f32.mxu0 0.0
    %3026 = vmatmul.mubr.f32.gmra.mrb[0].mxu0 %v985
    %v3027 = vpop.f32.mrb[0].mxu0
    %v3028 = vadd.f32 0.0, %v3027
    %v3029 = vpop.f32.mrb[0].mxu0
    %3030 = vdwg.mxu0
    %3031 = vmatprep.subr.mxu0 0.0
    %3032 = vmatpush1.msra.mxu0 %v2942
    %3033 = vmatprep.subr.mxu0 0.0
    %3034 = vmatpush1.msra.mxu0 %v2943
    %3035 = vmatprep.subr.mxu0 0.0
    %3036 = vmatpush1.msra.mxu0 %v2944
    %3037 = vmatprep.subr.mxu0 0.0
    %3038 = vmatpush1.msra.mxu0 %v2945
    %3039 = vmatprep.subr.mxu0 0.0
    %3040 = vmatpush1.msra.mxu0 0.0
    %3041 = vmatprep.subr.mxu0 0.0
    %3042 = vmatpush1.msra.mxu0 0.0
    %3043 = vmatprep.subr.mxu0 0.0
    %3044 = vmatpush1.msra.mxu0 0.0
    %3045 = vmatprep.subr.mxu0 0.0
    %3046 = vmatpush1.msra.mxu0 0.0
    %3047 = vmatprep.subr.mxu0 0.0
    %3048 = vmatpush1.msra.mxu0 0.0
    %3049 = vmatprep.subr.mxu0 0.0
    %3050 = vmatpush1.msra.mxu0 0.0
    %3051 = vmatprep.subr.mxu0 0.0
    %3052 = vmatpush1.msra.mxu0 0.0
    %3053 = vmatprep.subr.mxu0 0.0
    %3054 = vmatpush1.msra.mxu0 0.0
    %3055 = vmatprep.subr.mxu0 0.0
    %3056 = vmatpush1.msra.mxu0 0.0
    %3057 = vmatprep.subr.mxu0 0.0
    %3058 = vmatpush1.msra.mxu0 0.0
    %3059 = vmatprep.subr.mxu0 0.0
    %3060 = vmatpush1.msra.mxu0 0.0
    %3061 = vmatprep.subr.mxu0 0.0
    %3062 = vmatpush1.msra.mxu0 0.0
    %3063 = vmatprep.subr.mxu0 0.0
    %3064 = vmatpush1.msra.mxu0 0.0
    %3065 = vmatprep.subr.mxu0 0.0
    %3066 = vmatpush1.msra.mxu0 0.0
    %3067 = vmatprep.subr.mxu0 0.0
    %3068 = vmatpush1.msra.mxu0 0.0
    %3069 = vmatprep.subr.mxu0 0.0
    %3070 = vmatpush1.msra.mxu0 0.0
    %3071 = vmatprep.subr.mxu0 0.0
    %3072 = vmatpush1.msra.mxu0 0.0
    %3073 = vmatprep.subr.mxu0 0.0
    %3074 = vmatpush1.msra.mxu0 0.0
    %3075 = vmatprep.subr.mxu0 0.0
    %3076 = vmatpush1.msra.mxu0 0.0
    %3077 = vmatprep.subr.mxu0 0.0
    %3078 = vmatpush1.msra.mxu0 0.0
    %3079 = vmatprep.subr.mxu0 0.0
    %3080 = vmatpush1.msra.mxu0 0.0
    %3081 = vmatprep.subr.mxu0 0.0
    %3082 = vmatpush1.msra.mxu0 0.0
    %3083 = vmatprep.subr.mxu0 0.0
    %3084 = vmatpush1.msra.mxu0 0.0
    %3085 = vmatprep.subr.mxu0 0.0
    %3086 = vmatpush1.msra.mxu0 0.0
    %3087 = vmatprep.subr.mxu0 0.0
    %3088 = vmatpush1.msra.mxu0 0.0
    %3089 = vmatprep.subr.mxu0 0.0
    %3090 = vmatpush1.msra.mxu0 0.0
    %3091 = vmatprep.subr.mxu0 0.0
    %3092 = vmatpush1.msra.mxu0 0.0
    %3093 = vmatprep.subr.mxu0 0.0
    %3094 = vmatpush1.msra.mxu0 0.0
    %3095 = vmatprep.mubr.f32.mxu0 0.0
    %3096 = vmatmul.mubr.f32.gmra.mrb[0].mxu0 %v1073
    %v3097 = vpop.f32.mrb[0].mxu0
    %v3098 = vadd.f32 0.0, %v3097
    %v3099 = vpop.f32.mrb[0].mxu0
    %3100 = vmatprep.mubr.f32.mxu0 0.0
    %3101 = vmatmul.mubr.f32.gmra.mrb[0].mxu0 %v1076
    %v3102 = vpop.f32.mrb[0].mxu0
    %v3103 = vadd.f32 0.0, %v3102
    %v3104 = vpop.f32.mrb[0].mxu0
    %3105 = vmatprep.mubr.f32.mxu0 0.0
    %3106 = vmatmul.mubr.f32.gmra.mrb[0].mxu0 %v1079
    %v3107 = vpop.f32.mrb[0].mxu0
    %v3108 = vadd.f32 0.0, %v3107
    %v3109 = vpop.f32.mrb[0].mxu0
    %3110 = vmatprep.mubr.f32.mxu0 0.0
    %3111 = vmatmul.mubr.f32.gmra.mrb[0].mxu0 %v1082
    %v3112 = vpop.f32.mrb[0].mxu0
    %v3113 = vadd.f32 0.0, %v3112
    %v3114 = vpop.f32.mrb[0].mxu0
    %3115 = vdwg.mxu0
    %s3116 = scalar_lea.vmem %s11, 96
    %v3117 = vld [vmem:[%s3116] sm:$0xff]
    %v3118 = vld [vmem:[%s3116 + $0x8] sm:$0xff]
    %v3119 = vld [vmem:[%s3116 + $0x10] sm:$0xff]
    %v3120 = vld [vmem:[%s3116 + $0x18] sm:$0xff]
    %s3121 = scalar_lea.vmem %s11, 128
    %v3122 = vld [vmem:[%s3121] sm:$0xff]
    %v3123 = vld [vmem:[%s3121 + $0x8] sm:$0xff]
    %v3124 = vld [vmem:[%s3121 + $0x10] sm:$0xff]
    %v3125 = vld [vmem:[%s3121 + $0x18] sm:$0xff]
    %v3127 = vsel %vm120, %v2942, 0
    %v3130 = vsel %vm120, %v2943, 0
    %v3133 = vsel %vm120, %v2944, 0
    %v3136 = vsel %vm120, %v2945, 0
    %3138 = vmatprep.subr.mxu0 0.0
    %3139 = vmatpush1.msra.mxu0 %v3122
    %3140 = vmatprep.subr.mxu0 0.0
    %3141 = vmatpush1.msra.mxu0 %v3123
    %3142 = vmatprep.subr.mxu0 0.0
    %3143 = vmatpush1.msra.mxu0 %v3124
    %3144 = vmatprep.subr.mxu0 0.0
    %3145 = vmatpush1.msra.mxu0 %v3125
    %3146 = vmatprep.subr.mxu0 0.0
    %3147 = vmatpush1.msra.mxu0 0.0
    %3148 = vmatprep.subr.mxu0 0.0
    %3149 = vmatpush1.msra.mxu0 0.0
    %3150 = vmatprep.subr.mxu0 0.0
    %3151 = vmatpush1.msra.mxu0 0.0
    %3152 = vmatprep.subr.mxu0 0.0
    %3153 = vmatpush1.msra.mxu0 0.0
    %3154 = vmatprep.subr.mxu0 0.0
    %3155 = vmatpush1.msra.mxu0 0.0
    %3156 = vmatprep.subr.mxu0 0.0
    %3157 = vmatpush1.msra.mxu0 0.0
    %3158 = vmatprep.subr.mxu0 0.0
    %3159 = vmatpush1.msra.mxu0 0.0
    %3160 = vmatprep.subr.mxu0 0.0
    %3161 = vmatpush1.msra.mxu0 0.0
    %3162 = vmatprep.subr.mxu0 0.0
    %3163 = vmatpush1.msra.mxu0 0.0
    %3164 = vmatprep.subr.mxu0 0.0
    %3165 = vmatpush1.msra.mxu0 0.0
    %3166 = vmatprep.subr.mxu0 0.0
    %3167 = vmatpush1.msra.mxu0 0.0
    %3168 = vmatprep.subr.mxu0 0.0
    %3169 = vmatpush1.msra.mxu0 0.0
    %3170 = vmatprep.subr.mxu0 0.0
    %3171 = vmatpush1.msra.mxu0 0.0
    %3172 = vmatprep.subr.mxu0 0.0
    %3173 = vmatpush1.msra.mxu0 0.0
    %3174 = vmatprep.subr.mxu0 0.0
    %3175 = vmatpush1.msra.mxu0 0.0
    %3176 = vmatprep.subr.mxu0 0.0
    %3177 = vmatpush1.msra.mxu0 0.0
    %3178 = vmatprep.subr.mxu0 0.0
    %3179 = vmatpush1.msra.mxu0 0.0
    %3180 = vmatprep.subr.mxu0 0.0
    %3181 = vmatpush1.msra.mxu0 0.0
    %3182 = vmatprep.subr.mxu0 0.0
    %3183 = vmatpush1.msra.mxu0 0.0
    %3184 = vmatprep.subr.mxu0 0.0
    %3185 = vmatpush1.msra.mxu0 0.0
    %3186 = vmatprep.subr.mxu0 0.0
    %3187 = vmatpush1.msra.mxu0 0.0
    %3188 = vmatprep.subr.mxu0 0.0
    %3189 = vmatpush1.msra.mxu0 0.0
    %3190 = vmatprep.subr.mxu0 0.0
    %3191 = vmatpush1.msra.mxu0 0.0
    %3192 = vmatprep.subr.mxu0 0.0
    %3193 = vmatpush1.msra.mxu0 0.0
    %3194 = vmatprep.subr.mxu0 0.0
    %3195 = vmatpush1.msra.mxu0 0.0
    %3196 = vmatprep.subr.mxu0 0.0
    %3197 = vmatpush1.msra.mxu0 0.0
    %3198 = vmatprep.subr.mxu0 0.0
    %3199 = vmatpush1.msra.mxu0 0.0
    %3200 = vmatprep.subr.mxu0 0.0
    %3201 = vmatpush1.msra.mxu0 0.0
    %3202 = vmatprep.mubr.f32.mxu0 0.0
    %3203 = vmatmul.mubr.f32.gmra.mrb[0].mxu0 %v3127
    %v3204 = vpop.f32.mrb[0].mxu0
    %v3205 = vadd.f32 0.0, %v3204
    %v3206 = vpop.f32.mrb[0].mxu0
    %3207 = vmatprep.mubr.f32.mxu0 0.0
    %3208 = vmatmul.mubr.f32.gmra.mrb[0].mxu0 %v3130
    %v3209 = vpop.f32.mrb[0].mxu0
    %v3210 = vadd.f32 0.0, %v3209
    %v3211 = vpop.f32.mrb[0].mxu0
    %3212 = vmatprep.mubr.f32.mxu0 0.0
    %3213 = vmatmul.mubr.f32.gmra.mrb[0].mxu0 %v3133
    %v3214 = vpop.f32.mrb[0].mxu0
    %v3215 = vadd.f32 0.0, %v3214
    %v3216 = vpop.f32.mrb[0].mxu0
    %3217 = vmatprep.mubr.f32.mxu0 0.0
    %3218 = vmatmul.mubr.f32.gmra.mrb[0].mxu0 %v3136
    %v3219 = vpop.f32.mrb[0].mxu0
    %v3220 = vadd.f32 0.0, %v3219
    %v3221 = vpop.f32.mrb[0].mxu0
    %3222 = vdwg.mxu0
    %v3224 = vsel %vm120, %v3013, 0
    %v3227 = vsel %vm120, %v3018, 0
    %v3230 = vsel %vm120, %v3023, 0
    %v3233 = vsel %vm120, %v3028, 0
    %3235 = vmatprep.subr.mxu0 0.0
    %3236 = vmatpush1.msra.mxu0 %v3117
    %3237 = vmatprep.subr.mxu0 0.0
    %3238 = vmatpush1.msra.mxu0 %v3118
    %3239 = vmatprep.subr.mxu0 0.0
    %3240 = vmatpush1.msra.mxu0 %v3119
    %3241 = vmatprep.subr.mxu0 0.0
    %3242 = vmatpush1.msra.mxu0 %v3120
    %3243 = vmatprep.subr.mxu0 0.0
    %3244 = vmatpush1.msra.mxu0 0.0
    %3245 = vmatprep.subr.mxu0 0.0
    %3246 = vmatpush1.msra.mxu0 0.0
    %3247 = vmatprep.subr.mxu0 0.0
    %3248 = vmatpush1.msra.mxu0 0.0
    %3249 = vmatprep.subr.mxu0 0.0
    %3250 = vmatpush1.msra.mxu0 0.0
    %3251 = vmatprep.subr.mxu0 0.0
    %3252 = vmatpush1.msra.mxu0 0.0
    %3253 = vmatprep.subr.mxu0 0.0
    %3254 = vmatpush1.msra.mxu0 0.0
    %3255 = vmatprep.subr.mxu0 0.0
    %3256 = vmatpush1.msra.mxu0 0.0
    %3257 = vmatprep.subr.mxu0 0.0
    %3258 = vmatpush1.msra.mxu0 0.0
    %3259 = vmatprep.subr.mxu0 0.0
    %3260 = vmatpush1.msra.mxu0 0.0
    %3261 = vmatprep.subr.mxu0 0.0
    %3262 = vmatpush1.msra.mxu0 0.0
    %3263 = vmatprep.subr.mxu0 0.0
    %3264 = vmatpush1.msra.mxu0 0.0
    %3265 = vmatprep.subr.mxu0 0.0
    %3266 = vmatpush1.msra.mxu0 0.0
    %3267 = vmatprep.subr.mxu0 0.0
    %3268 = vmatpush1.msra.mxu0 0.0
    %3269 = vmatprep.subr.mxu0 0.0
    %3270 = vmatpush1.msra.mxu0 0.0
    %3271 = vmatprep.subr.mxu0 0.0
    %3272 = vmatpush1.msra.mxu0 0.0
    %3273 = vmatprep.subr.mxu0 0.0
    %3274 = vmatpush1.msra.mxu0 0.0
    %3275 = vmatprep.subr.mxu0 0.0
    %3276 = vmatpush1.msra.mxu0 0.0
    %3277 = vmatprep.subr.mxu0 0.0
    %3278 = vmatpush1.msra.mxu0 0.0
    %3279 = vmatprep.subr.mxu0 0.0
    %3280 = vmatpush1.msra.mxu0 0.0
    %3281 = vmatprep.subr.mxu0 0.0
    %3282 = vmatpush1.msra.mxu0 0.0
    %3283 = vmatprep.subr.mxu0 0.0
    %3284 = vmatpush1.msra.mxu0 0.0
    %3285 = vmatprep.subr.mxu0 0.0
    %3286 = vmatpush1.msra.mxu0 0.0
    %3287 = vmatprep.subr.mxu0 0.0
    %3288 = vmatpush1.msra.mxu0 0.0
    %3289 = vmatprep.subr.mxu0 0.0
    %3290 = vmatpush1.msra.mxu0 0.0
    %3291 = vmatprep.subr.mxu0 0.0
    %3292 = vmatpush1.msra.mxu0 0.0
    %3293 = vmatprep.subr.mxu0 0.0
    %3294 = vmatpush1.msra.mxu0 0.0
    %3295 = vmatprep.subr.mxu0 0.0
    %3296 = vmatpush1.msra.mxu0 0.0
    %3297 = vmatprep.subr.mxu0 0.0
    %3298 = vmatpush1.msra.mxu0 0.0
    %3299 = vmatprep.mubr.f32.mxu0 0.0
    %3300 = vmatmul.mubr.f32.gmra.mrb[0].mxu0 %v3224
    %v3301 = vpop.f32.mrb[0].mxu0
    %v3302 = vadd.f32 %v3205, %v3301
    %v3303 = vpop.f32.mrb[0].mxu0
    %3304 = vmatprep.mubr.f32.mxu0 0.0
    %3305 = vmatmul.mubr.f32.gmra.mrb[0].mxu0 %v3227
    %v3306 = vpop.f32.mrb[0].mxu0
    %v3307 = vadd.f32 %v3210, %v3306
    %v3308 = vpop.f32.mrb[0].mxu0
    %3309 = vmatprep.mubr.f32.mxu0 0.0
    %3310 = vmatmul.mubr.f32.gmra.mrb[0].mxu0 %v3230
    %v3311 = vpop.f32.mrb[0].mxu0
    %v3312 = vadd.f32 %v3215, %v3311
    %v3313 = vpop.f32.mrb[0].mxu0
    %3314 = vmatprep.mubr.f32.mxu0 0.0
    %3315 = vmatmul.mubr.f32.gmra.mrb[0].mxu0 %v3233
    %v3316 = vpop.f32.mrb[0].mxu0
    %v3317 = vadd.f32 %v3220, %v3316
    %v3318 = vpop.f32.mrb[0].mxu0
    %3319 = vdwg.mxu0
    %s3320 = scalar_lea.vmem %s11, 160
    %v3321 = vld [vmem:[%s3320] sm:$0xff]
    %v3322 = vld [vmem:[%s3320 + $0x8] sm:$0xff]
    %v3323 = vld [vmem:[%s3320 + $0x10] sm:$0xff]
    %v3324 = vld [vmem:[%s3320 + $0x18] sm:$0xff]
    %v3326 = vsel %vm120, %v3098, 0
    %v3329 = vsel %vm120, %v3103, 0
    %v3332 = vsel %vm120, %v3108, 0
    %v3335 = vsel %vm120, %v3113, 0
    %3337 = vmatprep.subr.mxu0 0.0
    %3338 = vmatpush1.msra.mxu0 %v3321
    %3339 = vmatprep.subr.mxu0 0.0
    %3340 = vmatpush1.msra.mxu0 %v3322
    %3341 = vmatprep.subr.mxu0 0.0
    %3342 = vmatpush1.msra.mxu0 %v3323
    %3343 = vmatprep.subr.mxu0 0.0
    %3344 = vmatpush1.msra.mxu0 %v3324
    %3345 = vmatprep.subr.mxu0 0.0
    %3346 = vmatpush1.msra.mxu0 0.0
    %3347 = vmatprep.subr.mxu0 0.0
    %3348 = vmatpush1.msra.mxu0 0.0
    %3349 = vmatprep.subr.mxu0 0.0
    %3350 = vmatpush1.msra.mxu0 0.0
    %3351 = vmatprep.subr.mxu0 0.0
    %3352 = vmatpush1.msra.mxu0 0.0
    %3353 = vmatprep.subr.mxu0 0.0
    %3354 = vmatpush1.msra.mxu0 0.0
    %3355 = vmatprep.subr.mxu0 0.0
    %3356 = vmatpush1.msra.mxu0 0.0
    %3357 = vmatprep.subr.mxu0 0.0
    %3358 = vmatpush1.msra.mxu0 0.0
    %3359 = vmatprep.subr.mxu0 0.0
    %3360 = vmatpush1.msra.mxu0 0.0
    %3361 = vmatprep.subr.mxu0 0.0
    %3362 = vmatpush1.msra.mxu0 0.0
    %3363 = vmatprep.subr.mxu0 0.0
    %3364 = vmatpush1.msra.mxu0 0.0
    %3365 = vmatprep.subr.mxu0 0.0
    %3366 = vmatpush1.msra.mxu0 0.0
    %3367 = vmatprep.subr.mxu0 0.0
    %3368 = vmatpush1.msra.mxu0 0.0
    %3369 = vmatprep.subr.mxu0 0.0
    %3370 = vmatpush1.msra.mxu0 0.0
    %3371 = vmatprep.subr.mxu0 0.0
    %3372 = vmatpush1.msra.mxu0 0.0
    %3373 = vmatprep.subr.mxu0 0.0
    %3374 = vmatpush1.msra.mxu0 0.0
    %3375 = vmatprep.subr.mxu0 0.0
    %3376 = vmatpush1.msra.mxu0 0.0
    %3377 = vmatprep.subr.mxu0 0.0
    %3378 = vmatpush1.msra.mxu0 0.0
    %3379 = vmatprep.subr.mxu0 0.0
    %3380 = vmatpush1.msra.mxu0 0.0
    %3381 = vmatprep.subr.mxu0 0.0
    %3382 = vmatpush1.msra.mxu0 0.0
    %3383 = vmatprep.subr.mxu0 0.0
    %3384 = vmatpush1.msra.mxu0 0.0
    %3385 = vmatprep.subr.mxu0 0.0
    %3386 = vmatpush1.msra.mxu0 0.0
    %3387 = vmatprep.subr.mxu0 0.0
    %3388 = vmatpush1.msra.mxu0 0.0
    %3389 = vmatprep.subr.mxu0 0.0
    %3390 = vmatpush1.msra.mxu0 0.0
    %3391 = vmatprep.subr.mxu0 0.0
    %3392 = vmatpush1.msra.mxu0 0.0
    %3393 = vmatprep.subr.mxu0 0.0
    %3394 = vmatpush1.msra.mxu0 0.0
    %3395 = vmatprep.subr.mxu0 0.0
    %3396 = vmatpush1.msra.mxu0 0.0
    %3397 = vmatprep.subr.mxu0 0.0
    %3398 = vmatpush1.msra.mxu0 0.0
    %3399 = vmatprep.subr.mxu0 0.0
    %3400 = vmatpush1.msra.mxu0 0.0
    %3401 = vmatprep.mubr.f32.mxu0 0.0
    %3402 = vmatmul.mubr.f32.gmra.mrb[0].mxu0 %v3326
    %v3403 = vpop.f32.mrb[0].mxu0
    %v3404 = vadd.f32 0.0, %v3403
    %v3405 = vpop.f32.mrb[0].mxu0
    %3406 = vmatprep.mubr.f32.mxu0 0.0
    %3407 = vmatmul.mubr.f32.gmra.mrb[0].mxu0 %v3329
    %v3408 = vpop.f32.mrb[0].mxu0
    %v3409 = vadd.f32 0.0, %v3408
    %v3410 = vpop.f32.mrb[0].mxu0
    %3411 = vmatprep.mubr.f32.mxu0 0.0
    %3412 = vmatmul.mubr.f32.gmra.mrb[0].mxu0 %v3332
    %v3413 = vpop.f32.mrb[0].mxu0
    %v3414 = vadd.f32 0.0, %v3413
    %v3415 = vpop.f32.mrb[0].mxu0
    %3416 = vmatprep.mubr.f32.mxu0 0.0
    %3417 = vmatmul.mubr.f32.gmra.mrb[0].mxu0 %v3335
    %v3418 = vpop.f32.mrb[0].mxu0
    %v3419 = vadd.f32 0.0, %v3418
    %v3420 = vpop.f32.mrb[0].mxu0
    %3421 = vdwg.mxu0
    %v3422 = vadd.f32 %v3302, %v3404
    %v3423 = vadd.f32 %v3307, %v3409
    %v3424 = vadd.f32 %v3312, %v3414
    %v3425 = vadd.f32 %v3317, %v3419
    %s3426 = scalar_lea.vmem %s12, 1
    %v3427 = vld [vmem:[%s3426] sm:$0x1]
    %v3429 = vlaneseq
    %v3430 = vshrl.u32 %v3429, 7
    %v3431 = vsub.s32 0, %v3430
    %v3432 = vrot.slane %v3427, %v3431
    %v3434 = vadd.f32 %v3422, %v3432
    %v3435 = vadd.f32 %v3423, %v3432
    %v3436 = vadd.f32 %v3424, %v3432
    %v3437 = vadd.f32 %v3425, %v3432
    %v3438 = vmax.f32 %v3434, 0.0
    %v3439 = vmax.f32 %v3435, 0.0
    %v3440 = vmax.f32 %v3436, 0.0
    %v3441 = vmax.f32 %v3437, 0.0
    %3442 = vmatprep.subr.mxu0 0.0
    %3443 = vmatpush1.msra.mxu0 %v3438
    %3444 = vmatprep.subr.mxu0 0.0
    %3445 = vmatpush1.msra.mxu0 %v3439
    %3446 = vmatprep.subr.mxu0 0.0
    %3447 = vmatpush1.msra.mxu0 %v3440
    %3448 = vmatprep.subr.mxu0 0.0
    %3449 = vmatpush1.msra.mxu0 %v3441
    %3450 = vmatprep.subr.mxu0 0.0
    %3451 = vmatpush1.msra.mxu0 0.0
    %3452 = vmatprep.subr.mxu0 0.0
    %3453 = vmatpush1.msra.mxu0 0.0
    %3454 = vmatprep.subr.mxu0 0.0
    %3455 = vmatpush1.msra.mxu0 0.0
    %3456 = vmatprep.subr.mxu0 0.0
    %3457 = vmatpush1.msra.mxu0 0.0
    %3458 = vmatprep.subr.mxu0 0.0
    %3459 = vmatpush1.msra.mxu0 0.0
    %3460 = vmatprep.subr.mxu0 0.0
    %3461 = vmatpush1.msra.mxu0 0.0
    %3462 = vmatprep.subr.mxu0 0.0
    %3463 = vmatpush1.msra.mxu0 0.0
    %3464 = vmatprep.subr.mxu0 0.0
    %3465 = vmatpush1.msra.mxu0 0.0
    %3466 = vmatprep.subr.mxu0 0.0
    %3467 = vmatpush1.msra.mxu0 0.0
    %3468 = vmatprep.subr.mxu0 0.0
    %3469 = vmatpush1.msra.mxu0 0.0
    %3470 = vmatprep.subr.mxu0 0.0
    %3471 = vmatpush1.msra.mxu0 0.0
    %3472 = vmatprep.subr.mxu0 0.0
    %3473 = vmatpush1.msra.mxu0 0.0
    %3474 = vmatprep.subr.mxu0 0.0
    %3475 = vmatpush1.msra.mxu0 0.0
    %3476 = vmatprep.subr.mxu0 0.0
    %3477 = vmatpush1.msra.mxu0 0.0
    %3478 = vmatprep.subr.mxu0 0.0
    %3479 = vmatpush1.msra.mxu0 0.0
    %3480 = vmatprep.subr.mxu0 0.0
    %3481 = vmatpush1.msra.mxu0 0.0
    %3482 = vmatprep.subr.mxu0 0.0
    %3483 = vmatpush1.msra.mxu0 0.0
    %3484 = vmatprep.subr.mxu0 0.0
    %3485 = vmatpush1.msra.mxu0 0.0
    %3486 = vmatprep.subr.mxu0 0.0
    %3487 = vmatpush1.msra.mxu0 0.0
    %3488 = vmatprep.subr.mxu0 0.0
    %3489 = vmatpush1.msra.mxu0 0.0
    %3490 = vmatprep.subr.mxu0 0.0
    %3491 = vmatpush1.msra.mxu0 0.0
    %3492 = vmatprep.subr.mxu0 0.0
    %3493 = vmatpush1.msra.mxu0 0.0
    %3494 = vmatprep.subr.mxu0 0.0
    %3495 = vmatpush1.msra.mxu0 0.0
    %3496 = vmatprep.subr.mxu0 0.0
    %3497 = vmatpush1.msra.mxu0 0.0
    %3498 = vmatprep.subr.mxu0 0.0
    %3499 = vmatpush1.msra.mxu0 0.0
    %3500 = vmatprep.subr.mxu0 0.0
    %3501 = vmatpush1.msra.mxu0 0.0
    %3502 = vmatprep.subr.mxu0 0.0
    %3503 = vmatpush1.msra.mxu0 0.0
    %3504 = vmatprep.subr.mxu0 0.0
    %3505 = vmatpush1.msra.mxu0 0.0
    %3506 = vmatprep.mubr.f32.mxu0 0.0
    %3507 = vmatmul.mubr.f32.gmra.mrb[0].mxu0 %v976
    %v3508 = vpop.f32.mrb[0].mxu0
    %v3509 = vadd.f32 0.0, %v3508
    %v3510 = vpop.f32.mrb[0].mxu0
    %3511 = vmatprep.mubr.f32.mxu0 0.0
    %3512 = vmatmul.mubr.f32.gmra.mrb[0].mxu0 %v979
    %v3513 = vpop.f32.mrb[0].mxu0
    %v3514 = vadd.f32 0.0, %v3513
    %v3515 = vpop.f32.mrb[0].mxu0
    %3516 = vmatprep.mubr.f32.mxu0 0.0
    %3517 = vmatmul.mubr.f32.gmra.mrb[0].mxu0 %v982
    %v3518 = vpop.f32.mrb[0].mxu0
    %v3519 = vadd.f32 0.0, %v3518
    %v3520 = vpop.f32.mrb[0].mxu0
    %3521 = vmatprep.mubr.f32.mxu0 0.0
    %3522 = vmatmul.mubr.f32.gmra.mrb[0].mxu0 %v985
    %v3523 = vpop.f32.mrb[0].mxu0
    %v3524 = vadd.f32 0.0, %v3523
    %v3525 = vpop.f32.mrb[0].mxu0
    %3526 = vdwg.mxu0
    %3527 = vmatprep.subr.mxu0 0.0
    %3528 = vmatpush1.msra.mxu0 %v3438
    %3529 = vmatprep.subr.mxu0 0.0
    %3530 = vmatpush1.msra.mxu0 %v3439
    %3531 = vmatprep.subr.mxu0 0.0
    %3532 = vmatpush1.msra.mxu0 %v3440
    %3533 = vmatprep.subr.mxu0 0.0
    %3534 = vmatpush1.msra.mxu0 %v3441
    %3535 = vmatprep.subr.mxu0 0.0
    %3536 = vmatpush1.msra.mxu0 0.0
    %3537 = vmatprep.subr.mxu0 0.0
    %3538 = vmatpush1.msra.mxu0 0.0
    %3539 = vmatprep.subr.mxu0 0.0
    %3540 = vmatpush1.msra.mxu0 0.0
    %3541 = vmatprep.subr.mxu0 0.0
    %3542 = vmatpush1.msra.mxu0 0.0
    %3543 = vmatprep.subr.mxu0 0.0
    %3544 = vmatpush1.msra.mxu0 0.0
    %3545 = vmatprep.subr.mxu0 0.0
    %3546 = vmatpush1.msra.mxu0 0.0
    %3547 = vmatprep.subr.mxu0 0.0
    %3548 = vmatpush1.msra.mxu0 0.0
    %3549 = vmatprep.subr.mxu0 0.0
    %3550 = vmatpush1.msra.mxu0 0.0
    %3551 = vmatprep.subr.mxu0 0.0
    %3552 = vmatpush1.msra.mxu0 0.0
    %3553 = vmatprep.subr.mxu0 0.0
    %3554 = vmatpush1.msra.mxu0 0.0
    %3555 = vmatprep.subr.mxu0 0.0
    %3556 = vmatpush1.msra.mxu0 0.0
    %3557 = vmatprep.subr.mxu0 0.0
    %3558 = vmatpush1.msra.mxu0 0.0
    %3559 = vmatprep.subr.mxu0 0.0
    %3560 = vmatpush1.msra.mxu0 0.0
    %3561 = vmatprep.subr.mxu0 0.0
    %3562 = vmatpush1.msra.mxu0 0.0
    %3563 = vmatprep.subr.mxu0 0.0
    %3564 = vmatpush1.msra.mxu0 0.0
    %3565 = vmatprep.subr.mxu0 0.0
    %3566 = vmatpush1.msra.mxu0 0.0
    %3567 = vmatprep.subr.mxu0 0.0
    %3568 = vmatpush1.msra.mxu0 0.0
    %3569 = vmatprep.subr.mxu0 0.0
    %3570 = vmatpush1.msra.mxu0 0.0
    %3571 = vmatprep.subr.mxu0 0.0
    %3572 = vmatpush1.msra.mxu0 0.0
    %3573 = vmatprep.subr.mxu0 0.0
    %3574 = vmatpush1.msra.mxu0 0.0
    %3575 = vmatprep.subr.mxu0 0.0
    %3576 = vmatpush1.msra.mxu0 0.0
    %3577 = vmatprep.subr.mxu0 0.0
    %3578 = vmatpush1.msra.mxu0 0.0
    %3579 = vmatprep.subr.mxu0 0.0
    %3580 = vmatpush1.msra.mxu0 0.0
    %3581 = vmatprep.subr.mxu0 0.0
    %3582 = vmatpush1.msra.mxu0 0.0
    %3583 = vmatprep.subr.mxu0 0.0
    %3584 = vmatpush1.msra.mxu0 0.0
    %3585 = vmatprep.subr.mxu0 0.0
    %3586 = vmatpush1.msra.mxu0 0.0
    %3587 = vmatprep.subr.mxu0 0.0
    %3588 = vmatpush1.msra.mxu0 0.0
    %3589 = vmatprep.subr.mxu0 0.0
    %3590 = vmatpush1.msra.mxu0 0.0
    %3591 = vmatprep.mubr.f32.mxu0 0.0
    %3592 = vmatmul.mubr.f32.gmra.mrb[0].mxu0 %v1073
    %v3593 = vpop.f32.mrb[0].mxu0
    %v3594 = vadd.f32 0.0, %v3593
    %v3595 = vpop.f32.mrb[0].mxu0
    %3596 = vmatprep.mubr.f32.mxu0 0.0
    %3597 = vmatmul.mubr.f32.gmra.mrb[0].mxu0 %v1076
    %v3598 = vpop.f32.mrb[0].mxu0
    %v3599 = vadd.f32 0.0, %v3598
    %v3600 = vpop.f32.mrb[0].mxu0
    %3601 = vmatprep.mubr.f32.mxu0 0.0
    %3602 = vmatmul.mubr.f32.gmra.mrb[0].mxu0 %v1079
    %v3603 = vpop.f32.mrb[0].mxu0
    %v3604 = vadd.f32 0.0, %v3603
    %v3605 = vpop.f32.mrb[0].mxu0
    %3606 = vmatprep.mubr.f32.mxu0 0.0
    %3607 = vmatmul.mubr.f32.gmra.mrb[0].mxu0 %v1082
    %v3608 = vpop.f32.mrb[0].mxu0
    %v3609 = vadd.f32 0.0, %v3608
    %v3610 = vpop.f32.mrb[0].mxu0
    %3611 = vdwg.mxu0
    %s3612 = scalar_lea.vmem %s13, 192
    %v3613 = vld [vmem:[%s3612] sm:$0xff]
    %v3614 = vld [vmem:[%s3612 + $0x8] sm:$0xff]
    %v3615 = vld [vmem:[%s3612 + $0x10] sm:$0xff]
    %v3616 = vld [vmem:[%s3612 + $0x18] sm:$0xff]
    %v3617 = vld [vmem:[%s3612 + $0x20] sm:$0xff]
    %v3618 = vld [vmem:[%s3612 + $0x28] sm:$0xff]
    %v3619 = vld [vmem:[%s3612 + $0x30] sm:$0xff]
    %v3620 = vld [vmem:[%s3612 + $0x38] sm:$0xff]
    %s3621 = scalar_lea.vmem %s13, 256
    %v3622 = vld [vmem:[%s3621] sm:$0xff]
    %v3623 = vld [vmem:[%s3621 + $0x8] sm:$0xff]
    %v3624 = vld [vmem:[%s3621 + $0x10] sm:$0xff]
    %v3625 = vld [vmem:[%s3621 + $0x18] sm:$0xff]
    %v3626 = vld [vmem:[%s3621 + $0x20] sm:$0xff]
    %v3627 = vld [vmem:[%s3621 + $0x28] sm:$0xff]
    %v3628 = vld [vmem:[%s3621 + $0x30] sm:$0xff]
    %v3629 = vld [vmem:[%s3621 + $0x38] sm:$0xff]
    %v3631 = vsel %vm1680, %v3438, 0
    %v3634 = vsel %vm1680, %v3439, 0
    %v3637 = vsel %vm1680, %v3440, 0
    %v3640 = vsel %vm1680, %v3441, 0
    %3642 = vmatprep.subr.mxu0 0.0
    %3643 = vmatpush1.msra.mxu0 %v3622
    %3644 = vmatprep.subr.mxu0 0.0
    %3645 = vmatpush1.msra.mxu0 %v3623
    %3646 = vmatprep.subr.mxu0 0.0
    %3647 = vmatpush1.msra.mxu0 %v3624
    %3648 = vmatprep.subr.mxu0 0.0
    %3649 = vmatpush1.msra.mxu0 %v3625
    %3650 = vmatprep.subr.mxu0 0.0
    %3651 = vmatpush1.msra.mxu0 %v3626
    %3652 = vmatprep.subr.mxu0 0.0
    %3653 = vmatpush1.msra.mxu0 %v3627
    %3654 = vmatprep.subr.mxu0 0.0
    %3655 = vmatpush1.msra.mxu0 %v3628
    %3656 = vmatprep.subr.mxu0 0.0
    %3657 = vmatpush1.msra.mxu0 %v3629
    %3658 = vmatprep.subr.mxu0 0.0
    %3659 = vmatpush1.msra.mxu0 0.0
    %3660 = vmatprep.subr.mxu0 0.0
    %3661 = vmatpush1.msra.mxu0 0.0
    %3662 = vmatprep.subr.mxu0 0.0
    %3663 = vmatpush1.msra.mxu0 0.0
    %3664 = vmatprep.subr.mxu0 0.0
    %3665 = vmatpush1.msra.mxu0 0.0
    %3666 = vmatprep.subr.mxu0 0.0
    %3667 = vmatpush1.msra.mxu0 0.0
    %3668 = vmatprep.subr.mxu0 0.0
    %3669 = vmatpush1.msra.mxu0 0.0
    %3670 = vmatprep.subr.mxu0 0.0
    %3671 = vmatpush1.msra.mxu0 0.0
    %3672 = vmatprep.subr.mxu0 0.0
    %3673 = vmatpush1.msra.mxu0 0.0
    %3674 = vmatprep.subr.mxu0 0.0
    %3675 = vmatpush1.msra.mxu0 0.0
    %3676 = vmatprep.subr.mxu0 0.0
    %3677 = vmatpush1.msra.mxu0 0.0
    %3678 = vmatprep.subr.mxu0 0.0
    %3679 = vmatpush1.msra.mxu0 0.0
    %3680 = vmatprep.subr.mxu0 0.0
    %3681 = vmatpush1.msra.mxu0 0.0
    %3682 = vmatprep.subr.mxu0 0.0
    %3683 = vmatpush1.msra.mxu0 0.0
    %3684 = vmatprep.subr.mxu0 0.0
    %3685 = vmatpush1.msra.mxu0 0.0
    %3686 = vmatprep.subr.mxu0 0.0
    %3687 = vmatpush1.msra.mxu0 0.0
    %3688 = vmatprep.subr.mxu0 0.0
    %3689 = vmatpush1.msra.mxu0 0.0
    %3690 = vmatprep.subr.mxu0 0.0
    %3691 = vmatpush1.msra.mxu0 0.0
    %3692 = vmatprep.subr.mxu0 0.0
    %3693 = vmatpush1.msra.mxu0 0.0
    %3694 = vmatprep.subr.mxu0 0.0
    %3695 = vmatpush1.msra.mxu0 0.0
    %3696 = vmatprep.subr.mxu0 0.0
    %3697 = vmatpush1.msra.mxu0 0.0
    %3698 = vmatprep.subr.mxu0 0.0
    %3699 = vmatpush1.msra.mxu0 0.0
    %3700 = vmatprep.subr.mxu0 0.0
    %3701 = vmatpush1.msra.mxu0 0.0
    %3702 = vmatprep.subr.mxu0 0.0
    %3703 = vmatpush1.msra.mxu0 0.0
    %3704 = vmatprep.subr.mxu0 0.0
    %3705 = vmatpush1.msra.mxu0 0.0
    %3706 = vmatprep.mubr.f32.mxu0 0.0
    %3707 = vmatmul.mubr.f32.gmra.mrb[0].mxu0 %v3631
    %v3708 = vpop.f32.mrb[0].mxu0
    %v3709 = vadd.f32 0.0, %v3708
    %v3710 = vpop.f32.mrb[0].mxu0
    %3711 = vmatprep.mubr.f32.mxu0 0.0
    %3712 = vmatmul.mubr.f32.gmra.mrb[0].mxu0 %v3634
    %v3713 = vpop.f32.mrb[0].mxu0
    %v3714 = vadd.f32 0.0, %v3713
    %v3715 = vpop.f32.mrb[0].mxu0
    %3716 = vmatprep.mubr.f32.mxu0 0.0
    %3717 = vmatmul.mubr.f32.gmra.mrb[0].mxu0 %v3637
    %v3718 = vpop.f32.mrb[0].mxu0
    %v3719 = vadd.f32 0.0, %v3718
    %v3720 = vpop.f32.mrb[0].mxu0
    %3721 = vmatprep.mubr.f32.mxu0 0.0
    %3722 = vmatmul.mubr.f32.gmra.mrb[0].mxu0 %v3640
    %v3723 = vpop.f32.mrb[0].mxu0
    %v3724 = vadd.f32 0.0, %v3723
    %v3725 = vpop.f32.mrb[0].mxu0
    %3726 = vdwg.mxu0
    %v3728 = vsel %vm1680, %v3509, 0
    %v3731 = vsel %vm1680, %v3514, 0
    %v3734 = vsel %vm1680, %v3519, 0
    %v3737 = vsel %vm1680, %v3524, 0
    %3739 = vmatprep.subr.mxu0 0.0
    %3740 = vmatpush1.msra.mxu0 %v3613
    %3741 = vmatprep.subr.mxu0 0.0
    %3742 = vmatpush1.msra.mxu0 %v3614
    %3743 = vmatprep.subr.mxu0 0.0
    %3744 = vmatpush1.msra.mxu0 %v3615
    %3745 = vmatprep.subr.mxu0 0.0
    %3746 = vmatpush1.msra.mxu0 %v3616
    %3747 = vmatprep.subr.mxu0 0.0
    %3748 = vmatpush1.msra.mxu0 %v3617
    %3749 = vmatprep.subr.mxu0 0.0
    %3750 = vmatpush1.msra.mxu0 %v3618
    %3751 = vmatprep.subr.mxu0 0.0
    %3752 = vmatpush1.msra.mxu0 %v3619
    %3753 = vmatprep.subr.mxu0 0.0
    %3754 = vmatpush1.msra.mxu0 %v3620
    %3755 = vmatprep.subr.mxu0 0.0
    %3756 = vmatpush1.msra.mxu0 0.0
    %3757 = vmatprep.subr.mxu0 0.0
    %3758 = vmatpush1.msra.mxu0 0.0
    %3759 = vmatprep.subr.mxu0 0.0
    %3760 = vmatpush1.msra.mxu0 0.0
    %3761 = vmatprep.subr.mxu0 0.0
    %3762 = vmatpush1.msra.mxu0 0.0
    %3763 = vmatprep.subr.mxu0 0.0
    %3764 = vmatpush1.msra.mxu0 0.0
    %3765 = vmatprep.subr.mxu0 0.0
    %3766 = vmatpush1.msra.mxu0 0.0
    %3767 = vmatprep.subr.mxu0 0.0
    %3768 = vmatpush1.msra.mxu0 0.0
    %3769 = vmatprep.subr.mxu0 0.0
    %3770 = vmatpush1.msra.mxu0 0.0
    %3771 = vmatprep.subr.mxu0 0.0
    %3772 = vmatpush1.msra.mxu0 0.0
    %3773 = vmatprep.subr.mxu0 0.0
    %3774 = vmatpush1.msra.mxu0 0.0
    %3775 = vmatprep.subr.mxu0 0.0
    %3776 = vmatpush1.msra.mxu0 0.0
    %3777 = vmatprep.subr.mxu0 0.0
    %3778 = vmatpush1.msra.mxu0 0.0
    %3779 = vmatprep.subr.mxu0 0.0
    %3780 = vmatpush1.msra.mxu0 0.0
    %3781 = vmatprep.subr.mxu0 0.0
    %3782 = vmatpush1.msra.mxu0 0.0
    %3783 = vmatprep.subr.mxu0 0.0
    %3784 = vmatpush1.msra.mxu0 0.0
    %3785 = vmatprep.subr.mxu0 0.0
    %3786 = vmatpush1.msra.mxu0 0.0
    %3787 = vmatprep.subr.mxu0 0.0
    %3788 = vmatpush1.msra.mxu0 0.0
    %3789 = vmatprep.subr.mxu0 0.0
    %3790 = vmatpush1.msra.mxu0 0.0
    %3791 = vmatprep.subr.mxu0 0.0
    %3792 = vmatpush1.msra.mxu0 0.0
    %3793 = vmatprep.subr.mxu0 0.0
    %3794 = vmatpush1.msra.mxu0 0.0
    %3795 = vmatprep.subr.mxu0 0.0
    %3796 = vmatpush1.msra.mxu0 0.0
    %3797 = vmatprep.subr.mxu0 0.0
    %3798 = vmatpush1.msra.mxu0 0.0
    %3799 = vmatprep.subr.mxu0 0.0
    %3800 = vmatpush1.msra.mxu0 0.0
    %3801 = vmatprep.subr.mxu0 0.0
    %3802 = vmatpush1.msra.mxu0 0.0
    %3803 = vmatprep.mubr.f32.mxu0 0.0
    %3804 = vmatmul.mubr.f32.gmra.mrb[0].mxu0 %v3728
    %v3805 = vpop.f32.mrb[0].mxu0
    %v3806 = vadd.f32 %v3709, %v3805
    %v3807 = vpop.f32.mrb[0].mxu0
    %3808 = vmatprep.mubr.f32.mxu0 0.0
    %3809 = vmatmul.mubr.f32.gmra.mrb[0].mxu0 %v3731
    %v3810 = vpop.f32.mrb[0].mxu0
    %v3811 = vadd.f32 %v3714, %v3810
    %v3812 = vpop.f32.mrb[0].mxu0
    %3813 = vmatprep.mubr.f32.mxu0 0.0
    %3814 = vmatmul.mubr.f32.gmra.mrb[0].mxu0 %v3734
    %v3815 = vpop.f32.mrb[0].mxu0
    %v3816 = vadd.f32 %v3719, %v3815
    %v3817 = vpop.f32.mrb[0].mxu0
    %3818 = vmatprep.mubr.f32.mxu0 0.0
    %3819 = vmatmul.mubr.f32.gmra.mrb[0].mxu0 %v3737
    %v3820 = vpop.f32.mrb[0].mxu0
    %v3821 = vadd.f32 %v3724, %v3820
    %v3822 = vpop.f32.mrb[0].mxu0
    %3823 = vdwg.mxu0
    %s3824 = scalar_lea.vmem %s13, 320
    %v3825 = vld [vmem:[%s3824] sm:$0xff]
    %v3826 = vld [vmem:[%s3824 + $0x8] sm:$0xff]
    %v3827 = vld [vmem:[%s3824 + $0x10] sm:$0xff]
    %v3828 = vld [vmem:[%s3824 + $0x18] sm:$0xff]
    %v3829 = vld [vmem:[%s3824 + $0x20] sm:$0xff]
    %v3830 = vld [vmem:[%s3824 + $0x28] sm:$0xff]
    %v3831 = vld [vmem:[%s3824 + $0x30] sm:$0xff]
    %v3832 = vld [vmem:[%s3824 + $0x38] sm:$0xff]
    %v3834 = vsel %vm1680, %v3594, 0
    %v3837 = vsel %vm1680, %v3599, 0
    %v3840 = vsel %vm1680, %v3604, 0
    %v3843 = vsel %vm1680, %v3609, 0
    %3845 = vmatprep.subr.mxu0 0.0
    %3846 = vmatpush1.msra.mxu0 %v3825
    %3847 = vmatprep.subr.mxu0 0.0
    %3848 = vmatpush1.msra.mxu0 %v3826
    %3849 = vmatprep.subr.mxu0 0.0
    %3850 = vmatpush1.msra.mxu0 %v3827
    %3851 = vmatprep.subr.mxu0 0.0
    %3852 = vmatpush1.msra.mxu0 %v3828
    %3853 = vmatprep.subr.mxu0 0.0
    %3854 = vmatpush1.msra.mxu0 %v3829
    %3855 = vmatprep.subr.mxu0 0.0
    %3856 = vmatpush1.msra.mxu0 %v3830
    %3857 = vmatprep.subr.mxu0 0.0
    %3858 = vmatpush1.msra.mxu0 %v3831
    %3859 = vmatprep.subr.mxu0 0.0
    %3860 = vmatpush1.msra.mxu0 %v3832
    %3861 = vmatprep.subr.mxu0 0.0
    %3862 = vmatpush1.msra.mxu0 0.0
    %3863 = vmatprep.subr.mxu0 0.0
    %3864 = vmatpush1.msra.mxu0 0.0
    %3865 = vmatprep.subr.mxu0 0.0
    %3866 = vmatpush1.msra.mxu0 0.0
    %3867 = vmatprep.subr.mxu0 0.0
    %3868 = vmatpush1.msra.mxu0 0.0
    %3869 = vmatprep.subr.mxu0 0.0
    %3870 = vmatpush1.msra.mxu0 0.0
    %3871 = vmatprep.subr.mxu0 0.0
    %3872 = vmatpush1.msra.mxu0 0.0
    %3873 = vmatprep.subr.mxu0 0.0
    %3874 = vmatpush1.msra.mxu0 0.0
    %3875 = vmatprep.subr.mxu0 0.0
    %3876 = vmatpush1.msra.mxu0 0.0
    %3877 = vmatprep.subr.mxu0 0.0
    %3878 = vmatpush1.msra.mxu0 0.0
    %3879 = vmatprep.subr.mxu0 0.0
    %3880 = vmatpush1.msra.mxu0 0.0
    %3881 = vmatprep.subr.mxu0 0.0
    %3882 = vmatpush1.msra.mxu0 0.0
    %3883 = vmatprep.subr.mxu0 0.0
    %3884 = vmatpush1.msra.mxu0 0.0
    %3885 = vmatprep.subr.mxu0 0.0
    %3886 = vmatpush1.msra.mxu0 0.0
    %3887 = vmatprep.subr.mxu0 0.0
    %3888 = vmatpush1.msra.mxu0 0.0
    %3889 = vmatprep.subr.mxu0 0.0
    %3890 = vmatpush1.msra.mxu0 0.0
    %3891 = vmatprep.subr.mxu0 0.0
    %3892 = vmatpush1.msra.mxu0 0.0
    %3893 = vmatprep.subr.mxu0 0.0
    %3894 = vmatpush1.msra.mxu0 0.0
    %3895 = vmatprep.subr.mxu0 0.0
    %3896 = vmatpush1.msra.mxu0 0.0
    %3897 = vmatprep.subr.mxu0 0.0
    %3898 = vmatpush1.msra.mxu0 0.0
    %3899 = vmatprep.subr.mxu0 0.0
    %3900 = vmatpush1.msra.mxu0 0.0
    %3901 = vmatprep.subr.mxu0 0.0
    %3902 = vmatpush1.msra.mxu0 0.0
    %3903 = vmatprep.subr.mxu0 0.0
    %3904 = vmatpush1.msra.mxu0 0.0
    %3905 = vmatprep.subr.mxu0 0.0
    %3906 = vmatpush1.msra.mxu0 0.0
    %3907 = vmatprep.subr.mxu0 0.0
    %3908 = vmatpush1.msra.mxu0 0.0
    %3909 = vmatprep.mubr.f32.mxu0 0.0
    %3910 = vmatmul.mubr.f32.gmra.mrb[0].mxu0 %v3834
    %v3911 = vpop.f32.mrb[0].mxu0
    %v3912 = vadd.f32 0.0, %v3911
    %v3913 = vpop.f32.mrb[0].mxu0
    %3914 = vmatprep.mubr.f32.mxu0 0.0
    %3915 = vmatmul.mubr.f32.gmra.mrb[0].mxu0 %v3837
    %v3916 = vpop.f32.mrb[0].mxu0
    %v3917 = vadd.f32 0.0, %v3916
    %v3918 = vpop.f32.mrb[0].mxu0
    %3919 = vmatprep.mubr.f32.mxu0 0.0
    %3920 = vmatmul.mubr.f32.gmra.mrb[0].mxu0 %v3840
    %v3921 = vpop.f32.mrb[0].mxu0
    %v3922 = vadd.f32 0.0, %v3921
    %v3923 = vpop.f32.mrb[0].mxu0
    %3924 = vmatprep.mubr.f32.mxu0 0.0
    %3925 = vmatmul.mubr.f32.gmra.mrb[0].mxu0 %v3843
    %v3926 = vpop.f32.mrb[0].mxu0
    %v3927 = vadd.f32 0.0, %v3926
    %v3928 = vpop.f32.mrb[0].mxu0
    %3929 = vdwg.mxu0
    %v3930 = vadd.f32 %v3806, %v3912
    %v3931 = vadd.f32 %v3811, %v3917
    %v3932 = vadd.f32 %v3816, %v3922
    %v3933 = vadd.f32 %v3821, %v3927
    %s3934 = scalar_lea.vmem %s14, 1
    %v3935 = vld [vmem:[%s3934] sm:$0x1]
    %v3937 = vlaneseq
    %v3938 = vshrl.u32 %v3937, 7
    %v3939 = vsub.s32 0, %v3938
    %v3940 = vrot.slane %v3935, %v3939
    %v3942 = vadd.f32 %v3930, %v3940
    %v3943 = vadd.f32 %v3931, %v3940
    %v3944 = vadd.f32 %v3932, %v3940
    %v3945 = vadd.f32 %v3933, %v3940
    %v3946 = vadd.f32 %v2942, %v3942
    %v3947 = vadd.f32 %v2943, %v3943
    %v3948 = vadd.f32 %v2944, %v3944
    %v3949 = vadd.f32 %v2945, %v3945
    %s3950 = scalar_lea.vmem %s15, 1
    %v3951 = vld [vmem:[%s3950] sm:$0x1]
    %s3952 = scalar_lea.vmem %s16, 1
    %v3953 = vld [vmem:[%s3952] sm:$0x1]
    %v3954 = vsel %vm120, %v3946, 0.0
    %3955 = vadd.xlane.f32.xlu0 %v3954
    %v3956 = vpop.xlane.xlu0 %3955
    %v3957 = vsel %vm120, %v3947, 0.0
    %3958 = vadd.xlane.f32.xlu0 %v3957
    %v3959 = vpop.xlane.xlu0 %3958
    %v3960 = vsel %vm120, %v3948, 0.0
    %3961 = vadd.xlane.f32.xlu0 %v3960
    %v3962 = vpop.xlane.xlu0 %3961
    %v3963 = vsel %vm120, %v3949, 0.0
    %3964 = vadd.xlane.f32.xlu0 %v3963
    %v3965 = vpop.xlane.xlu0 %3964
    %v3966 = vmul.f32 %v3956, %v910
    %v3967 = vmul.f32 %v3959, %v910
    %v3968 = vmul.f32 %v3962, %v910
    %v3969 = vmul.f32 %v3965, %v910
    %v3970 = vsub.f32 %v3946, %v3966
    %v3971 = vsub.f32 %v3947, %v3967
    %v3972 = vsub.f32 %v3948, %v3968
    %v3973 = vsub.f32 %v3949, %v3969
    %v3974 = vmul.f32 %v3970, %v3970
    %v3975 = vmul.f32 %v3971, %v3971
    %v3976 = vmul.f32 %v3972, %v3972
    %v3977 = vmul.f32 %v3973, %v3973
    %v3978 = vsel %vm120, %v3974, 0.0
    %3979 = vadd.xlane.f32.xlu0 %v3978
    %v3980 = vpop.xlane.xlu0 %3979
    %v3981 = vsel %vm120, %v3975, 0.0
    %3982 = vadd.xlane.f32.xlu0 %v3981
    %v3983 = vpop.xlane.xlu0 %3982
    %v3984 = vsel %vm120, %v3976, 0.0
    %3985 = vadd.xlane.f32.xlu0 %v3984
    %v3986 = vpop.xlane.xlu0 %3985
    %v3987 = vsel %vm120, %v3977, 0.0
    %3988 = vadd.xlane.f32.xlu0 %v3987
    %v3989 = vpop.xlane.xlu0 %3988
    %v3990 = vmul.f32 %v3980, %v910
    %v3991 = vmul.f32 %v3983, %v910
    %v3992 = vmul.f32 %v3986, %v910
    %v3993 = vmul.f32 %v3989, %v910
    %v3994 = vadd.f32 %v3990, 1e-05
    %v3995 = vadd.f32 %v3991, 1e-05
    %v3996 = vadd.f32 %v3992, 1e-05
    %v3997 = vadd.f32 %v3993, 1e-05
    %v3998 = vrsqrt.pop %v3994
    %v3999 = vrsqrt.pop %v3995
    %v4000 = vrsqrt.pop %v3996
    %v4001 = vrsqrt.pop %v3997
    %v4002 = vmul.f32 %v3970, %v3998
    %v4003 = vmul.f32 %v3971, %v3999
    %v4004 = vmul.f32 %v3972, %v4000
    %v4005 = vmul.f32 %v3973, %v4001
    %v4007 = vlaneseq
    %v4008 = vshrl.u32 %v4007, 7
    %v4009 = vsub.s32 0, %v4008
    %v4010 = vrot.slane %v3951, %v4009
    %v4012 = vmul.f32 %v4002, %v4010
    %v4013 = vmul.f32 %v4003, %v4010
    %v4014 = vmul.f32 %v4004, %v4010
    %v4015 = vmul.f32 %v4005, %v4010
    %v4017 = vlaneseq
    %v4018 = vshrl.u32 %v4017, 7
    %v4019 = vsub.s32 0, %v4018
    %v4020 = vrot.slane %v3953, %v4019
    %v4022 = vadd.f32 %v4012, %v4020
    %v4023 = vadd.f32 %v4013, %v4020
    %v4024 = vadd.f32 %v4014, %v4020
    %v4025 = vadd.f32 %v4015, %v4020
    %v4026 = vmul.f32 %v4022, %v84
    %v4027 = vmul.f32 %v4023, %v89
    %v4028 = vmul.f32 %v4024, %v94
    %v4029 = vmul.f32 %v4025, %v99
    %4030 = vst.msk [vmem:[#allocation2] sm:$0xff] %vm120, %v4026
    %4031 = vst.msk [vmem:[#allocation2 + $0x8] sm:$0xff] %vm120, %v4027
    %4032 = vst.msk [vmem:[#allocation2 + $0x10] sm:$0xff] %vm120, %v4028
    %4033 = vst.msk [vmem:[#allocation2 + $0x18] sm:$0xff] %vm120, %v4029
    // Predicated region
    $region70: #{fft_forward.1} parent=1 // pred_check
      _
    $region71: #{fft_forward.1} parent=1 // pred_check_branch
      %4035 = sbr.rel (0) target = $region73
    $region72: #{fft_forward.1} parent=1 // pred_region
      %s4037 = ssub.s32 512, 512
      %4038 = vsyncadd [#allocation3], %s4037
      %s4039 = sshll.u32 [#allocation2], 4
      %s4040 = int_to_ptr.vmem [resolvable:$true] %s4039
      %4045 = dma.vmem_to_hbm [thread:$0]  %s4040, 512, %s17, [#allocation3], 128, 128, 8
    $region73: #{fft_forward.1} parent=1 // pred_fallthru
      _
    // Predicated region
    $region74: #{fft_forward.1} parent=1 // pred_check
      _
    $region75: #{fft_forward.1} parent=1 // pred_check_branch
      %4047 = sbr.rel (0) target = $region77
    $region76: #{fft_forward.1} parent=1 // pred_region
      %4048 = dma.done [#allocation3], 512
    $region77: #{fft_forward.1} parent=1 // pred_fallthru
      _
    %4049 = vsyncpa [#allocation3], 1

</llo_original>
